<compile_context>
chip_gen: v5e
topology: v5e:2x2
jax: 0.10.0
libtpu: 0.0.40
codegen_flags: <defaults>
</compile_context>

<pallas_src>
import functools

import jax
import jax.numpy as jnp
from jax import lax
from jax.experimental import pallas as pl
from jax.experimental.pallas import tpu as pltpu

N_DET = 128        # padded number of candidate detections (one vreg lane row)
BLOCK = 8          # suppressor rows processed per unrolled block (one sublane tile)
MASK_HW = 28       # Mask R-CNN style per-detection mask resolution
NUM_CLASSES = 91


# ----------------------------------------------------------------------------
# Pallas kernel: score filter + two-level blocked greedy NMS + kept-first rank
# ----------------------------------------------------------------------------
def _nms_kernel(slab_ref, boxes_ref, keep_ref, dest_ref, *,
                score_thresh, nms_thresh):
    # slab_ref  : (8, N) f32 lane-major; rows 0..3 = x1,y1,x2,y2 (one lane per
    #             box, pre-sorted by descending score), row 4 = scores,
    #             rows 5..7 = zero padding.
    # boxes_ref : (N, 4) f32 sublane-major copy of the same sorted boxes
    #             (built by XLA in the wrapper -- no in-kernel transpose).
    # keep_ref  : (1, N) f32 output keep mask (1.0 = kept).
    # dest_ref  : (1, N) i32 kept-first stable rank of every (sorted) box.
    slab = slab_ref[...]                                       # (8, N)
    x1r, y1r = slab[0:1, :], slab[1:2, :]                      # (1, N)
    x2r, y2r = slab[2:3, :], slab[3:4, :]
    scores = slab[4:5, :]
    area_r = (x2r - x1r) * (y2r - y1r)                         # (1, N)

    # Score filter. NOTE: padded / invalid rows must arrive with score <=
    # score_thresh (the wrapper guarantees this) so they can neither survive
    # nor suppress real boxes.
    keep = jnp.where(scores > score_thresh, 1.0, 0.0)          # (1, N)

    col_idx = lax.broadcasted_iota(jnp.int32, (BLOCK, N_DET), 1)
    sub_idx = lax.broadcasted_iota(jnp.int32, (BLOCK, N_DET), 0)
    diff_idx = col_idx - sub_idx            # j - r; (j > i0 + r) <=> (diff > i0)

    for b in range(N_DET // BLOCK):                            # static, unrolled
        i0 = b * BLOCK

        # Suppressor coords for this block: one static (8, 4) VMEM load.
        blk = boxes_ref[i0:i0 + BLOCK, :]                      # (8, 4)
        bx1, by1 = blk[:, 0:1], blk[:, 1:2]                    # (8, 1)
        bx2, by2 = blk[:, 2:3], blk[:, 3:4]
        barea = (bx2 - bx1) * (by2 - by1)                      # (8, 1)

        # (8, N) IoU tile: this block's boxes vs. all boxes (off the serial
        # chain -> overlaps the previous block's batched update).
        xx1 = jnp.maximum(bx1, x1r)
        yy1 = jnp.maximum(by1, y1r)
        xx2 = jnp.minimum(bx2, x2r)
        yy2 = jnp.minimum(by2, y2r)
        inter = jnp.maximum(xx2 - xx1, 0.0) * jnp.maximum(yy2 - yy1, 0.0)
        union = barea + area_r - inter
        # division-free IoU test; inter > 0 also guards degenerate/padded boxes
        overlap = (inter > nms_thresh * union) & (inter > 0.0)
        # box i0+r (higher score) may only suppress strictly later boxes j
        supp = jnp.where(overlap & (diff_idx > i0), 1.0, 0.0)  # (8, N)

        # ---- Two-level blocked greedy update --------------------------------
        # (1) resolve the 8 intra-block keep bits serially against only the
        #     tiny (8, 8) intra-block sub-tile,
        kb = keep[:, i0:i0 + BLOCK]                            # (1, 8)
        supp_in = supp[:, i0:i0 + BLOCK]                       # (8, 8)
        for r in range(BLOCK):                                 # static, unrolled
            kr = kb[:, r:r + 1]                                # (1, 1) keep bit
            kb = kb - kr * (supp_in[r:r + 1, :] * kb)          # (1, 8)
        # (2) apply all 8 resolved suppressors to the full (1, N) keep mask in
        #     ONE batched step on the otherwise-idle MXU. For intra-block lanes
        #     this reproduces the serial result exactly (suppressor bits are
        #     final after step (1)); for later lanes it is the greedy update.
        hit = jnp.dot(kb, supp, preferred_element_type=jnp.float32)   # (1, N)
        keep = keep * jnp.where(hit > 0.0, 0.0, 1.0)

    keep_ref[...] = keep

    # Kept-first stable rank (replaces the wrapper's second XLA argsort).
    # Inclusive lane cumsum of `keep` via a triangular matmul on the idle MXU.
    row_i = lax.broadcasted_iota(jnp.int32, (N_DET, 1), 0)
    col_i = lax.broadcasted_iota(jnp.int32, (1, N_DET), 1)
    tri = jnp.where(row_i <= col_i, 1.0, 0.0)                  # (N, N)
    csum = jnp.dot(keep, tri, preferred_element_type=jnp.float32)  # (1, N)
    total = jnp.sum(keep, axis=-1, keepdims=True)              # (1, 1)
    col_f = col_i.astype(jnp.float32)                          # (1, N)
    # kept box   -> rank among kept   = csum - 1
    # dropped box-> num_kept + rank among dropped = total + (col - csum)
    dest = jnp.where(keep > 0.0, csum - 1.0, total + col_f - csum)
    dest_ref[...] = dest.astype(jnp.int32)


def nms_keep_pallas(slab, boxes_sorted, score_thresh, nms_thresh):
    """slab (B,8,N) f32, boxes_sorted (B,N,4) f32 -> keep (B,N) f32, dest (B,N) i32."""
    B = slab.shape[0]
    kernel = functools.partial(_nms_kernel,
                               score_thresh=float(score_thresh),
                               nms_thresh=float(nms_thresh))
    keep, dest = pl.pallas_call(
        kernel,
        grid=(B,),
        out_shape=(jax.ShapeDtypeStruct((B, 1, N_DET), jnp.float32),
                   jax.ShapeDtypeStruct((B, 1, N_DET), jnp.int32)),
        in_specs=[pl.BlockSpec((None, 8, N_DET), lambda b: (b, 0, 0)),
                  pl.BlockSpec((None, N_DET, 4), lambda b: (b, 0, 0))],
        out_specs=(pl.BlockSpec((None, 1, N_DET), lambda b: (b, 0, 0)),
                   pl.BlockSpec((None, 1, N_DET), lambda b: (b, 0, 0))),
        compiler_params=pltpu.CompilerParams(
            dimension_semantics=("parallel",)),
    )(slab, boxes_sorted)
    return keep[:, 0, :], dest[:, 0, :]


# ----------------------------------------------------------------------------
# Synthetic stand-in for the wrapped detection model (plain-JAX glue).
# ----------------------------------------------------------------------------
def synthetic_detector(img, params):
    # img: (C, H, W) float32
    _, H, W = img.shape
    feat = img.mean(axis=(1, 2))                               # (C,)
    raw = feat @ params["w_det"] + params["b_det"]             # (N*6,)
    raw = raw.reshape(N_DET, 6)
    cx = jax.nn.sigmoid(raw[:, 0]) * W
    cy = jax.nn.sigmoid(raw[:, 1]) * H
    bw = jax.nn.sigmoid(raw[:, 2]) * W * 0.5 + 1.0
    bh = jax.nn.sigmoid(raw[:, 3]) * H * 0.5 + 1.0
    x1 = jnp.clip(cx - bw * 0.5, 0.0, float(W))
    y1 = jnp.clip(cy - bh * 0.5, 0.0, float(H))
    x2 = jnp.clip(cx + bw * 0.5, 0.0, float(W))
    y2 = jnp.clip(cy + bh * 0.5, 0.0, float(H))
    boxes = jnp.stack([x1, y1, x2, y2], axis=1)                # (N, 4)
    scores = jax.nn.sigmoid(raw[:, 4])                         # (N,)
    labels = (jnp.abs(raw[:, 5]) * 10.0).astype(jnp.int32) % NUM_CLASSES
    mask_logits = raw @ params["w_mask"]                       # (N, 28*28)
    masks = jax.nn.sigmoid(mask_logits).reshape(N_DET, 1, MASK_HW, MASK_HW)
    return boxes, scores, labels, masks


# ----------------------------------------------------------------------------
# JITWrapper.forward equivalent (batched + single-image entry points).
# ----------------------------------------------------------------------------
def jit_wrapper_forward_batch(imgs, params, score_thresh=0.5, nms_thresh=0.5):
    B = imgs.shape[0]
    boxes, scores, labels, masks = jax.vmap(
        lambda im: synthetic_detector(im, params))(imgs)       # (B,N,...)

    # torchvision detection heads return detections sorted by descending score;
    # enforce that ordering (jnp.argsort is stable, so tie order is
    # deterministic). NMS is class-agnostic, like torchvision.ops.nms here.
    order = jnp.argsort(-scores, axis=-1)                      # (B, N)
    boxes_s = jnp.take_along_axis(boxes, order[..., None], axis=1)   # (B, N, 4)
    scores_s = jnp.take_along_axis(scores, order, axis=1)      # (B, N)

    # Lane-major slab (coord + score rows) and sublane-major boxes -- both
    # layouts built by XLA here, so the kernel needs no transpose.
    slab = jnp.concatenate(
        [jnp.swapaxes(boxes_s, 1, 2),                          # (B, 4, N)
         scores_s[:, None, :],                                 # (B, 1, N)
         jnp.zeros((B, 3, N_DET), jnp.float32)], axis=1)       # (B, 8, N)

    # Hot path in Pallas: score threshold + blocked IoU + greedy NMS + rank.
    keep, dest = nms_keep_pallas(slab, boxes_s, score_thresh, nms_thresh)
    num_kept = jnp.sum(keep, axis=-1).astype(jnp.int32)        # (B,)

    # TODO(synk): `boxes[keep]` dynamic boolean indexing has no static-shape
    # JAX equivalent; we return fixed-size padded outputs (kept items first,
    # in descending-score order) plus a per-image valid count.
    # Invert the in-kernel kept-first rank with one tiny int32 scatter (no
    # second XLA sort), then gather everything (incl. masks) exactly once via
    # one composite permutation.
    ar = jnp.arange(N_DET, dtype=jnp.int32)
    inv = jax.vmap(lambda d: jnp.zeros((N_DET,), jnp.int32).at[d].set(ar))(dest)
    perm = jnp.take_along_axis(order, inv, axis=1)             # composite perm
    boxes_o = jnp.take_along_axis(boxes, perm[..., None], axis=1)
    labels_o = jnp.take_along_axis(labels, perm, axis=1)
    scores_o = jnp.take_along_axis(scores, perm, axis=1)
    masks_o = jnp.take_along_axis(masks, perm[:, :, None, None, None], axis=1)
    keep_o = jnp.take_along_axis(keep, inv, axis=1)
    return boxes_o, labels_o, scores_o, masks_o, keep_o, num_kept


def jit_wrapper_forward(img, params, score_thresh=0.5, nms_thresh=0.5):
    """Single-image JITWrapper.forward equivalent (batch of one)."""
    outs = jit_wrapper_forward_batch(img[None], params, score_thresh, nms_thresh)
    return jax.tree_util.tree_map(lambda x: x[0], outs)


# ----------------------------------------------------------------------------
# Pure-JAX greedy NMS reference (for a self-check against the kernel).
# ----------------------------------------------------------------------------
def _nms_reference(boxes, scores, score_thresh, nms_thresh):
    # boxes pre-sorted by descending score; same division-free IoU test.
    n = boxes.shape[0]
    x1, y1, x2, y2 = boxes[:, 0], boxes[:, 1], boxes[:, 2], boxes[:, 3]
    area = (x2 - x1) * (y2 - y1)
    keep0 = jnp.where(scores > score_thresh, 1.0, 0.0)
    idx = jnp.arange(n)

    def body(i, keep):
        xx1 = jnp.maximum(x1[i], x1)
        yy1 = jnp.maximum(y1[i], y1)
        xx2 = jnp.minimum(x2[i], x2)
        yy2 = jnp.minimum(y2[i], y2)
        inter = jnp.maximum(xx2 - xx1, 0.0) * jnp.maximum(yy2 - yy1, 0.0)
        union = area[i] + area - inter
        over = (inter > nms_thresh * union) & (inter > 0.0)
        sup = over & (idx > i) & (keep[i] > 0.0)
        return jnp.where(sup, 0.0, keep)

    return lax.fori_loop(0, n, body, keep0)


if __name__ == "__main__":
    key = jax.random.PRNGKey(0)
    k_img, k_w, k_b, k_m = jax.random.split(key, 4)

    B = 2
    imgs = jax.random.uniform(k_img, (B, 3, 64, 64), dtype=jnp.float32)
    params = {
        "w_det": jax.random.normal(k_w, (3, N_DET * 6), dtype=jnp.float32) * 0.5,
        "b_det": jax.random.normal(k_b, (N_DET * 6,), dtype=jnp.float32) * 0.5,
        "w_mask": jax.random.normal(k_m, (6, MASK_HW * MASK_HW),
                                    dtype=jnp.float32) * 0.1,
    }

    # Batched entry point: one pallas_call with grid=(B,) ("parallel").
    fwd = jax.jit(jit_wrapper_forward_batch)
    out = fwd(imgs, params)
    jax.block_until_ready(out)
    boxes_o, labels_o, scores_o, masks_o, keep_o, num_kept = out
    assert boxes_o.shape == (B, N_DET, 4)
    assert labels_o.shape == (B, N_DET)
    assert scores_o.shape == (B, N_DET)
    assert masks_o.shape == (B, N_DET, 1, MASK_HW, MASK_HW)
    assert keep_o.shape == (B, N_DET)
    assert num_kept.shape == (B,)

    # Single-image entry point (mirrors the PyTorch module's forward).
    out1 = jax.jit(jit_wrapper_forward)(imgs[0], params)
    jax.block_until_ready(out1)
    assert out1[0].shape == (N_DET, 4)

    # Self-check: Pallas keep mask == pure-JAX greedy NMS reference (exact).
    def kernel_keep(imgs_):
        b, s, _, _ = jax.vmap(lambda im: synthetic_detector(im, params))(imgs_)
        o = jnp.argsort(-s, axis=-1)
        bs = jnp.take_along_axis(b, o[..., None], axis=1)
        ss = jnp.take_along_axis(s, o, axis=1)
        slab = jnp.concatenate(
            [jnp.swapaxes(bs, 1, 2), ss[:, None, :],
             jnp.zeros((imgs_.shape[0], 3, N_DET), jnp.float32)], axis=1)
        k, _ = nms_keep_pallas(slab, bs, 0.5, 0.5)
        return k

    def ref_keep(im):
        b, s, _, _ = synthetic_detector(im, params)
        o = jnp.argsort(-s)
        return _nms_reference(b[o], s[o], 0.5, 0.5)

    keep_k = jax.jit(kernel_keep)(imgs)
    keep_r = jax.jit(jax.vmap(ref_keep))(imgs)
    assert bool(jnp.all(keep_k == keep_r))

    print("KERNEL_OK")
</pallas_src>

<mosaic_0001>
module attributes {stable_mosaic.version = 11 : i64} {
  func.func @_nms_kernel(%arg0: i32, %arg1: memref<1x8x128xf32, #tpu.memory_space<vmem>>, %arg2: memref<1x128x4xf32, #tpu.memory_space<vmem>>, %arg3: memref<1x1x128xf32, #tpu.memory_space<vmem>>, %arg4: memref<1x1x128xi32, #tpu.memory_space<vmem>>) attributes {dimension_semantics = [#tpu.dimension_semantics<parallel>], iteration_bounds = array<i64: 2>, scalar_prefetch = 0 : i64, scratch_operands = 0 : i64, tpu.core_type = #tpu.core_type<tc>, window_params = [{transform_indices = @transform_0, window_bounds = array<i64: 1, 8, 128>}, {transform_indices = @transform_1, window_bounds = array<i64: 1, 128, 4>}, {transform_indices = @transform_2, window_bounds = array<i64: 1, 1, 128>}, {transform_indices = @transform_3, window_bounds = array<i64: 1, 1, 128>}]} {
    %c0 = arith.constant 0 : index
    %c0_0 = arith.constant 0 : index
    %c0_1 = arith.constant 0 : index
    %0 = vector.load %arg1[%c0, %c0_0, %c0_1] : memref<1x8x128xf32, #tpu.memory_space<vmem>>, vector<1x8x128xf32>
    %1 = vector.shape_cast %0 : vector<1x8x128xf32> to vector<8x128xf32>
    %2 = vector.extract_strided_slice %1 {offsets = [0, 0], sizes = [1, 128], strides = [1, 1]} : vector<8x128xf32> to vector<1x128xf32>
    %3 = vector.extract_strided_slice %1 {offsets = [1, 0], sizes = [1, 128], strides = [1, 1]} : vector<8x128xf32> to vector<1x128xf32>
    %4 = vector.extract_strided_slice %1 {offsets = [2, 0], sizes = [1, 128], strides = [1, 1]} : vector<8x128xf32> to vector<1x128xf32>
    %5 = vector.extract_strided_slice %1 {offsets = [3, 0], sizes = [1, 128], strides = [1, 1]} : vector<8x128xf32> to vector<1x128xf32>
    %6 = vector.extract_strided_slice %1 {offsets = [4, 0], sizes = [1, 128], strides = [1, 1]} : vector<8x128xf32> to vector<1x128xf32>
    %7 = arith.subf %4, %2 : vector<1x128xf32>
    %8 = arith.subf %5, %3 : vector<1x128xf32>
    %9 = arith.mulf %7, %8 : vector<1x128xf32>
    %cst = arith.constant 5.000000e-01 : f32
    %10 = vector.broadcast %cst : f32 to vector<1x128xf32>
    %11 = arith.cmpf ogt, %6, %10 : vector<1x128xf32>
    %cst_2 = arith.constant 1.000000e+00 : f32
    %cst_3 = arith.constant 0.000000e+00 : f32
    %12 = vector.broadcast %cst_2 : f32 to vector<1x128xf32>
    %13 = vector.broadcast %cst_3 : f32 to vector<1x128xf32>
    %14 = arith.select %11, %12, %13 : vector<1x128xi1>, vector<1x128xf32>
    %15 = tpu.iota {dimensions = array<i32: 1>} : vector<8x128xi32>
    %16 = tpu.iota {dimensions = array<i32: 0>} : vector<8x128xi32>
    %17 = arith.subi %15, %16 : vector<8x128xi32>
    %c0_4 = arith.constant 0 : index
    %c0_5 = arith.constant 0 : index
    %c0_6 = arith.constant 0 : index
    %18 = vector.load %arg2[%c0_4, %c0_5, %c0_6] : memref<1x128x4xf32, #tpu.memory_space<vmem>>, vector<1x8x4xf32>
    %19 = vector.shape_cast %18 : vector<1x8x4xf32> to vector<8x4xf32>
    %20 = vector.extract_strided_slice %19 {offsets = [0, 0], sizes = [8, 1], strides = [1, 1]} : vector<8x4xf32> to vector<8x1xf32>
    %21 = vector.extract_strided_slice %19 {offsets = [0, 1], sizes = [8, 1], strides = [1, 1]} : vector<8x4xf32> to vector<8x1xf32>
    %22 = vector.extract_strided_slice %19 {offsets = [0, 2], sizes = [8, 1], strides = [1, 1]} : vector<8x4xf32> to vector<8x1xf32>
    %23 = vector.extract_strided_slice %19 {offsets = [0, 3], sizes = [8, 1], strides = [1, 1]} : vector<8x4xf32> to vector<8x1xf32>
    %24 = arith.subf %22, %20 : vector<8x1xf32>
    %25 = arith.subf %23, %21 : vector<8x1xf32>
    %26 = arith.mulf %24, %25 : vector<8x1xf32>
    %27 = vector.broadcast %20 : vector<8x1xf32> to vector<8x128xf32>
    %28 = vector.broadcast %2 : vector<1x128xf32> to vector<8x128xf32>
    %29 = arith.maximumf %27, %28 : vector<8x128xf32>
    %30 = vector.broadcast %21 : vector<8x1xf32> to vector<8x128xf32>
    %31 = vector.broadcast %3 : vector<1x128xf32> to vector<8x128xf32>
    %32 = arith.maximumf %30, %31 : vector<8x128xf32>
    %33 = vector.broadcast %22 : vector<8x1xf32> to vector<8x128xf32>
    %34 = vector.broadcast %4 : vector<1x128xf32> to vector<8x128xf32>
    %35 = arith.minimumf %33, %34 : vector<8x128xf32>
    %36 = vector.broadcast %23 : vector<8x1xf32> to vector<8x128xf32>
    %37 = vector.broadcast %5 : vector<1x128xf32> to vector<8x128xf32>
    %38 = arith.minimumf %36, %37 : vector<8x128xf32>
    %39 = arith.subf %35, %29 : vector<8x128xf32>
    %cst_7 = arith.constant 0.000000e+00 : f32
    %40 = vector.broadcast %cst_7 : f32 to vector<8x128xf32>
    %41 = arith.maximumf %39, %40 : vector<8x128xf32>
    %42 = arith.subf %38, %32 : vector<8x128xf32>
    %cst_8 = arith.constant 0.000000e+00 : f32
    %43 = vector.broadcast %cst_8 : f32 to vector<8x128xf32>
    %44 = arith.maximumf %42, %43 : vector<8x128xf32>
    %45 = arith.mulf %41, %44 : vector<8x128xf32>
    %46 = vector.broadcast %26 : vector<8x1xf32> to vector<8x128xf32>
    %47 = vector.broadcast %9 : vector<1x128xf32> to vector<8x128xf32>
    %48 = arith.addf %46, %47 : vector<8x128xf32>
    %49 = arith.subf %48, %45 : vector<8x128xf32>
    %cst_9 = arith.constant 5.000000e-01 : f32
    %50 = vector.broadcast %cst_9 : f32 to vector<8x128xf32>
    %51 = arith.mulf %50, %49 : vector<8x128xf32>
    %52 = arith.cmpf ogt, %45, %51 : vector<8x128xf32>
    %cst_10 = arith.constant 0.000000e+00 : f32
    %53 = vector.broadcast %cst_10 : f32 to vector<8x128xf32>
    %54 = arith.cmpf ogt, %45, %53 : vector<8x128xf32>
    %55 = arith.andi %52, %54 : vector<8x128xi1>
    %c0_i32 = arith.constant 0 : i32
    %56 = vector.broadcast %c0_i32 : i32 to vector<8x128xi32>
    %57 = arith.cmpi sgt, %17, %56 : vector<8x128xi32>
    %58 = arith.andi %55, %57 : vector<8x128xi1>
    %cst_11 = arith.constant 1.000000e+00 : f32
    %cst_12 = arith.constant 0.000000e+00 : f32
    %59 = vector.broadcast %cst_11 : f32 to vector<8x128xf32>
    %60 = vector.broadcast %cst_12 : f32 to vector<8x128xf32>
    %61 = arith.select %58, %59, %60 : vector<8x128xi1>, vector<8x128xf32>
    %62 = vector.extract_strided_slice %14 {offsets = [0, 0], sizes = [1, 8], strides = [1, 1]} : vector<1x128xf32> to vector<1x8xf32>
    %63 = vector.extract_strided_slice %61 {offsets = [0, 0], sizes = [8, 8], strides = [1, 1]} : vector<8x128xf32> to vector<8x8xf32>
    %64 = vector.extract_strided_slice %62 {offsets = [0, 0], sizes = [1, 1], strides = [1, 1]} : vector<1x8xf32> to vector<1x1xf32>
    %65 = vector.extract_strided_slice %63 {offsets = [0, 0], sizes = [1, 8], strides = [1, 1]} : vector<8x8xf32> to vector<1x8xf32>
    %66 = arith.mulf %65, %62 : vector<1x8xf32>
    %67 = vector.broadcast %64 : vector<1x1xf32> to vector<1x8xf32>
    %68 = arith.mulf %67, %66 : vector<1x8xf32>
    %69 = arith.subf %62, %68 : vector<1x8xf32>
    %70 = vector.extract_strided_slice %69 {offsets = [0, 1], sizes = [1, 1], strides = [1, 1]} : vector<1x8xf32> to vector<1x1xf32>
    %71 = vector.extract_strided_slice %63 {offsets = [1, 0], sizes = [1, 8], strides = [1, 1]} : vector<8x8xf32> to vector<1x8xf32>
    %72 = arith.mulf %71, %69 : vector<1x8xf32>
    %73 = vector.broadcast %70 : vector<1x1xf32> to vector<1x8xf32>
    %74 = arith.mulf %73, %72 : vector<1x8xf32>
    %75 = arith.subf %69, %74 : vector<1x8xf32>
    %76 = vector.extract_strided_slice %75 {offsets = [0, 2], sizes = [1, 1], strides = [1, 1]} : vector<1x8xf32> to vector<1x1xf32>
    %77 = vector.extract_strided_slice %63 {offsets = [2, 0], sizes = [1, 8], strides = [1, 1]} : vector<8x8xf32> to vector<1x8xf32>
    %78 = arith.mulf %77, %75 : vector<1x8xf32>
    %79 = vector.broadcast %76 : vector<1x1xf32> to vector<1x8xf32>
    %80 = arith.mulf %79, %78 : vector<1x8xf32>
    %81 = arith.subf %75, %80 : vector<1x8xf32>
    %82 = vector.extract_strided_slice %81 {offsets = [0, 3], sizes = [1, 1], strides = [1, 1]} : vector<1x8xf32> to vector<1x1xf32>
    %83 = vector.extract_strided_slice %63 {offsets = [3, 0], sizes = [1, 8], strides = [1, 1]} : vector<8x8xf32> to vector<1x8xf32>
    %84 = arith.mulf %83, %81 : vector<1x8xf32>
    %85 = vector.broadcast %82 : vector<1x1xf32> to vector<1x8xf32>
    %86 = arith.mulf %85, %84 : vector<1x8xf32>
    %87 = arith.subf %81, %86 : vector<1x8xf32>
    %88 = vector.extract_strided_slice %87 {offsets = [0, 4], sizes = [1, 1], strides = [1, 1]} : vector<1x8xf32> to vector<1x1xf32>
    %89 = vector.extract_strided_slice %63 {offsets = [4, 0], sizes = [1, 8], strides = [1, 1]} : vector<8x8xf32> to vector<1x8xf32>
    %90 = arith.mulf %89, %87 : vector<1x8xf32>
    %91 = vector.broadcast %88 : vector<1x1xf32> to vector<1x8xf32>
    %92 = arith.mulf %91, %90 : vector<1x8xf32>
    %93 = arith.subf %87, %92 : vector<1x8xf32>
    %94 = vector.extract_strided_slice %93 {offsets = [0, 5], sizes = [1, 1], strides = [1, 1]} : vector<1x8xf32> to vector<1x1xf32>
    %95 = vector.extract_strided_slice %63 {offsets = [5, 0], sizes = [1, 8], strides = [1, 1]} : vector<8x8xf32> to vector<1x8xf32>
    %96 = arith.mulf %95, %93 : vector<1x8xf32>
    %97 = vector.broadcast %94 : vector<1x1xf32> to vector<1x8xf32>
    %98 = arith.mulf %97, %96 : vector<1x8xf32>
    %99 = arith.subf %93, %98 : vector<1x8xf32>
    %100 = vector.extract_strided_slice %99 {offsets = [0, 6], sizes = [1, 1], strides = [1, 1]} : vector<1x8xf32> to vector<1x1xf32>
    %101 = vector.extract_strided_slice %63 {offsets = [6, 0], sizes = [1, 8], strides = [1, 1]} : vector<8x8xf32> to vector<1x8xf32>
    %102 = arith.mulf %101, %99 : vector<1x8xf32>
    %103 = vector.broadcast %100 : vector<1x1xf32> to vector<1x8xf32>
    %104 = arith.mulf %103, %102 : vector<1x8xf32>
    %105 = arith.subf %99, %104 : vector<1x8xf32>
    %106 = vector.extract_strided_slice %105 {offsets = [0, 7], sizes = [1, 1], strides = [1, 1]} : vector<1x8xf32> to vector<1x1xf32>
    %107 = vector.extract_strided_slice %63 {offsets = [7, 0], sizes = [1, 8], strides = [1, 1]} : vector<8x8xf32> to vector<1x8xf32>
    %108 = arith.mulf %107, %105 : vector<1x8xf32>
    %109 = vector.broadcast %106 : vector<1x1xf32> to vector<1x8xf32>
    %110 = arith.mulf %109, %108 : vector<1x8xf32>
    %111 = arith.subf %105, %110 : vector<1x8xf32>
    %cst_13 = arith.constant dense<0.000000e+00> : vector<1x128xf32>
    %112 = tpu.matmul %111, %61, %cst_13 {dimension_numbers = #tpu.dot_dimension_numbers<[1], [0], [0], [1], [0, 0, 1, 1], [], []>} : vector<1x8xf32>, vector<8x128xf32>, vector<1x128xf32> -> vector<1x128xf32>
    %cst_14 = arith.constant 0.000000e+00 : f32
    %113 = vector.broadcast %cst_14 : f32 to vector<1x128xf32>
    %114 = arith.cmpf ogt, %112, %113 : vector<1x128xf32>
    %cst_15 = arith.constant 0.000000e+00 : f32
    %cst_16 = arith.constant 1.000000e+00 : f32
    %115 = vector.broadcast %cst_15 : f32 to vector<1x128xf32>
    %116 = vector.broadcast %cst_16 : f32 to vector<1x128xf32>
    %117 = arith.select %114, %115, %116 : vector<1x128xi1>, vector<1x128xf32>
    %118 = arith.mulf %14, %117 : vector<1x128xf32>
    %c0_17 = arith.constant 0 : index
    %c8 = arith.constant 8 : index
    %c0_18 = arith.constant 0 : index
    %119 = vector.load %arg2[%c0_17, %c8, %c0_18] : memref<1x128x4xf32, #tpu.memory_space<vmem>>, vector<1x8x4xf32>
    %120 = vector.shape_cast %119 : vector<1x8x4xf32> to vector<8x4xf32>
    %121 = vector.extract_strided_slice %120 {offsets = [0, 0], sizes = [8, 1], strides = [1, 1]} : vector<8x4xf32> to vector<8x1xf32>
    %122 = vector.extract_strided_slice %120 {offsets = [0, 1], sizes = [8, 1], strides = [1, 1]} : vector<8x4xf32> to vector<8x1xf32>
    %123 = vector.extract_strided_slice %120 {offsets = [0, 2], sizes = [8, 1], strides = [1, 1]} : vector<8x4xf32> to vector<8x1xf32>
    %124 = vector.extract_strided_slice %120 {offsets = [0, 3], sizes = [8, 1], strides = [1, 1]} : vector<8x4xf32> to vector<8x1xf32>
    %125 = arith.subf %123, %121 : vector<8x1xf32>
    %126 = arith.subf %124, %122 : vector<8x1xf32>
    %127 = arith.mulf %125, %126 : vector<8x1xf32>
    %128 = vector.broadcast %121 : vector<8x1xf32> to vector<8x128xf32>
    %129 = vector.broadcast %2 : vector<1x128xf32> to vector<8x128xf32>
    %130 = arith.maximumf %128, %129 : vector<8x128xf32>
    %131 = vector.broadcast %122 : vector<8x1xf32> to vector<8x128xf32>
    %132 = vector.broadcast %3 : vector<1x128xf32> to vector<8x128xf32>
    %133 = arith.maximumf %131, %132 : vector<8x128xf32>
    %134 = vector.broadcast %123 : vector<8x1xf32> to vector<8x128xf32>
    %135 = vector.broadcast %4 : vector<1x128xf32> to vector<8x128xf32>
    %136 = arith.minimumf %134, %135 : vector<8x128xf32>
    %137 = vector.broadcast %124 : vector<8x1xf32> to vector<8x128xf32>
    %138 = vector.broadcast %5 : vector<1x128xf32> to vector<8x128xf32>
    %139 = arith.minimumf %137, %138 : vector<8x128xf32>
    %140 = arith.subf %136, %130 : vector<8x128xf32>
    %cst_19 = arith.constant 0.000000e+00 : f32
    %141 = vector.broadcast %cst_19 : f32 to vector<8x128xf32>
    %142 = arith.maximumf %140, %141 : vector<8x128xf32>
    %143 = arith.subf %139, %133 : vector<8x128xf32>
    %cst_20 = arith.constant 0.000000e+00 : f32
    %144 = vector.broadcast %cst_20 : f32 to vector<8x128xf32>
    %145 = arith.maximumf %143, %144 : vector<8x128xf32>
    %146 = arith.mulf %142, %145 : vector<8x128xf32>
    %147 = vector.broadcast %127 : vector<8x1xf32> to vector<8x128xf32>
    %148 = vector.broadcast %9 : vector<1x128xf32> to vector<8x128xf32>
    %149 = arith.addf %147, %148 : vector<8x128xf32>
    %150 = arith.subf %149, %146 : vector<8x128xf32>
    %cst_21 = arith.constant 5.000000e-01 : f32
    %151 = vector.broadcast %cst_21 : f32 to vector<8x128xf32>
    %152 = arith.mulf %151, %150 : vector<8x128xf32>
    %153 = arith.cmpf ogt, %146, %152 : vector<8x128xf32>
    %cst_22 = arith.constant 0.000000e+00 : f32
    %154 = vector.broadcast %cst_22 : f32 to vector<8x128xf32>
    %155 = arith.cmpf ogt, %146, %154 : vector<8x128xf32>
    %156 = arith.andi %153, %155 : vector<8x128xi1>
    %c8_i32 = arith.constant 8 : i32
    %157 = vector.broadcast %c8_i32 : i32 to vector<8x128xi32>
    %158 = arith.cmpi sgt, %17, %157 : vector<8x128xi32>
    %159 = arith.andi %156, %158 : vector<8x128xi1>
    %cst_23 = arith.constant 1.000000e+00 : f32
    %cst_24 = arith.constant 0.000000e+00 : f32
    %160 = vector.broadcast %cst_23 : f32 to vector<8x128xf32>
    %161 = vector.broadcast %cst_24 : f32 to vector<8x128xf32>
    %162 = arith.select %159, %160, %161 : vector<8x128xi1>, vector<8x128xf32>
    %163 = vector.extract_strided_slice %118 {offsets = [0, 8], sizes = [1, 8], strides = [1, 1]} : vector<1x128xf32> to vector<1x8xf32>
    %164 = vector.extract_strided_slice %162 {offsets = [0, 8], sizes = [8, 8], strides = [1, 1]} : vector<8x128xf32> to vector<8x8xf32>
    %165 = vector.extract_strided_slice %163 {offsets = [0, 0], sizes = [1, 1], strides = [1, 1]} : vector<1x8xf32> to vector<1x1xf32>
    %166 = vector.extract_strided_slice %164 {offsets = [0, 0], sizes = [1, 8], strides = [1, 1]} : vector<8x8xf32> to vector<1x8xf32>
    %167 = arith.mulf %166, %163 : vector<1x8xf32>
    %168 = vector.broadcast %165 : vector<1x1xf32> to vector<1x8xf32>
    %169 = arith.mulf %168, %167 : vector<1x8xf32>
    %170 = arith.subf %163, %169 : vector<1x8xf32>
    %171 = vector.extract_strided_slice %170 {offsets = [0, 1], sizes = [1, 1], strides = [1, 1]} : vector<1x8xf32> to vector<1x1xf32>
    %172 = vector.extract_strided_slice %164 {offsets = [1, 0], sizes = [1, 8], strides = [1, 1]} : vector<8x8xf32> to vector<1x8xf32>
    %173 = arith.mulf %172, %170 : vector<1x8xf32>
    %174 = vector.broadcast %171 : vector<1x1xf32> to vector<1x8xf32>
    %175 = arith.mulf %174, %173 : vector<1x8xf32>
    %176 = arith.subf %170, %175 : vector<1x8xf32>
    %177 = vector.extract_strided_slice %176 {offsets = [0, 2], sizes = [1, 1], strides = [1, 1]} : vector<1x8xf32> to vector<1x1xf32>
    %178 = vector.extract_strided_slice %164 {offsets = [2, 0], sizes = [1, 8], strides = [1, 1]} : vector<8x8xf32> to vector<1x8xf32>
    %179 = arith.mulf %178, %176 : vector<1x8xf32>
    %180 = vector.broadcast %177 : vector<1x1xf32> to vector<1x8xf32>
    %181 = arith.mulf %180, %179 : vector<1x8xf32>
    %182 = arith.subf %176, %181 : vector<1x8xf32>
    %183 = vector.extract_strided_slice %182 {offsets = [0, 3], sizes = [1, 1], strides = [1, 1]} : vector<1x8xf32> to vector<1x1xf32>
    %184 = vector.extract_strided_slice %164 {offsets = [3, 0], sizes = [1, 8], strides = [1, 1]} : vector<8x8xf32> to vector<1x8xf32>
    %185 = arith.mulf %184, %182 : vector<1x8xf32>
    %186 = vector.broadcast %183 : vector<1x1xf32> to vector<1x8xf32>
    %187 = arith.mulf %186, %185 : vector<1x8xf32>
    %188 = arith.subf %182, %187 : vector<1x8xf32>
    %189 = vector.extract_strided_slice %188 {offsets = [0, 4], sizes = [1, 1], strides = [1, 1]} : vector<1x8xf32> to vector<1x1xf32>
    %190 = vector.extract_strided_slice %164 {offsets = [4, 0], sizes = [1, 8], strides = [1, 1]} : vector<8x8xf32> to vector<1x8xf32>
    %191 = arith.mulf %190, %188 : vector<1x8xf32>
    %192 = vector.broadcast %189 : vector<1x1xf32> to vector<1x8xf32>
    %193 = arith.mulf %192, %191 : vector<1x8xf32>
    %194 = arith.subf %188, %193 : vector<1x8xf32>
    %195 = vector.extract_strided_slice %194 {offsets = [0, 5], sizes = [1, 1], strides = [1, 1]} : vector<1x8xf32> to vector<1x1xf32>
    %196 = vector.extract_strided_slice %164 {offsets = [5, 0], sizes = [1, 8], strides = [1, 1]} : vector<8x8xf32> to vector<1x8xf32>
    %197 = arith.mulf %196, %194 : vector<1x8xf32>
    %198 = vector.broadcast %195 : vector<1x1xf32> to vector<1x8xf32>
    %199 = arith.mulf %198, %197 : vector<1x8xf32>
    %200 = arith.subf %194, %199 : vector<1x8xf32>
    %201 = vector.extract_strided_slice %200 {offsets = [0, 6], sizes = [1, 1], strides = [1, 1]} : vector<1x8xf32> to vector<1x1xf32>
    %202 = vector.extract_strided_slice %164 {offsets = [6, 0], sizes = [1, 8], strides = [1, 1]} : vector<8x8xf32> to vector<1x8xf32>
    %203 = arith.mulf %202, %200 : vector<1x8xf32>
    %204 = vector.broadcast %201 : vector<1x1xf32> to vector<1x8xf32>
    %205 = arith.mulf %204, %203 : vector<1x8xf32>
    %206 = arith.subf %200, %205 : vector<1x8xf32>
    %207 = vector.extract_strided_slice %206 {offsets = [0, 7], sizes = [1, 1], strides = [1, 1]} : vector<1x8xf32> to vector<1x1xf32>
    %208 = vector.extract_strided_slice %164 {offsets = [7, 0], sizes = [1, 8], strides = [1, 1]} : vector<8x8xf32> to vector<1x8xf32>
    %209 = arith.mulf %208, %206 : vector<1x8xf32>
    %210 = vector.broadcast %207 : vector<1x1xf32> to vector<1x8xf32>
    %211 = arith.mulf %210, %209 : vector<1x8xf32>
    %212 = arith.subf %206, %211 : vector<1x8xf32>
    %cst_25 = arith.constant dense<0.000000e+00> : vector<1x128xf32>
    %213 = tpu.matmul %212, %162, %cst_25 {dimension_numbers = #tpu.dot_dimension_numbers<[1], [0], [0], [1], [0, 0, 1, 1], [], []>} : vector<1x8xf32>, vector<8x128xf32>, vector<1x128xf32> -> vector<1x128xf32>
    %cst_26 = arith.constant 0.000000e+00 : f32
    %214 = vector.broadcast %cst_26 : f32 to vector<1x128xf32>
    %215 = arith.cmpf ogt, %213, %214 : vector<1x128xf32>
    %cst_27 = arith.constant 0.000000e+00 : f32
    %cst_28 = arith.constant 1.000000e+00 : f32
    %216 = vector.broadcast %cst_27 : f32 to vector<1x128xf32>
    %217 = vector.broadcast %cst_28 : f32 to vector<1x128xf32>
    %218 = arith.select %215, %216, %217 : vector<1x128xi1>, vector<1x128xf32>
    %219 = arith.mulf %118, %218 : vector<1x128xf32>
    %c0_29 = arith.constant 0 : index
    %c16 = arith.constant 16 : index
    %c0_30 = arith.constant 0 : index
    %220 = vector.load %arg2[%c0_29, %c16, %c0_30] : memref<1x128x4xf32, #tpu.memory_space<vmem>>, vector<1x8x4xf32>
    %221 = vector.shape_cast %220 : vector<1x8x4xf32> to vector<8x4xf32>
    %222 = vector.extract_strided_slice %221 {offsets = [0, 0], sizes = [8, 1], strides = [1, 1]} : vector<8x4xf32> to vector<8x1xf32>
    %223 = vector.extract_strided_slice %221 {offsets = [0, 1], sizes = [8, 1], strides = [1, 1]} : vector<8x4xf32> to vector<8x1xf32>
    %224 = vector.extract_strided_slice %221 {offsets = [0, 2], sizes = [8, 1], strides = [1, 1]} : vector<8x4xf32> to vector<8x1xf32>
    %225 = vector.extract_strided_slice %221 {offsets = [0, 3], sizes = [8, 1], strides = [1, 1]} : vector<8x4xf32> to vector<8x1xf32>
    %226 = arith.subf %224, %222 : vector<8x1xf32>
    %227 = arith.subf %225, %223 : vector<8x1xf32>
    %228 = arith.mulf %226, %227 : vector<8x1xf32>
    %229 = vector.broadcast %222 : vector<8x1xf32> to vector<8x128xf32>
    %230 = vector.broadcast %2 : vector<1x128xf32> to vector<8x128xf32>
    %231 = arith.maximumf %229, %230 : vector<8x128xf32>
    %232 = vector.broadcast %223 : vector<8x1xf32> to vector<8x128xf32>
    %233 = vector.broadcast %3 : vector<1x128xf32> to vector<8x128xf32>
    %234 = arith.maximumf %232, %233 : vector<8x128xf32>
    %235 = vector.broadcast %224 : vector<8x1xf32> to vector<8x128xf32>
    %236 = vector.broadcast %4 : vector<1x128xf32> to vector<8x128xf32>
    %237 = arith.minimumf %235, %236 : vector<8x128xf32>
    %238 = vector.broadcast %225 : vector<8x1xf32> to vector<8x128xf32>
    %239 = vector.broadcast %5 : vector<1x128xf32> to vector<8x128xf32>
    %240 = arith.minimumf %238, %239 : vector<8x128xf32>
    %241 = arith.subf %237, %231 : vector<8x128xf32>
    %cst_31 = arith.constant 0.000000e+00 : f32
    %242 = vector.broadcast %cst_31 : f32 to vector<8x128xf32>
    %243 = arith.maximumf %241, %242 : vector<8x128xf32>
    %244 = arith.subf %240, %234 : vector<8x128xf32>
    %cst_32 = arith.constant 0.000000e+00 : f32
    %245 = vector.broadcast %cst_32 : f32 to vector<8x128xf32>
    %246 = arith.maximumf %244, %245 : vector<8x128xf32>
    %247 = arith.mulf %243, %246 : vector<8x128xf32>
    %248 = vector.broadcast %228 : vector<8x1xf32> to vector<8x128xf32>
    %249 = vector.broadcast %9 : vector<1x128xf32> to vector<8x128xf32>
    %250 = arith.addf %248, %249 : vector<8x128xf32>
    %251 = arith.subf %250, %247 : vector<8x128xf32>
    %cst_33 = arith.constant 5.000000e-01 : f32
    %252 = vector.broadcast %cst_33 : f32 to vector<8x128xf32>
    %253 = arith.mulf %252, %251 : vector<8x128xf32>
    %254 = arith.cmpf ogt, %247, %253 : vector<8x128xf32>
    %cst_34 = arith.constant 0.000000e+00 : f32
    %255 = vector.broadcast %cst_34 : f32 to vector<8x128xf32>
    %256 = arith.cmpf ogt, %247, %255 : vector<8x128xf32>
    %257 = arith.andi %254, %256 : vector<8x128xi1>
    %c16_i32 = arith.constant 16 : i32
    %258 = vector.broadcast %c16_i32 : i32 to vector<8x128xi32>
    %259 = arith.cmpi sgt, %17, %258 : vector<8x128xi32>
    %260 = arith.andi %257, %259 : vector<8x128xi1>
    %cst_35 = arith.constant 1.000000e+00 : f32
    %cst_36 = arith.constant 0.000000e+00 : f32
    %261 = vector.broadcast %cst_35 : f32 to vector<8x128xf32>
    %262 = vector.broadcast %cst_36 : f32 to vector<8x128xf32>
    %263 = arith.select %260, %261, %262 : vector<8x128xi1>, vector<8x128xf32>
    %264 = vector.extract_strided_slice %219 {offsets = [0, 16], sizes = [1, 8], strides = [1, 1]} : vector<1x128xf32> to vector<1x8xf32>
    %265 = vector.extract_strided_slice %263 {offsets = [0, 16], sizes = [8, 8], strides = [1, 1]} : vector<8x128xf32> to vector<8x8xf32>
    %266 = vector.extract_strided_slice %264 {offsets = [0, 0], sizes = [1, 1], strides = [1, 1]} : vector<1x8xf32> to vector<1x1xf32>
    %267 = vector.extract_strided_slice %265 {offsets = [0, 0], sizes = [1, 8], strides = [1, 1]} : vector<8x8xf32> to vector<1x8xf32>
    %268 = arith.mulf %267, %264 : vector<1x8xf32>
    %269 = vector.broadcast %266 : vector<1x1xf32> to vector<1x8xf32>
    %270 = arith.mulf %269, %268 : vector<1x8xf32>
    %271 = arith.subf %264, %270 : vector<1x8xf32>
    %272 = vector.extract_strided_slice %271 {offsets = [0, 1], sizes = [1, 1], strides = [1, 1]} : vector<1x8xf32> to vector<1x1xf32>
    %273 = vector.extract_strided_slice %265 {offsets = [1, 0], sizes = [1, 8], strides = [1, 1]} : vector<8x8xf32> to vector<1x8xf32>
    %274 = arith.mulf %273, %271 : vector<1x8xf32>
    %275 = vector.broadcast %272 : vector<1x1xf32> to vector<1x8xf32>
    %276 = arith.mulf %275, %274 : vector<1x8xf32>
    %277 = arith.subf %271, %276 : vector<1x8xf32>
    %278 = vector.extract_strided_slice %277 {offsets = [0, 2], sizes = [1, 1], strides = [1, 1]} : vector<1x8xf32> to vector<1x1xf32>
    %279 = vector.extract_strided_slice %265 {offsets = [2, 0], sizes = [1, 8], strides = [1, 1]} : vector<8x8xf32> to vector<1x8xf32>
    %280 = arith.mulf %279, %277 : vector<1x8xf32>
    %281 = vector.broadcast %278 : vector<1x1xf32> to vector<1x8xf32>
    %282 = arith.mulf %281, %280 : vector<1x8xf32>
    %283 = arith.subf %277, %282 : vector<1x8xf32>
    %284 = vector.extract_strided_slice %283 {offsets = [0, 3], sizes = [1, 1], strides = [1, 1]} : vector<1x8xf32> to vector<1x1xf32>
    %285 = vector.extract_strided_slice %265 {offsets = [3, 0], sizes = [1, 8], strides = [1, 1]} : vector<8x8xf32> to vector<1x8xf32>
    %286 = arith.mulf %285, %283 : vector<1x8xf32>
    %287 = vector.broadcast %284 : vector<1x1xf32> to vector<1x8xf32>
    %288 = arith.mulf %287, %286 : vector<1x8xf32>
    %289 = arith.subf %283, %288 : vector<1x8xf32>
    %290 = vector.extract_strided_slice %289 {offsets = [0, 4], sizes = [1, 1], strides = [1, 1]} : vector<1x8xf32> to vector<1x1xf32>
    %291 = vector.extract_strided_slice %265 {offsets = [4, 0], sizes = [1, 8], strides = [1, 1]} : vector<8x8xf32> to vector<1x8xf32>
    %292 = arith.mulf %291, %289 : vector<1x8xf32>
    %293 = vector.broadcast %290 : vector<1x1xf32> to vector<1x8xf32>
    %294 = arith.mulf %293, %292 : vector<1x8xf32>
    %295 = arith.subf %289, %294 : vector<1x8xf32>
    %296 = vector.extract_strided_slice %295 {offsets = [0, 5], sizes = [1, 1], strides = [1, 1]} : vector<1x8xf32> to vector<1x1xf32>
    %297 = vector.extract_strided_slice %265 {offsets = [5, 0], sizes = [1, 8], strides = [1, 1]} : vector<8x8xf32> to vector<1x8xf32>
    %298 = arith.mulf %297, %295 : vector<1x8xf32>
    %299 = vector.broadcast %296 : vector<1x1xf32> to vector<1x8xf32>
    %300 = arith.mulf %299, %298 : vector<1x8xf32>
    %301 = arith.subf %295, %300 : vector<1x8xf32>
    %302 = vector.extract_strided_slice %301 {offsets = [0, 6], sizes = [1, 1], strides = [1, 1]} : vector<1x8xf32> to vector<1x1xf32>
    %303 = vector.extract_strided_slice %265 {offsets = [6, 0], sizes = [1, 8], strides = [1, 1]} : vector<8x8xf32> to vector<1x8xf32>
    %304 = arith.mulf %303, %301 : vector<1x8xf32>
    %305 = vector.broadcast %302 : vector<1x1xf32> to vector<1x8xf32>
    %306 = arith.mulf %305, %304 : vector<1x8xf32>
    %307 = arith.subf %301, %306 : vector<1x8xf32>
    %308 = vector.extract_strided_slice %307 {offsets = [0, 7], sizes = [1, 1], strides = [1, 1]} : vector<1x8xf32> to vector<1x1xf32>
    %309 = vector.extract_strided_slice %265 {offsets = [7, 0], sizes = [1, 8], strides = [1, 1]} : vector<8x8xf32> to vector<1x8xf32>
    %310 = arith.mulf %309, %307 : vector<1x8xf32>
    %311 = vector.broadcast %308 : vector<1x1xf32> to vector<1x8xf32>
    %312 = arith.mulf %311, %310 : vector<1x8xf32>
    %313 = arith.subf %307, %312 : vector<1x8xf32>
    %cst_37 = arith.constant dense<0.000000e+00> : vector<1x128xf32>
    %314 = tpu.matmul %313, %263, %cst_37 {dimension_numbers = #tpu.dot_dimension_numbers<[1], [0], [0], [1], [0, 0, 1, 1], [], []>} : vector<1x8xf32>, vector<8x128xf32>, vector<1x128xf32> -> vector<1x128xf32>
    %cst_38 = arith.constant 0.000000e+00 : f32
    %315 = vector.broadcast %cst_38 : f32 to vector<1x128xf32>
    %316 = arith.cmpf ogt, %314, %315 : vector<1x128xf32>
    %cst_39 = arith.constant 0.000000e+00 : f32
    %cst_40 = arith.constant 1.000000e+00 : f32
    %317 = vector.broadcast %cst_39 : f32 to vector<1x128xf32>
    %318 = vector.broadcast %cst_40 : f32 to vector<1x128xf32>
    %319 = arith.select %316, %317, %318 : vector<1x128xi1>, vector<1x128xf32>
    %320 = arith.mulf %219, %319 : vector<1x128xf32>
    %c0_41 = arith.constant 0 : index
    %c24 = arith.constant 24 : index
    %c0_42 = arith.constant 0 : index
    %321 = vector.load %arg2[%c0_41, %c24, %c0_42] : memref<1x128x4xf32, #tpu.memory_space<vmem>>, vector<1x8x4xf32>
    %322 = vector.shape_cast %321 : vector<1x8x4xf32> to vector<8x4xf32>
    %323 = vector.extract_strided_slice %322 {offsets = [0, 0], sizes = [8, 1], strides = [1, 1]} : vector<8x4xf32> to vector<8x1xf32>
    %324 = vector.extract_strided_slice %322 {offsets = [0, 1], sizes = [8, 1], strides = [1, 1]} : vector<8x4xf32> to vector<8x1xf32>
    %325 = vector.extract_strided_slice %322 {offsets = [0, 2], sizes = [8, 1], strides = [1, 1]} : vector<8x4xf32> to vector<8x1xf32>
    %326 = vector.extract_strided_slice %322 {offsets = [0, 3], sizes = [8, 1], strides = [1, 1]} : vector<8x4xf32> to vector<8x1xf32>
    %327 = arith.subf %325, %323 : vector<8x1xf32>
    %328 = arith.subf %326, %324 : vector<8x1xf32>
    %329 = arith.mulf %327, %328 : vector<8x1xf32>
    %330 = vector.broadcast %323 : vector<8x1xf32> to vector<8x128xf32>
    %331 = vector.broadcast %2 : vector<1x128xf32> to vector<8x128xf32>
    %332 = arith.maximumf %330, %331 : vector<8x128xf32>
    %333 = vector.broadcast %324 : vector<8x1xf32> to vector<8x128xf32>
    %334 = vector.broadcast %3 : vector<1x128xf32> to vector<8x128xf32>
    %335 = arith.maximumf %333, %334 : vector<8x128xf32>
    %336 = vector.broadcast %325 : vector<8x1xf32> to vector<8x128xf32>
    %337 = vector.broadcast %4 : vector<1x128xf32> to vector<8x128xf32>
    %338 = arith.minimumf %336, %337 : vector<8x128xf32>
    %339 = vector.broadcast %326 : vector<8x1xf32> to vector<8x128xf32>
    %340 = vector.broadcast %5 : vector<1x128xf32> to vector<8x128xf32>
    %341 = arith.minimumf %339, %340 : vector<8x128xf32>
    %342 = arith.subf %338, %332 : vector<8x128xf32>
    %cst_43 = arith.constant 0.000000e+00 : f32
    %343 = vector.broadcast %cst_43 : f32 to vector<8x128xf32>
    %344 = arith.maximumf %342, %343 : vector<8x128xf32>
    %345 = arith.subf %341, %335 : vector<8x128xf32>
    %cst_44 = arith.constant 0.000000e+00 : f32
    %346 = vector.broadcast %cst_44 : f32 to vector<8x128xf32>
    %347 = arith.maximumf %345, %346 : vector<8x128xf32>
    %348 = arith.mulf %344, %347 : vector<8x128xf32>
    %349 = vector.broadcast %329 : vector<8x1xf32> to vector<8x128xf32>
    %350 = vector.broadcast %9 : vector<1x128xf32> to vector<8x128xf32>
    %351 = arith.addf %349, %350 : vector<8x128xf32>
    %352 = arith.subf %351, %348 : vector<8x128xf32>
    %cst_45 = arith.constant 5.000000e-01 : f32
    %353 = vector.broadcast %cst_45 : f32 to vector<8x128xf32>
    %354 = arith.mulf %353, %352 : vector<8x128xf32>
    %355 = arith.cmpf ogt, %348, %354 : vector<8x128xf32>
    %cst_46 = arith.constant 0.000000e+00 : f32
    %356 = vector.broadcast %cst_46 : f32 to vector<8x128xf32>
    %357 = arith.cmpf ogt, %348, %356 : vector<8x128xf32>
    %358 = arith.andi %355, %357 : vector<8x128xi1>
    %c24_i32 = arith.constant 24 : i32
    %359 = vector.broadcast %c24_i32 : i32 to vector<8x128xi32>
    %360 = arith.cmpi sgt, %17, %359 : vector<8x128xi32>
    %361 = arith.andi %358, %360 : vector<8x128xi1>
    %cst_47 = arith.constant 1.000000e+00 : f32
    %cst_48 = arith.constant 0.000000e+00 : f32
    %362 = vector.broadcast %cst_47 : f32 to vector<8x128xf32>
    %363 = vector.broadcast %cst_48 : f32 to vector<8x128xf32>
    %364 = arith.select %361, %362, %363 : vector<8x128xi1>, vector<8x128xf32>
    %365 = vector.extract_strided_slice %320 {offsets = [0, 24], sizes = [1, 8], strides = [1, 1]} : vector<1x128xf32> to vector<1x8xf32>
    %366 = vector.extract_strided_slice %364 {offsets = [0, 24], sizes = [8, 8], strides = [1, 1]} : vector<8x128xf32> to vector<8x8xf32>
    %367 = vector.extract_strided_slice %365 {offsets = [0, 0], sizes = [1, 1], strides = [1, 1]} : vector<1x8xf32> to vector<1x1xf32>
    %368 = vector.extract_strided_slice %366 {offsets = [0, 0], sizes = [1, 8], strides = [1, 1]} : vector<8x8xf32> to vector<1x8xf32>
    %369 = arith.mulf %368, %365 : vector<1x8xf32>
    %370 = vector.broadcast %367 : vector<1x1xf32> to vector<1x8xf32>
    %371 = arith.mulf %370, %369 : vector<1x8xf32>
    %372 = arith.subf %365, %371 : vector<1x8xf32>
    %373 = vector.extract_strided_slice %372 {offsets = [0, 1], sizes = [1, 1], strides = [1, 1]} : vector<1x8xf32> to vector<1x1xf32>
    %374 = vector.extract_strided_slice %366 {offsets = [1, 0], sizes = [1, 8], strides = [1, 1]} : vector<8x8xf32> to vector<1x8xf32>
    %375 = arith.mulf %374, %372 : vector<1x8xf32>
    %376 = vector.broadcast %373 : vector<1x1xf32> to vector<1x8xf32>
    %377 = arith.mulf %376, %375 : vector<1x8xf32>
    %378 = arith.subf %372, %377 : vector<1x8xf32>
    %379 = vector.extract_strided_slice %378 {offsets = [0, 2], sizes = [1, 1], strides = [1, 1]} : vector<1x8xf32> to vector<1x1xf32>
    %380 = vector.extract_strided_slice %366 {offsets = [2, 0], sizes = [1, 8], strides = [1, 1]} : vector<8x8xf32> to vector<1x8xf32>
    %381 = arith.mulf %380, %378 : vector<1x8xf32>
    %382 = vector.broadcast %379 : vector<1x1xf32> to vector<1x8xf32>
    %383 = arith.mulf %382, %381 : vector<1x8xf32>
    %384 = arith.subf %378, %383 : vector<1x8xf32>
    %385 = vector.extract_strided_slice %384 {offsets = [0, 3], sizes = [1, 1], strides = [1, 1]} : vector<1x8xf32> to vector<1x1xf32>
    %386 = vector.extract_strided_slice %366 {offsets = [3, 0], sizes = [1, 8], strides = [1, 1]} : vector<8x8xf32> to vector<1x8xf32>
    %387 = arith.mulf %386, %384 : vector<1x8xf32>
    %388 = vector.broadcast %385 : vector<1x1xf32> to vector<1x8xf32>
    %389 = arith.mulf %388, %387 : vector<1x8xf32>
    %390 = arith.subf %384, %389 : vector<1x8xf32>
    %391 = vector.extract_strided_slice %390 {offsets = [0, 4], sizes = [1, 1], strides = [1, 1]} : vector<1x8xf32> to vector<1x1xf32>
    %392 = vector.extract_strided_slice %366 {offsets = [4, 0], sizes = [1, 8], strides = [1, 1]} : vector<8x8xf32> to vector<1x8xf32>
    %393 = arith.mulf %392, %390 : vector<1x8xf32>
    %394 = vector.broadcast %391 : vector<1x1xf32> to vector<1x8xf32>
    %395 = arith.mulf %394, %393 : vector<1x8xf32>
    %396 = arith.subf %390, %395 : vector<1x8xf32>
    %397 = vector.extract_strided_slice %396 {offsets = [0, 5], sizes = [1, 1], strides = [1, 1]} : vector<1x8xf32> to vector<1x1xf32>
    %398 = vector.extract_strided_slice %366 {offsets = [5, 0], sizes = [1, 8], strides = [1, 1]} : vector<8x8xf32> to vector<1x8xf32>
    %399 = arith.mulf %398, %396 : vector<1x8xf32>
    %400 = vector.broadcast %397 : vector<1x1xf32> to vector<1x8xf32>
    %401 = arith.mulf %400, %399 : vector<1x8xf32>
    %402 = arith.subf %396, %401 : vector<1x8xf32>
    %403 = vector.extract_strided_slice %402 {offsets = [0, 6], sizes = [1, 1], strides = [1, 1]} : vector<1x8xf32> to vector<1x1xf32>
    %404 = vector.extract_strided_slice %366 {offsets = [6, 0], sizes = [1, 8], strides = [1, 1]} : vector<8x8xf32> to vector<1x8xf32>
    %405 = arith.mulf %404, %402 : vector<1x8xf32>
    %406 = vector.broadcast %403 : vector<1x1xf32> to vector<1x8xf32>
    %407 = arith.mulf %406, %405 : vector<1x8xf32>
    %408 = arith.subf %402, %407 : vector<1x8xf32>
    %409 = vector.extract_strided_slice %408 {offsets = [0, 7], sizes = [1, 1], strides = [1, 1]} : vector<1x8xf32> to vector<1x1xf32>
    %410 = vector.extract_strided_slice %366 {offsets = [7, 0], sizes = [1, 8], strides = [1, 1]} : vector<8x8xf32> to vector<1x8xf32>
    %411 = arith.mulf %410, %408 : vector<1x8xf32>
    %412 = vector.broadcast %409 : vector<1x1xf32> to vector<1x8xf32>
    %413 = arith.mulf %412, %411 : vector<1x8xf32>
    %414 = arith.subf %408, %413 : vector<1x8xf32>
    %cst_49 = arith.constant dense<0.000000e+00> : vector<1x128xf32>
    %415 = tpu.matmul %414, %364, %cst_49 {dimension_numbers = #tpu.dot_dimension_numbers<[1], [0], [0], [1], [0, 0, 1, 1], [], []>} : vector<1x8xf32>, vector<8x128xf32>, vector<1x128xf32> -> vector<1x128xf32>
    %cst_50 = arith.constant 0.000000e+00 : f32
    %416 = vector.broadcast %cst_50 : f32 to vector<1x128xf32>
    %417 = arith.cmpf ogt, %415, %416 : vector<1x128xf32>
    %cst_51 = arith.constant 0.000000e+00 : f32
    %cst_52 = arith.constant 1.000000e+00 : f32
    %418 = vector.broadcast %cst_51 : f32 to vector<1x128xf32>
    %419 = vector.broadcast %cst_52 : f32 to vector<1x128xf32>
    %420 = arith.select %417, %418, %419 : vector<1x128xi1>, vector<1x128xf32>
    %421 = arith.mulf %320, %420 : vector<1x128xf32>
    %c0_53 = arith.constant 0 : index
    %c32 = arith.constant 32 : index
    %c0_54 = arith.constant 0 : index
    %422 = vector.load %arg2[%c0_53, %c32, %c0_54] : memref<1x128x4xf32, #tpu.memory_space<vmem>>, vector<1x8x4xf32>
    %423 = vector.shape_cast %422 : vector<1x8x4xf32> to vector<8x4xf32>
    %424 = vector.extract_strided_slice %423 {offsets = [0, 0], sizes = [8, 1], strides = [1, 1]} : vector<8x4xf32> to vector<8x1xf32>
    %425 = vector.extract_strided_slice %423 {offsets = [0, 1], sizes = [8, 1], strides = [1, 1]} : vector<8x4xf32> to vector<8x1xf32>
    %426 = vector.extract_strided_slice %423 {offsets = [0, 2], sizes = [8, 1], strides = [1, 1]} : vector<8x4xf32> to vector<8x1xf32>
    %427 = vector.extract_strided_slice %423 {offsets = [0, 3], sizes = [8, 1], strides = [1, 1]} : vector<8x4xf32> to vector<8x1xf32>
    %428 = arith.subf %426, %424 : vector<8x1xf32>
    %429 = arith.subf %427, %425 : vector<8x1xf32>
    %430 = arith.mulf %428, %429 : vector<8x1xf32>
    %431 = vector.broadcast %424 : vector<8x1xf32> to vector<8x128xf32>
    %432 = vector.broadcast %2 : vector<1x128xf32> to vector<8x128xf32>
    %433 = arith.maximumf %431, %432 : vector<8x128xf32>
    %434 = vector.broadcast %425 : vector<8x1xf32> to vector<8x128xf32>
    %435 = vector.broadcast %3 : vector<1x128xf32> to vector<8x128xf32>
    %436 = arith.maximumf %434, %435 : vector<8x128xf32>
    %437 = vector.broadcast %426 : vector<8x1xf32> to vector<8x128xf32>
    %438 = vector.broadcast %4 : vector<1x128xf32> to vector<8x128xf32>
    %439 = arith.minimumf %437, %438 : vector<8x128xf32>
    %440 = vector.broadcast %427 : vector<8x1xf32> to vector<8x128xf32>
    %441 = vector.broadcast %5 : vector<1x128xf32> to vector<8x128xf32>
    %442 = arith.minimumf %440, %441 : vector<8x128xf32>
    %443 = arith.subf %439, %433 : vector<8x128xf32>
    %cst_55 = arith.constant 0.000000e+00 : f32
    %444 = vector.broadcast %cst_55 : f32 to vector<8x128xf32>
    %445 = arith.maximumf %443, %444 : vector<8x128xf32>
    %446 = arith.subf %442, %436 : vector<8x128xf32>
    %cst_56 = arith.constant 0.000000e+00 : f32
    %447 = vector.broadcast %cst_56 : f32 to vector<8x128xf32>
    %448 = arith.maximumf %446, %447 : vector<8x128xf32>
    %449 = arith.mulf %445, %448 : vector<8x128xf32>
    %450 = vector.broadcast %430 : vector<8x1xf32> to vector<8x128xf32>
    %451 = vector.broadcast %9 : vector<1x128xf32> to vector<8x128xf32>
    %452 = arith.addf %450, %451 : vector<8x128xf32>
    %453 = arith.subf %452, %449 : vector<8x128xf32>
    %cst_57 = arith.constant 5.000000e-01 : f32
    %454 = vector.broadcast %cst_57 : f32 to vector<8x128xf32>
    %455 = arith.mulf %454, %453 : vector<8x128xf32>
    %456 = arith.cmpf ogt, %449, %455 : vector<8x128xf32>
    %cst_58 = arith.constant 0.000000e+00 : f32
    %457 = vector.broadcast %cst_58 : f32 to vector<8x128xf32>
    %458 = arith.cmpf ogt, %449, %457 : vector<8x128xf32>
    %459 = arith.andi %456, %458 : vector<8x128xi1>
    %c32_i32 = arith.constant 32 : i32
    %460 = vector.broadcast %c32_i32 : i32 to vector<8x128xi32>
    %461 = arith.cmpi sgt, %17, %460 : vector<8x128xi32>
    %462 = arith.andi %459, %461 : vector<8x128xi1>
    %cst_59 = arith.constant 1.000000e+00 : f32
    %cst_60 = arith.constant 0.000000e+00 : f32
    %463 = vector.broadcast %cst_59 : f32 to vector<8x128xf32>
    %464 = vector.broadcast %cst_60 : f32 to vector<8x128xf32>
    %465 = arith.select %462, %463, %464 : vector<8x128xi1>, vector<8x128xf32>
    %466 = vector.extract_strided_slice %421 {offsets = [0, 32], sizes = [1, 8], strides = [1, 1]} : vector<1x128xf32> to vector<1x8xf32>
    %467 = vector.extract_strided_slice %465 {offsets = [0, 32], sizes = [8, 8], strides = [1, 1]} : vector<8x128xf32> to vector<8x8xf32>
    %468 = vector.extract_strided_slice %466 {offsets = [0, 0], sizes = [1, 1], strides = [1, 1]} : vector<1x8xf32> to vector<1x1xf32>
    %469 = vector.extract_strided_slice %467 {offsets = [0, 0], sizes = [1, 8], strides = [1, 1]} : vector<8x8xf32> to vector<1x8xf32>
    %470 = arith.mulf %469, %466 : vector<1x8xf32>
    %471 = vector.broadcast %468 : vector<1x1xf32> to vector<1x8xf32>
    %472 = arith.mulf %471, %470 : vector<1x8xf32>
    %473 = arith.subf %466, %472 : vector<1x8xf32>
    %474 = vector.extract_strided_slice %473 {offsets = [0, 1], sizes = [1, 1], strides = [1, 1]} : vector<1x8xf32> to vector<1x1xf32>
    %475 = vector.extract_strided_slice %467 {offsets = [1, 0], sizes = [1, 8], strides = [1, 1]} : vector<8x8xf32> to vector<1x8xf32>
    %476 = arith.mulf %475, %473 : vector<1x8xf32>
    %477 = vector.broadcast %474 : vector<1x1xf32> to vector<1x8xf32>
    %478 = arith.mulf %477, %476 : vector<1x8xf32>
    %479 = arith.subf %473, %478 : vector<1x8xf32>
    %480 = vector.extract_strided_slice %479 {offsets = [0, 2], sizes = [1, 1], strides = [1, 1]} : vector<1x8xf32> to vector<1x1xf32>
    %481 = vector.extract_strided_slice %467 {offsets = [2, 0], sizes = [1, 8], strides = [1, 1]} : vector<8x8xf32> to vector<1x8xf32>
    %482 = arith.mulf %481, %479 : vector<1x8xf32>
    %483 = vector.broadcast %480 : vector<1x1xf32> to vector<1x8xf32>
    %484 = arith.mulf %483, %482 : vector<1x8xf32>
    %485 = arith.subf %479, %484 : vector<1x8xf32>
    %486 = vector.extract_strided_slice %485 {offsets = [0, 3], sizes = [1, 1], strides = [1, 1]} : vector<1x8xf32> to vector<1x1xf32>
    %487 = vector.extract_strided_slice %467 {offsets = [3, 0], sizes = [1, 8], strides = [1, 1]} : vector<8x8xf32> to vector<1x8xf32>
    %488 = arith.mulf %487, %485 : vector<1x8xf32>
    %489 = vector.broadcast %486 : vector<1x1xf32> to vector<1x8xf32>
    %490 = arith.mulf %489, %488 : vector<1x8xf32>
    %491 = arith.subf %485, %490 : vector<1x8xf32>
    %492 = vector.extract_strided_slice %491 {offsets = [0, 4], sizes = [1, 1], strides = [1, 1]} : vector<1x8xf32> to vector<1x1xf32>
    %493 = vector.extract_strided_slice %467 {offsets = [4, 0], sizes = [1, 8], strides = [1, 1]} : vector<8x8xf32> to vector<1x8xf32>
    %494 = arith.mulf %493, %491 : vector<1x8xf32>
    %495 = vector.broadcast %492 : vector<1x1xf32> to vector<1x8xf32>
    %496 = arith.mulf %495, %494 : vector<1x8xf32>
    %497 = arith.subf %491, %496 : vector<1x8xf32>
    %498 = vector.extract_strided_slice %497 {offsets = [0, 5], sizes = [1, 1], strides = [1, 1]} : vector<1x8xf32> to vector<1x1xf32>
    %499 = vector.extract_strided_slice %467 {offsets = [5, 0], sizes = [1, 8], strides = [1, 1]} : vector<8x8xf32> to vector<1x8xf32>
    %500 = arith.mulf %499, %497 : vector<1x8xf32>
    %501 = vector.broadcast %498 : vector<1x1xf32> to vector<1x8xf32>
    %502 = arith.mulf %501, %500 : vector<1x8xf32>
    %503 = arith.subf %497, %502 : vector<1x8xf32>
    %504 = vector.extract_strided_slice %503 {offsets = [0, 6], sizes = [1, 1], strides = [1, 1]} : vector<1x8xf32> to vector<1x1xf32>
    %505 = vector.extract_strided_slice %467 {offsets = [6, 0], sizes = [1, 8], strides = [1, 1]} : vector<8x8xf32> to vector<1x8xf32>
    %506 = arith.mulf %505, %503 : vector<1x8xf32>
    %507 = vector.broadcast %504 : vector<1x1xf32> to vector<1x8xf32>
    %508 = arith.mulf %507, %506 : vector<1x8xf32>
    %509 = arith.subf %503, %508 : vector<1x8xf32>
    %510 = vector.extract_strided_slice %509 {offsets = [0, 7], sizes = [1, 1], strides = [1, 1]} : vector<1x8xf32> to vector<1x1xf32>
    %511 = vector.extract_strided_slice %467 {offsets = [7, 0], sizes = [1, 8], strides = [1, 1]} : vector<8x8xf32> to vector<1x8xf32>
    %512 = arith.mulf %511, %509 : vector<1x8xf32>
    %513 = vector.broadcast %510 : vector<1x1xf32> to vector<1x8xf32>
    %514 = arith.mulf %513, %512 : vector<1x8xf32>
    %515 = arith.subf %509, %514 : vector<1x8xf32>
    %cst_61 = arith.constant dense<0.000000e+00> : vector<1x128xf32>
    %516 = tpu.matmul %515, %465, %cst_61 {dimension_numbers = #tpu.dot_dimension_numbers<[1], [0], [0], [1], [0, 0, 1, 1], [], []>} : vector<1x8xf32>, vector<8x128xf32>, vector<1x128xf32> -> vector<1x128xf32>
    %cst_62 = arith.constant 0.000000e+00 : f32
    %517 = vector.broadcast %cst_62 : f32 to vector<1x128xf32>
    %518 = arith.cmpf ogt, %516, %517 : vector<1x128xf32>
    %cst_63 = arith.constant 0.000000e+00 : f32
    %cst_64 = arith.constant 1.000000e+00 : f32
    %519 = vector.broadcast %cst_63 : f32 to vector<1x128xf32>
    %520 = vector.broadcast %cst_64 : f32 to vector<1x128xf32>
    %521 = arith.select %518, %519, %520 : vector<1x128xi1>, vector<1x128xf32>
    %522 = arith.mulf %421, %521 : vector<1x128xf32>
    %c0_65 = arith.constant 0 : index
    %c40 = arith.constant 40 : index
    %c0_66 = arith.constant 0 : index
    %523 = vector.load %arg2[%c0_65, %c40, %c0_66] : memref<1x128x4xf32, #tpu.memory_space<vmem>>, vector<1x8x4xf32>
    %524 = vector.shape_cast %523 : vector<1x8x4xf32> to vector<8x4xf32>
    %525 = vector.extract_strided_slice %524 {offsets = [0, 0], sizes = [8, 1], strides = [1, 1]} : vector<8x4xf32> to vector<8x1xf32>
    %526 = vector.extract_strided_slice %524 {offsets = [0, 1], sizes = [8, 1], strides = [1, 1]} : vector<8x4xf32> to vector<8x1xf32>
    %527 = vector.extract_strided_slice %524 {offsets = [0, 2], sizes = [8, 1], strides = [1, 1]} : vector<8x4xf32> to vector<8x1xf32>
    %528 = vector.extract_strided_slice %524 {offsets = [0, 3], sizes = [8, 1], strides = [1, 1]} : vector<8x4xf32> to vector<8x1xf32>
    %529 = arith.subf %527, %525 : vector<8x1xf32>
    %530 = arith.subf %528, %526 : vector<8x1xf32>
    %531 = arith.mulf %529, %530 : vector<8x1xf32>
    %532 = vector.broadcast %525 : vector<8x1xf32> to vector<8x128xf32>
    %533 = vector.broadcast %2 : vector<1x128xf32> to vector<8x128xf32>
    %534 = arith.maximumf %532, %533 : vector<8x128xf32>
    %535 = vector.broadcast %526 : vector<8x1xf32> to vector<8x128xf32>
    %536 = vector.broadcast %3 : vector<1x128xf32> to vector<8x128xf32>
    %537 = arith.maximumf %535, %536 : vector<8x128xf32>
    %538 = vector.broadcast %527 : vector<8x1xf32> to vector<8x128xf32>
    %539 = vector.broadcast %4 : vector<1x128xf32> to vector<8x128xf32>
    %540 = arith.minimumf %538, %539 : vector<8x128xf32>
    %541 = vector.broadcast %528 : vector<8x1xf32> to vector<8x128xf32>
    %542 = vector.broadcast %5 : vector<1x128xf32> to vector<8x128xf32>
    %543 = arith.minimumf %541, %542 : vector<8x128xf32>
    %544 = arith.subf %540, %534 : vector<8x128xf32>
    %cst_67 = arith.constant 0.000000e+00 : f32
    %545 = vector.broadcast %cst_67 : f32 to vector<8x128xf32>
    %546 = arith.maximumf %544, %545 : vector<8x128xf32>
    %547 = arith.subf %543, %537 : vector<8x128xf32>
    %cst_68 = arith.constant 0.000000e+00 : f32
    %548 = vector.broadcast %cst_68 : f32 to vector<8x128xf32>
    %549 = arith.maximumf %547, %548 : vector<8x128xf32>
    %550 = arith.mulf %546, %549 : vector<8x128xf32>
    %551 = vector.broadcast %531 : vector<8x1xf32> to vector<8x128xf32>
    %552 = vector.broadcast %9 : vector<1x128xf32> to vector<8x128xf32>
    %553 = arith.addf %551, %552 : vector<8x128xf32>
    %554 = arith.subf %553, %550 : vector<8x128xf32>
    %cst_69 = arith.constant 5.000000e-01 : f32
    %555 = vector.broadcast %cst_69 : f32 to vector<8x128xf32>
    %556 = arith.mulf %555, %554 : vector<8x128xf32>
    %557 = arith.cmpf ogt, %550, %556 : vector<8x128xf32>
    %cst_70 = arith.constant 0.000000e+00 : f32
    %558 = vector.broadcast %cst_70 : f32 to vector<8x128xf32>
    %559 = arith.cmpf ogt, %550, %558 : vector<8x128xf32>
    %560 = arith.andi %557, %559 : vector<8x128xi1>
    %c40_i32 = arith.constant 40 : i32
    %561 = vector.broadcast %c40_i32 : i32 to vector<8x128xi32>
    %562 = arith.cmpi sgt, %17, %561 : vector<8x128xi32>
    %563 = arith.andi %560, %562 : vector<8x128xi1>
    %cst_71 = arith.constant 1.000000e+00 : f32
    %cst_72 = arith.constant 0.000000e+00 : f32
    %564 = vector.broadcast %cst_71 : f32 to vector<8x128xf32>
    %565 = vector.broadcast %cst_72 : f32 to vector<8x128xf32>
    %566 = arith.select %563, %564, %565 : vector<8x128xi1>, vector<8x128xf32>
    %567 = vector.extract_strided_slice %522 {offsets = [0, 40], sizes = [1, 8], strides = [1, 1]} : vector<1x128xf32> to vector<1x8xf32>
    %568 = vector.extract_strided_slice %566 {offsets = [0, 40], sizes = [8, 8], strides = [1, 1]} : vector<8x128xf32> to vector<8x8xf32>
    %569 = vector.extract_strided_slice %567 {offsets = [0, 0], sizes = [1, 1], strides = [1, 1]} : vector<1x8xf32> to vector<1x1xf32>
    %570 = vector.extract_strided_slice %568 {offsets = [0, 0], sizes = [1, 8], strides = [1, 1]} : vector<8x8xf32> to vector<1x8xf32>
    %571 = arith.mulf %570, %567 : vector<1x8xf32>
    %572 = vector.broadcast %569 : vector<1x1xf32> to vector<1x8xf32>
    %573 = arith.mulf %572, %571 : vector<1x8xf32>
    %574 = arith.subf %567, %573 : vector<1x8xf32>
    %575 = vector.extract_strided_slice %574 {offsets = [0, 1], sizes = [1, 1], strides = [1, 1]} : vector<1x8xf32> to vector<1x1xf32>
    %576 = vector.extract_strided_slice %568 {offsets = [1, 0], sizes = [1, 8], strides = [1, 1]} : vector<8x8xf32> to vector<1x8xf32>
    %577 = arith.mulf %576, %574 : vector<1x8xf32>
    %578 = vector.broadcast %575 : vector<1x1xf32> to vector<1x8xf32>
    %579 = arith.mulf %578, %577 : vector<1x8xf32>
    %580 = arith.subf %574, %579 : vector<1x8xf32>
    %581 = vector.extract_strided_slice %580 {offsets = [0, 2], sizes = [1, 1], strides = [1, 1]} : vector<1x8xf32> to vector<1x1xf32>
    %582 = vector.extract_strided_slice %568 {offsets = [2, 0], sizes = [1, 8], strides = [1, 1]} : vector<8x8xf32> to vector<1x8xf32>
    %583 = arith.mulf %582, %580 : vector<1x8xf32>
    %584 = vector.broadcast %581 : vector<1x1xf32> to vector<1x8xf32>
    %585 = arith.mulf %584, %583 : vector<1x8xf32>
    %586 = arith.subf %580, %585 : vector<1x8xf32>
    %587 = vector.extract_strided_slice %586 {offsets = [0, 3], sizes = [1, 1], strides = [1, 1]} : vector<1x8xf32> to vector<1x1xf32>
    %588 = vector.extract_strided_slice %568 {offsets = [3, 0], sizes = [1, 8], strides = [1, 1]} : vector<8x8xf32> to vector<1x8xf32>
    %589 = arith.mulf %588, %586 : vector<1x8xf32>
    %590 = vector.broadcast %587 : vector<1x1xf32> to vector<1x8xf32>
    %591 = arith.mulf %590, %589 : vector<1x8xf32>
    %592 = arith.subf %586, %591 : vector<1x8xf32>
    %593 = vector.extract_strided_slice %592 {offsets = [0, 4], sizes = [1, 1], strides = [1, 1]} : vector<1x8xf32> to vector<1x1xf32>
    %594 = vector.extract_strided_slice %568 {offsets = [4, 0], sizes = [1, 8], strides = [1, 1]} : vector<8x8xf32> to vector<1x8xf32>
    %595 = arith.mulf %594, %592 : vector<1x8xf32>
    %596 = vector.broadcast %593 : vector<1x1xf32> to vector<1x8xf32>
    %597 = arith.mulf %596, %595 : vector<1x8xf32>
    %598 = arith.subf %592, %597 : vector<1x8xf32>
    %599 = vector.extract_strided_slice %598 {offsets = [0, 5], sizes = [1, 1], strides = [1, 1]} : vector<1x8xf32> to vector<1x1xf32>
    %600 = vector.extract_strided_slice %568 {offsets = [5, 0], sizes = [1, 8], strides = [1, 1]} : vector<8x8xf32> to vector<1x8xf32>
    %601 = arith.mulf %600, %598 : vector<1x8xf32>
    %602 = vector.broadcast %599 : vector<1x1xf32> to vector<1x8xf32>
    %603 = arith.mulf %602, %601 : vector<1x8xf32>
    %604 = arith.subf %598, %603 : vector<1x8xf32>
    %605 = vector.extract_strided_slice %604 {offsets = [0, 6], sizes = [1, 1], strides = [1, 1]} : vector<1x8xf32> to vector<1x1xf32>
    %606 = vector.extract_strided_slice %568 {offsets = [6, 0], sizes = [1, 8], strides = [1, 1]} : vector<8x8xf32> to vector<1x8xf32>
    %607 = arith.mulf %606, %604 : vector<1x8xf32>
    %608 = vector.broadcast %605 : vector<1x1xf32> to vector<1x8xf32>
    %609 = arith.mulf %608, %607 : vector<1x8xf32>
    %610 = arith.subf %604, %609 : vector<1x8xf32>
    %611 = vector.extract_strided_slice %610 {offsets = [0, 7], sizes = [1, 1], strides = [1, 1]} : vector<1x8xf32> to vector<1x1xf32>
    %612 = vector.extract_strided_slice %568 {offsets = [7, 0], sizes = [1, 8], strides = [1, 1]} : vector<8x8xf32> to vector<1x8xf32>
    %613 = arith.mulf %612, %610 : vector<1x8xf32>
    %614 = vector.broadcast %611 : vector<1x1xf32> to vector<1x8xf32>
    %615 = arith.mulf %614, %613 : vector<1x8xf32>
    %616 = arith.subf %610, %615 : vector<1x8xf32>
    %cst_73 = arith.constant dense<0.000000e+00> : vector<1x128xf32>
    %617 = tpu.matmul %616, %566, %cst_73 {dimension_numbers = #tpu.dot_dimension_numbers<[1], [0], [0], [1], [0, 0, 1, 1], [], []>} : vector<1x8xf32>, vector<8x128xf32>, vector<1x128xf32> -> vector<1x128xf32>
    %cst_74 = arith.constant 0.000000e+00 : f32
    %618 = vector.broadcast %cst_74 : f32 to vector<1x128xf32>
    %619 = arith.cmpf ogt, %617, %618 : vector<1x128xf32>
    %cst_75 = arith.constant 0.000000e+00 : f32
    %cst_76 = arith.constant 1.000000e+00 : f32
    %620 = vector.broadcast %cst_75 : f32 to vector<1x128xf32>
    %621 = vector.broadcast %cst_76 : f32 to vector<1x128xf32>
    %622 = arith.select %619, %620, %621 : vector<1x128xi1>, vector<1x128xf32>
    %623 = arith.mulf %522, %622 : vector<1x128xf32>
    %c0_77 = arith.constant 0 : index
    %c48 = arith.constant 48 : index
    %c0_78 = arith.constant 0 : index
    %624 = vector.load %arg2[%c0_77, %c48, %c0_78] : memref<1x128x4xf32, #tpu.memory_space<vmem>>, vector<1x8x4xf32>
    %625 = vector.shape_cast %624 : vector<1x8x4xf32> to vector<8x4xf32>
    %626 = vector.extract_strided_slice %625 {offsets = [0, 0], sizes = [8, 1], strides = [1, 1]} : vector<8x4xf32> to vector<8x1xf32>
    %627 = vector.extract_strided_slice %625 {offsets = [0, 1], sizes = [8, 1], strides = [1, 1]} : vector<8x4xf32> to vector<8x1xf32>
    %628 = vector.extract_strided_slice %625 {offsets = [0, 2], sizes = [8, 1], strides = [1, 1]} : vector<8x4xf32> to vector<8x1xf32>
    %629 = vector.extract_strided_slice %625 {offsets = [0, 3], sizes = [8, 1], strides = [1, 1]} : vector<8x4xf32> to vector<8x1xf32>
    %630 = arith.subf %628, %626 : vector<8x1xf32>
    %631 = arith.subf %629, %627 : vector<8x1xf32>
    %632 = arith.mulf %630, %631 : vector<8x1xf32>
    %633 = vector.broadcast %626 : vector<8x1xf32> to vector<8x128xf32>
    %634 = vector.broadcast %2 : vector<1x128xf32> to vector<8x128xf32>
    %635 = arith.maximumf %633, %634 : vector<8x128xf32>
    %636 = vector.broadcast %627 : vector<8x1xf32> to vector<8x128xf32>
    %637 = vector.broadcast %3 : vector<1x128xf32> to vector<8x128xf32>
    %638 = arith.maximumf %636, %637 : vector<8x128xf32>
    %639 = vector.broadcast %628 : vector<8x1xf32> to vector<8x128xf32>
    %640 = vector.broadcast %4 : vector<1x128xf32> to vector<8x128xf32>
    %641 = arith.minimumf %639, %640 : vector<8x128xf32>
    %642 = vector.broadcast %629 : vector<8x1xf32> to vector<8x128xf32>
    %643 = vector.broadcast %5 : vector<1x128xf32> to vector<8x128xf32>
    %644 = arith.minimumf %642, %643 : vector<8x128xf32>
    %645 = arith.subf %641, %635 : vector<8x128xf32>
    %cst_79 = arith.constant 0.000000e+00 : f32
    %646 = vector.broadcast %cst_79 : f32 to vector<8x128xf32>
    %647 = arith.maximumf %645, %646 : vector<8x128xf32>
    %648 = arith.subf %644, %638 : vector<8x128xf32>
    %cst_80 = arith.constant 0.000000e+00 : f32
    %649 = vector.broadcast %cst_80 : f32 to vector<8x128xf32>
    %650 = arith.maximumf %648, %649 : vector<8x128xf32>
    %651 = arith.mulf %647, %650 : vector<8x128xf32>
    %652 = vector.broadcast %632 : vector<8x1xf32> to vector<8x128xf32>
    %653 = vector.broadcast %9 : vector<1x128xf32> to vector<8x128xf32>
    %654 = arith.addf %652, %653 : vector<8x128xf32>
    %655 = arith.subf %654, %651 : vector<8x128xf32>
    %cst_81 = arith.constant 5.000000e-01 : f32
    %656 = vector.broadcast %cst_81 : f32 to vector<8x128xf32>
    %657 = arith.mulf %656, %655 : vector<8x128xf32>
    %658 = arith.cmpf ogt, %651, %657 : vector<8x128xf32>
    %cst_82 = arith.constant 0.000000e+00 : f32
    %659 = vector.broadcast %cst_82 : f32 to vector<8x128xf32>
    %660 = arith.cmpf ogt, %651, %659 : vector<8x128xf32>
    %661 = arith.andi %658, %660 : vector<8x128xi1>
    %c48_i32 = arith.constant 48 : i32
    %662 = vector.broadcast %c48_i32 : i32 to vector<8x128xi32>
    %663 = arith.cmpi sgt, %17, %662 : vector<8x128xi32>
    %664 = arith.andi %661, %663 : vector<8x128xi1>
    %cst_83 = arith.constant 1.000000e+00 : f32
    %cst_84 = arith.constant 0.000000e+00 : f32
    %665 = vector.broadcast %cst_83 : f32 to vector<8x128xf32>
    %666 = vector.broadcast %cst_84 : f32 to vector<8x128xf32>
    %667 = arith.select %664, %665, %666 : vector<8x128xi1>, vector<8x128xf32>
    %668 = vector.extract_strided_slice %623 {offsets = [0, 48], sizes = [1, 8], strides = [1, 1]} : vector<1x128xf32> to vector<1x8xf32>
    %669 = vector.extract_strided_slice %667 {offsets = [0, 48], sizes = [8, 8], strides = [1, 1]} : vector<8x128xf32> to vector<8x8xf32>
    %670 = vector.extract_strided_slice %668 {offsets = [0, 0], sizes = [1, 1], strides = [1, 1]} : vector<1x8xf32> to vector<1x1xf32>
    %671 = vector.extract_strided_slice %669 {offsets = [0, 0], sizes = [1, 8], strides = [1, 1]} : vector<8x8xf32> to vector<1x8xf32>
    %672 = arith.mulf %671, %668 : vector<1x8xf32>
    %673 = vector.broadcast %670 : vector<1x1xf32> to vector<1x8xf32>
    %674 = arith.mulf %673, %672 : vector<1x8xf32>
    %675 = arith.subf %668, %674 : vector<1x8xf32>
    %676 = vector.extract_strided_slice %675 {offsets = [0, 1], sizes = [1, 1], strides = [1, 1]} : vector<1x8xf32> to vector<1x1xf32>
    %677 = vector.extract_strided_slice %669 {offsets = [1, 0], sizes = [1, 8], strides = [1, 1]} : vector<8x8xf32> to vector<1x8xf32>
    %678 = arith.mulf %677, %675 : vector<1x8xf32>
    %679 = vector.broadcast %676 : vector<1x1xf32> to vector<1x8xf32>
    %680 = arith.mulf %679, %678 : vector<1x8xf32>
    %681 = arith.subf %675, %680 : vector<1x8xf32>
    %682 = vector.extract_strided_slice %681 {offsets = [0, 2], sizes = [1, 1], strides = [1, 1]} : vector<1x8xf32> to vector<1x1xf32>
    %683 = vector.extract_strided_slice %669 {offsets = [2, 0], sizes = [1, 8], strides = [1, 1]} : vector<8x8xf32> to vector<1x8xf32>
    %684 = arith.mulf %683, %681 : vector<1x8xf32>
    %685 = vector.broadcast %682 : vector<1x1xf32> to vector<1x8xf32>
    %686 = arith.mulf %685, %684 : vector<1x8xf32>
    %687 = arith.subf %681, %686 : vector<1x8xf32>
    %688 = vector.extract_strided_slice %687 {offsets = [0, 3], sizes = [1, 1], strides = [1, 1]} : vector<1x8xf32> to vector<1x1xf32>
    %689 = vector.extract_strided_slice %669 {offsets = [3, 0], sizes = [1, 8], strides = [1, 1]} : vector<8x8xf32> to vector<1x8xf32>
    %690 = arith.mulf %689, %687 : vector<1x8xf32>
    %691 = vector.broadcast %688 : vector<1x1xf32> to vector<1x8xf32>
    %692 = arith.mulf %691, %690 : vector<1x8xf32>
    %693 = arith.subf %687, %692 : vector<1x8xf32>
    %694 = vector.extract_strided_slice %693 {offsets = [0, 4], sizes = [1, 1], strides = [1, 1]} : vector<1x8xf32> to vector<1x1xf32>
    %695 = vector.extract_strided_slice %669 {offsets = [4, 0], sizes = [1, 8], strides = [1, 1]} : vector<8x8xf32> to vector<1x8xf32>
    %696 = arith.mulf %695, %693 : vector<1x8xf32>
    %697 = vector.broadcast %694 : vector<1x1xf32> to vector<1x8xf32>
    %698 = arith.mulf %697, %696 : vector<1x8xf32>
    %699 = arith.subf %693, %698 : vector<1x8xf32>
    %700 = vector.extract_strided_slice %699 {offsets = [0, 5], sizes = [1, 1], strides = [1, 1]} : vector<1x8xf32> to vector<1x1xf32>
    %701 = vector.extract_strided_slice %669 {offsets = [5, 0], sizes = [1, 8], strides = [1, 1]} : vector<8x8xf32> to vector<1x8xf32>
    %702 = arith.mulf %701, %699 : vector<1x8xf32>
    %703 = vector.broadcast %700 : vector<1x1xf32> to vector<1x8xf32>
    %704 = arith.mulf %703, %702 : vector<1x8xf32>
    %705 = arith.subf %699, %704 : vector<1x8xf32>
    %706 = vector.extract_strided_slice %705 {offsets = [0, 6], sizes = [1, 1], strides = [1, 1]} : vector<1x8xf32> to vector<1x1xf32>
    %707 = vector.extract_strided_slice %669 {offsets = [6, 0], sizes = [1, 8], strides = [1, 1]} : vector<8x8xf32> to vector<1x8xf32>
    %708 = arith.mulf %707, %705 : vector<1x8xf32>
    %709 = vector.broadcast %706 : vector<1x1xf32> to vector<1x8xf32>
    %710 = arith.mulf %709, %708 : vector<1x8xf32>
    %711 = arith.subf %705, %710 : vector<1x8xf32>
    %712 = vector.extract_strided_slice %711 {offsets = [0, 7], sizes = [1, 1], strides = [1, 1]} : vector<1x8xf32> to vector<1x1xf32>
    %713 = vector.extract_strided_slice %669 {offsets = [7, 0], sizes = [1, 8], strides = [1, 1]} : vector<8x8xf32> to vector<1x8xf32>
    %714 = arith.mulf %713, %711 : vector<1x8xf32>
    %715 = vector.broadcast %712 : vector<1x1xf32> to vector<1x8xf32>
    %716 = arith.mulf %715, %714 : vector<1x8xf32>
    %717 = arith.subf %711, %716 : vector<1x8xf32>
    %cst_85 = arith.constant dense<0.000000e+00> : vector<1x128xf32>
    %718 = tpu.matmul %717, %667, %cst_85 {dimension_numbers = #tpu.dot_dimension_numbers<[1], [0], [0], [1], [0, 0, 1, 1], [], []>} : vector<1x8xf32>, vector<8x128xf32>, vector<1x128xf32> -> vector<1x128xf32>
    %cst_86 = arith.constant 0.000000e+00 : f32
    %719 = vector.broadcast %cst_86 : f32 to vector<1x128xf32>
    %720 = arith.cmpf ogt, %718, %719 : vector<1x128xf32>
    %cst_87 = arith.constant 0.000000e+00 : f32
    %cst_88 = arith.constant 1.000000e+00 : f32
    %721 = vector.broadcast %cst_87 : f32 to vector<1x128xf32>
    %722 = vector.broadcast %cst_88 : f32 to vector<1x128xf32>
    %723 = arith.select %720, %721, %722 : vector<1x128xi1>, vector<1x128xf32>
    %724 = arith.mulf %623, %723 : vector<1x128xf32>
    %c0_89 = arith.constant 0 : index
    %c56 = arith.constant 56 : index
    %c0_90 = arith.constant 0 : index
    %725 = vector.load %arg2[%c0_89, %c56, %c0_90] : memref<1x128x4xf32, #tpu.memory_space<vmem>>, vector<1x8x4xf32>
    %726 = vector.shape_cast %725 : vector<1x8x4xf32> to vector<8x4xf32>
    %727 = vector.extract_strided_slice %726 {offsets = [0, 0], sizes = [8, 1], strides = [1, 1]} : vector<8x4xf32> to vector<8x1xf32>
    %728 = vector.extract_strided_slice %726 {offsets = [0, 1], sizes = [8, 1], strides = [1, 1]} : vector<8x4xf32> to vector<8x1xf32>
    %729 = vector.extract_strided_slice %726 {offsets = [0, 2], sizes = [8, 1], strides = [1, 1]} : vector<8x4xf32> to vector<8x1xf32>
    %730 = vector.extract_strided_slice %726 {offsets = [0, 3], sizes = [8, 1], strides = [1, 1]} : vector<8x4xf32> to vector<8x1xf32>
    %731 = arith.subf %729, %727 : vector<8x1xf32>
    %732 = arith.subf %730, %728 : vector<8x1xf32>
    %733 = arith.mulf %731, %732 : vector<8x1xf32>
    %734 = vector.broadcast %727 : vector<8x1xf32> to vector<8x128xf32>
    %735 = vector.broadcast %2 : vector<1x128xf32> to vector<8x128xf32>
    %736 = arith.maximumf %734, %735 : vector<8x128xf32>
    %737 = vector.broadcast %728 : vector<8x1xf32> to vector<8x128xf32>
    %738 = vector.broadcast %3 : vector<1x128xf32> to vector<8x128xf32>
    %739 = arith.maximumf %737, %738 : vector<8x128xf32>
    %740 = vector.broadcast %729 : vector<8x1xf32> to vector<8x128xf32>
    %741 = vector.broadcast %4 : vector<1x128xf32> to vector<8x128xf32>
    %742 = arith.minimumf %740, %741 : vector<8x128xf32>
    %743 = vector.broadcast %730 : vector<8x1xf32> to vector<8x128xf32>
    %744 = vector.broadcast %5 : vector<1x128xf32> to vector<8x128xf32>
    %745 = arith.minimumf %743, %744 : vector<8x128xf32>
    %746 = arith.subf %742, %736 : vector<8x128xf32>
    %cst_91 = arith.constant 0.000000e+00 : f32
    %747 = vector.broadcast %cst_91 : f32 to vector<8x128xf32>
    %748 = arith.maximumf %746, %747 : vector<8x128xf32>
    %749 = arith.subf %745, %739 : vector<8x128xf32>
    %cst_92 = arith.constant 0.000000e+00 : f32
    %750 = vector.broadcast %cst_92 : f32 to vector<8x128xf32>
    %751 = arith.maximumf %749, %750 : vector<8x128xf32>
    %752 = arith.mulf %748, %751 : vector<8x128xf32>
    %753 = vector.broadcast %733 : vector<8x1xf32> to vector<8x128xf32>
    %754 = vector.broadcast %9 : vector<1x128xf32> to vector<8x128xf32>
    %755 = arith.addf %753, %754 : vector<8x128xf32>
    %756 = arith.subf %755, %752 : vector<8x128xf32>
    %cst_93 = arith.constant 5.000000e-01 : f32
    %757 = vector.broadcast %cst_93 : f32 to vector<8x128xf32>
    %758 = arith.mulf %757, %756 : vector<8x128xf32>
    %759 = arith.cmpf ogt, %752, %758 : vector<8x128xf32>
    %cst_94 = arith.constant 0.000000e+00 : f32
    %760 = vector.broadcast %cst_94 : f32 to vector<8x128xf32>
    %761 = arith.cmpf ogt, %752, %760 : vector<8x128xf32>
    %762 = arith.andi %759, %761 : vector<8x128xi1>
    %c56_i32 = arith.constant 56 : i32
    %763 = vector.broadcast %c56_i32 : i32 to vector<8x128xi32>
    %764 = arith.cmpi sgt, %17, %763 : vector<8x128xi32>
    %765 = arith.andi %762, %764 : vector<8x128xi1>
    %cst_95 = arith.constant 1.000000e+00 : f32
    %cst_96 = arith.constant 0.000000e+00 : f32
    %766 = vector.broadcast %cst_95 : f32 to vector<8x128xf32>
    %767 = vector.broadcast %cst_96 : f32 to vector<8x128xf32>
    %768 = arith.select %765, %766, %767 : vector<8x128xi1>, vector<8x128xf32>
    %769 = vector.extract_strided_slice %724 {offsets = [0, 56], sizes = [1, 8], strides = [1, 1]} : vector<1x128xf32> to vector<1x8xf32>
    %770 = vector.extract_strided_slice %768 {offsets = [0, 56], sizes = [8, 8], strides = [1, 1]} : vector<8x128xf32> to vector<8x8xf32>
    %771 = vector.extract_strided_slice %769 {offsets = [0, 0], sizes = [1, 1], strides = [1, 1]} : vector<1x8xf32> to vector<1x1xf32>
    %772 = vector.extract_strided_slice %770 {offsets = [0, 0], sizes = [1, 8], strides = [1, 1]} : vector<8x8xf32> to vector<1x8xf32>
    %773 = arith.mulf %772, %769 : vector<1x8xf32>
    %774 = vector.broadcast %771 : vector<1x1xf32> to vector<1x8xf32>
    %775 = arith.mulf %774, %773 : vector<1x8xf32>
    %776 = arith.subf %769, %775 : vector<1x8xf32>
    %777 = vector.extract_strided_slice %776 {offsets = [0, 1], sizes = [1, 1], strides = [1, 1]} : vector<1x8xf32> to vector<1x1xf32>
    %778 = vector.extract_strided_slice %770 {offsets = [1, 0], sizes = [1, 8], strides = [1, 1]} : vector<8x8xf32> to vector<1x8xf32>
    %779 = arith.mulf %778, %776 : vector<1x8xf32>
    %780 = vector.broadcast %777 : vector<1x1xf32> to vector<1x8xf32>
    %781 = arith.mulf %780, %779 : vector<1x8xf32>
    %782 = arith.subf %776, %781 : vector<1x8xf32>
    %783 = vector.extract_strided_slice %782 {offsets = [0, 2], sizes = [1, 1], strides = [1, 1]} : vector<1x8xf32> to vector<1x1xf32>
    %784 = vector.extract_strided_slice %770 {offsets = [2, 0], sizes = [1, 8], strides = [1, 1]} : vector<8x8xf32> to vector<1x8xf32>
    %785 = arith.mulf %784, %782 : vector<1x8xf32>
    %786 = vector.broadcast %783 : vector<1x1xf32> to vector<1x8xf32>
    %787 = arith.mulf %786, %785 : vector<1x8xf32>
    %788 = arith.subf %782, %787 : vector<1x8xf32>
    %789 = vector.extract_strided_slice %788 {offsets = [0, 3], sizes = [1, 1], strides = [1, 1]} : vector<1x8xf32> to vector<1x1xf32>
    %790 = vector.extract_strided_slice %770 {offsets = [3, 0], sizes = [1, 8], strides = [1, 1]} : vector<8x8xf32> to vector<1x8xf32>
    %791 = arith.mulf %790, %788 : vector<1x8xf32>
    %792 = vector.broadcast %789 : vector<1x1xf32> to vector<1x8xf32>
    %793 = arith.mulf %792, %791 : vector<1x8xf32>
    %794 = arith.subf %788, %793 : vector<1x8xf32>
    %795 = vector.extract_strided_slice %794 {offsets = [0, 4], sizes = [1, 1], strides = [1, 1]} : vector<1x8xf32> to vector<1x1xf32>
    %796 = vector.extract_strided_slice %770 {offsets = [4, 0], sizes = [1, 8], strides = [1, 1]} : vector<8x8xf32> to vector<1x8xf32>
    %797 = arith.mulf %796, %794 : vector<1x8xf32>
    %798 = vector.broadcast %795 : vector<1x1xf32> to vector<1x8xf32>
    %799 = arith.mulf %798, %797 : vector<1x8xf32>
    %800 = arith.subf %794, %799 : vector<1x8xf32>
    %801 = vector.extract_strided_slice %800 {offsets = [0, 5], sizes = [1, 1], strides = [1, 1]} : vector<1x8xf32> to vector<1x1xf32>
    %802 = vector.extract_strided_slice %770 {offsets = [5, 0], sizes = [1, 8], strides = [1, 1]} : vector<8x8xf32> to vector<1x8xf32>
    %803 = arith.mulf %802, %800 : vector<1x8xf32>
    %804 = vector.broadcast %801 : vector<1x1xf32> to vector<1x8xf32>
    %805 = arith.mulf %804, %803 : vector<1x8xf32>
    %806 = arith.subf %800, %805 : vector<1x8xf32>
    %807 = vector.extract_strided_slice %806 {offsets = [0, 6], sizes = [1, 1], strides = [1, 1]} : vector<1x8xf32> to vector<1x1xf32>
    %808 = vector.extract_strided_slice %770 {offsets = [6, 0], sizes = [1, 8], strides = [1, 1]} : vector<8x8xf32> to vector<1x8xf32>
    %809 = arith.mulf %808, %806 : vector<1x8xf32>
    %810 = vector.broadcast %807 : vector<1x1xf32> to vector<1x8xf32>
    %811 = arith.mulf %810, %809 : vector<1x8xf32>
    %812 = arith.subf %806, %811 : vector<1x8xf32>
    %813 = vector.extract_strided_slice %812 {offsets = [0, 7], sizes = [1, 1], strides = [1, 1]} : vector<1x8xf32> to vector<1x1xf32>
    %814 = vector.extract_strided_slice %770 {offsets = [7, 0], sizes = [1, 8], strides = [1, 1]} : vector<8x8xf32> to vector<1x8xf32>
    %815 = arith.mulf %814, %812 : vector<1x8xf32>
    %816 = vector.broadcast %813 : vector<1x1xf32> to vector<1x8xf32>
    %817 = arith.mulf %816, %815 : vector<1x8xf32>
    %818 = arith.subf %812, %817 : vector<1x8xf32>
    %cst_97 = arith.constant dense<0.000000e+00> : vector<1x128xf32>
    %819 = tpu.matmul %818, %768, %cst_97 {dimension_numbers = #tpu.dot_dimension_numbers<[1], [0], [0], [1], [0, 0, 1, 1], [], []>} : vector<1x8xf32>, vector<8x128xf32>, vector<1x128xf32> -> vector<1x128xf32>
    %cst_98 = arith.constant 0.000000e+00 : f32
    %820 = vector.broadcast %cst_98 : f32 to vector<1x128xf32>
    %821 = arith.cmpf ogt, %819, %820 : vector<1x128xf32>
    %cst_99 = arith.constant 0.000000e+00 : f32
    %cst_100 = arith.constant 1.000000e+00 : f32
    %822 = vector.broadcast %cst_99 : f32 to vector<1x128xf32>
    %823 = vector.broadcast %cst_100 : f32 to vector<1x128xf32>
    %824 = arith.select %821, %822, %823 : vector<1x128xi1>, vector<1x128xf32>
    %825 = arith.mulf %724, %824 : vector<1x128xf32>
    %c0_101 = arith.constant 0 : index
    %c64 = arith.constant 64 : index
    %c0_102 = arith.constant 0 : index
    %826 = vector.load %arg2[%c0_101, %c64, %c0_102] : memref<1x128x4xf32, #tpu.memory_space<vmem>>, vector<1x8x4xf32>
    %827 = vector.shape_cast %826 : vector<1x8x4xf32> to vector<8x4xf32>
    %828 = vector.extract_strided_slice %827 {offsets = [0, 0], sizes = [8, 1], strides = [1, 1]} : vector<8x4xf32> to vector<8x1xf32>
    %829 = vector.extract_strided_slice %827 {offsets = [0, 1], sizes = [8, 1], strides = [1, 1]} : vector<8x4xf32> to vector<8x1xf32>
    %830 = vector.extract_strided_slice %827 {offsets = [0, 2], sizes = [8, 1], strides = [1, 1]} : vector<8x4xf32> to vector<8x1xf32>
    %831 = vector.extract_strided_slice %827 {offsets = [0, 3], sizes = [8, 1], strides = [1, 1]} : vector<8x4xf32> to vector<8x1xf32>
    %832 = arith.subf %830, %828 : vector<8x1xf32>
    %833 = arith.subf %831, %829 : vector<8x1xf32>
    %834 = arith.mulf %832, %833 : vector<8x1xf32>
    %835 = vector.broadcast %828 : vector<8x1xf32> to vector<8x128xf32>
    %836 = vector.broadcast %2 : vector<1x128xf32> to vector<8x128xf32>
    %837 = arith.maximumf %835, %836 : vector<8x128xf32>
    %838 = vector.broadcast %829 : vector<8x1xf32> to vector<8x128xf32>
    %839 = vector.broadcast %3 : vector<1x128xf32> to vector<8x128xf32>
    %840 = arith.maximumf %838, %839 : vector<8x128xf32>
    %841 = vector.broadcast %830 : vector<8x1xf32> to vector<8x128xf32>
    %842 = vector.broadcast %4 : vector<1x128xf32> to vector<8x128xf32>
    %843 = arith.minimumf %841, %842 : vector<8x128xf32>
    %844 = vector.broadcast %831 : vector<8x1xf32> to vector<8x128xf32>
    %845 = vector.broadcast %5 : vector<1x128xf32> to vector<8x128xf32>
    %846 = arith.minimumf %844, %845 : vector<8x128xf32>
    %847 = arith.subf %843, %837 : vector<8x128xf32>
    %cst_103 = arith.constant 0.000000e+00 : f32
    %848 = vector.broadcast %cst_103 : f32 to vector<8x128xf32>
    %849 = arith.maximumf %847, %848 : vector<8x128xf32>
    %850 = arith.subf %846, %840 : vector<8x128xf32>
    %cst_104 = arith.constant 0.000000e+00 : f32
    %851 = vector.broadcast %cst_104 : f32 to vector<8x128xf32>
    %852 = arith.maximumf %850, %851 : vector<8x128xf32>
    %853 = arith.mulf %849, %852 : vector<8x128xf32>
    %854 = vector.broadcast %834 : vector<8x1xf32> to vector<8x128xf32>
    %855 = vector.broadcast %9 : vector<1x128xf32> to vector<8x128xf32>
    %856 = arith.addf %854, %855 : vector<8x128xf32>
    %857 = arith.subf %856, %853 : vector<8x128xf32>
    %cst_105 = arith.constant 5.000000e-01 : f32
    %858 = vector.broadcast %cst_105 : f32 to vector<8x128xf32>
    %859 = arith.mulf %858, %857 : vector<8x128xf32>
    %860 = arith.cmpf ogt, %853, %859 : vector<8x128xf32>
    %cst_106 = arith.constant 0.000000e+00 : f32
    %861 = vector.broadcast %cst_106 : f32 to vector<8x128xf32>
    %862 = arith.cmpf ogt, %853, %861 : vector<8x128xf32>
    %863 = arith.andi %860, %862 : vector<8x128xi1>
    %c64_i32 = arith.constant 64 : i32
    %864 = vector.broadcast %c64_i32 : i32 to vector<8x128xi32>
    %865 = arith.cmpi sgt, %17, %864 : vector<8x128xi32>
    %866 = arith.andi %863, %865 : vector<8x128xi1>
    %cst_107 = arith.constant 1.000000e+00 : f32
    %cst_108 = arith.constant 0.000000e+00 : f32
    %867 = vector.broadcast %cst_107 : f32 to vector<8x128xf32>
    %868 = vector.broadcast %cst_108 : f32 to vector<8x128xf32>
    %869 = arith.select %866, %867, %868 : vector<8x128xi1>, vector<8x128xf32>
    %870 = vector.extract_strided_slice %825 {offsets = [0, 64], sizes = [1, 8], strides = [1, 1]} : vector<1x128xf32> to vector<1x8xf32>
    %871 = vector.extract_strided_slice %869 {offsets = [0, 64], sizes = [8, 8], strides = [1, 1]} : vector<8x128xf32> to vector<8x8xf32>
    %872 = vector.extract_strided_slice %870 {offsets = [0, 0], sizes = [1, 1], strides = [1, 1]} : vector<1x8xf32> to vector<1x1xf32>
    %873 = vector.extract_strided_slice %871 {offsets = [0, 0], sizes = [1, 8], strides = [1, 1]} : vector<8x8xf32> to vector<1x8xf32>
    %874 = arith.mulf %873, %870 : vector<1x8xf32>
    %875 = vector.broadcast %872 : vector<1x1xf32> to vector<1x8xf32>
    %876 = arith.mulf %875, %874 : vector<1x8xf32>
    %877 = arith.subf %870, %876 : vector<1x8xf32>
    %878 = vector.extract_strided_slice %877 {offsets = [0, 1], sizes = [1, 1], strides = [1, 1]} : vector<1x8xf32> to vector<1x1xf32>
    %879 = vector.extract_strided_slice %871 {offsets = [1, 0], sizes = [1, 8], strides = [1, 1]} : vector<8x8xf32> to vector<1x8xf32>
    %880 = arith.mulf %879, %877 : vector<1x8xf32>
    %881 = vector.broadcast %878 : vector<1x1xf32> to vector<1x8xf32>
    %882 = arith.mulf %881, %880 : vector<1x8xf32>
    %883 = arith.subf %877, %882 : vector<1x8xf32>
    %884 = vector.extract_strided_slice %883 {offsets = [0, 2], sizes = [1, 1], strides = [1, 1]} : vector<1x8xf32> to vector<1x1xf32>
    %885 = vector.extract_strided_slice %871 {offsets = [2, 0], sizes = [1, 8], strides = [1, 1]} : vector<8x8xf32> to vector<1x8xf32>
    %886 = arith.mulf %885, %883 : vector<1x8xf32>
    %887 = vector.broadcast %884 : vector<1x1xf32> to vector<1x8xf32>
    %888 = arith.mulf %887, %886 : vector<1x8xf32>
    %889 = arith.subf %883, %888 : vector<1x8xf32>
    %890 = vector.extract_strided_slice %889 {offsets = [0, 3], sizes = [1, 1], strides = [1, 1]} : vector<1x8xf32> to vector<1x1xf32>
    %891 = vector.extract_strided_slice %871 {offsets = [3, 0], sizes = [1, 8], strides = [1, 1]} : vector<8x8xf32> to vector<1x8xf32>
    %892 = arith.mulf %891, %889 : vector<1x8xf32>
    %893 = vector.broadcast %890 : vector<1x1xf32> to vector<1x8xf32>
    %894 = arith.mulf %893, %892 : vector<1x8xf32>
    %895 = arith.subf %889, %894 : vector<1x8xf32>
    %896 = vector.extract_strided_slice %895 {offsets = [0, 4], sizes = [1, 1], strides = [1, 1]} : vector<1x8xf32> to vector<1x1xf32>
    %897 = vector.extract_strided_slice %871 {offsets = [4, 0], sizes = [1, 8], strides = [1, 1]} : vector<8x8xf32> to vector<1x8xf32>
    %898 = arith.mulf %897, %895 : vector<1x8xf32>
    %899 = vector.broadcast %896 : vector<1x1xf32> to vector<1x8xf32>
    %900 = arith.mulf %899, %898 : vector<1x8xf32>
    %901 = arith.subf %895, %900 : vector<1x8xf32>
    %902 = vector.extract_strided_slice %901 {offsets = [0, 5], sizes = [1, 1], strides = [1, 1]} : vector<1x8xf32> to vector<1x1xf32>
    %903 = vector.extract_strided_slice %871 {offsets = [5, 0], sizes = [1, 8], strides = [1, 1]} : vector<8x8xf32> to vector<1x8xf32>
    %904 = arith.mulf %903, %901 : vector<1x8xf32>
    %905 = vector.broadcast %902 : vector<1x1xf32> to vector<1x8xf32>
    %906 = arith.mulf %905, %904 : vector<1x8xf32>
    %907 = arith.subf %901, %906 : vector<1x8xf32>
    %908 = vector.extract_strided_slice %907 {offsets = [0, 6], sizes = [1, 1], strides = [1, 1]} : vector<1x8xf32> to vector<1x1xf32>
    %909 = vector.extract_strided_slice %871 {offsets = [6, 0], sizes = [1, 8], strides = [1, 1]} : vector<8x8xf32> to vector<1x8xf32>
    %910 = arith.mulf %909, %907 : vector<1x8xf32>
    %911 = vector.broadcast %908 : vector<1x1xf32> to vector<1x8xf32>
    %912 = arith.mulf %911, %910 : vector<1x8xf32>
    %913 = arith.subf %907, %912 : vector<1x8xf32>
    %914 = vector.extract_strided_slice %913 {offsets = [0, 7], sizes = [1, 1], strides = [1, 1]} : vector<1x8xf32> to vector<1x1xf32>
    %915 = vector.extract_strided_slice %871 {offsets = [7, 0], sizes = [1, 8], strides = [1, 1]} : vector<8x8xf32> to vector<1x8xf32>
    %916 = arith.mulf %915, %913 : vector<1x8xf32>
    %917 = vector.broadcast %914 : vector<1x1xf32> to vector<1x8xf32>
    %918 = arith.mulf %917, %916 : vector<1x8xf32>
    %919 = arith.subf %913, %918 : vector<1x8xf32>
    %cst_109 = arith.constant dense<0.000000e+00> : vector<1x128xf32>
    %920 = tpu.matmul %919, %869, %cst_109 {dimension_numbers = #tpu.dot_dimension_numbers<[1], [0], [0], [1], [0, 0, 1, 1], [], []>} : vector<1x8xf32>, vector<8x128xf32>, vector<1x128xf32> -> vector<1x128xf32>
    %cst_110 = arith.constant 0.000000e+00 : f32
    %921 = vector.broadcast %cst_110 : f32 to vector<1x128xf32>
    %922 = arith.cmpf ogt, %920, %921 : vector<1x128xf32>
    %cst_111 = arith.constant 0.000000e+00 : f32
    %cst_112 = arith.constant 1.000000e+00 : f32
    %923 = vector.broadcast %cst_111 : f32 to vector<1x128xf32>
    %924 = vector.broadcast %cst_112 : f32 to vector<1x128xf32>
    %925 = arith.select %922, %923, %924 : vector<1x128xi1>, vector<1x128xf32>
    %926 = arith.mulf %825, %925 : vector<1x128xf32>
    %c0_113 = arith.constant 0 : index
    %c72 = arith.constant 72 : index
    %c0_114 = arith.constant 0 : index
    %927 = vector.load %arg2[%c0_113, %c72, %c0_114] : memref<1x128x4xf32, #tpu.memory_space<vmem>>, vector<1x8x4xf32>
    %928 = vector.shape_cast %927 : vector<1x8x4xf32> to vector<8x4xf32>
    %929 = vector.extract_strided_slice %928 {offsets = [0, 0], sizes = [8, 1], strides = [1, 1]} : vector<8x4xf32> to vector<8x1xf32>
    %930 = vector.extract_strided_slice %928 {offsets = [0, 1], sizes = [8, 1], strides = [1, 1]} : vector<8x4xf32> to vector<8x1xf32>
    %931 = vector.extract_strided_slice %928 {offsets = [0, 2], sizes = [8, 1], strides = [1, 1]} : vector<8x4xf32> to vector<8x1xf32>
    %932 = vector.extract_strided_slice %928 {offsets = [0, 3], sizes = [8, 1], strides = [1, 1]} : vector<8x4xf32> to vector<8x1xf32>
    %933 = arith.subf %931, %929 : vector<8x1xf32>
    %934 = arith.subf %932, %930 : vector<8x1xf32>
    %935 = arith.mulf %933, %934 : vector<8x1xf32>
    %936 = vector.broadcast %929 : vector<8x1xf32> to vector<8x128xf32>
    %937 = vector.broadcast %2 : vector<1x128xf32> to vector<8x128xf32>
    %938 = arith.maximumf %936, %937 : vector<8x128xf32>
    %939 = vector.broadcast %930 : vector<8x1xf32> to vector<8x128xf32>
    %940 = vector.broadcast %3 : vector<1x128xf32> to vector<8x128xf32>
    %941 = arith.maximumf %939, %940 : vector<8x128xf32>
    %942 = vector.broadcast %931 : vector<8x1xf32> to vector<8x128xf32>
    %943 = vector.broadcast %4 : vector<1x128xf32> to vector<8x128xf32>
    %944 = arith.minimumf %942, %943 : vector<8x128xf32>
    %945 = vector.broadcast %932 : vector<8x1xf32> to vector<8x128xf32>
    %946 = vector.broadcast %5 : vector<1x128xf32> to vector<8x128xf32>
    %947 = arith.minimumf %945, %946 : vector<8x128xf32>
    %948 = arith.subf %944, %938 : vector<8x128xf32>
    %cst_115 = arith.constant 0.000000e+00 : f32
    %949 = vector.broadcast %cst_115 : f32 to vector<8x128xf32>
    %950 = arith.maximumf %948, %949 : vector<8x128xf32>
    %951 = arith.subf %947, %941 : vector<8x128xf32>
    %cst_116 = arith.constant 0.000000e+00 : f32
    %952 = vector.broadcast %cst_116 : f32 to vector<8x128xf32>
    %953 = arith.maximumf %951, %952 : vector<8x128xf32>
    %954 = arith.mulf %950, %953 : vector<8x128xf32>
    %955 = vector.broadcast %935 : vector<8x1xf32> to vector<8x128xf32>
    %956 = vector.broadcast %9 : vector<1x128xf32> to vector<8x128xf32>
    %957 = arith.addf %955, %956 : vector<8x128xf32>
    %958 = arith.subf %957, %954 : vector<8x128xf32>
    %cst_117 = arith.constant 5.000000e-01 : f32
    %959 = vector.broadcast %cst_117 : f32 to vector<8x128xf32>
    %960 = arith.mulf %959, %958 : vector<8x128xf32>
    %961 = arith.cmpf ogt, %954, %960 : vector<8x128xf32>
    %cst_118 = arith.constant 0.000000e+00 : f32
    %962 = vector.broadcast %cst_118 : f32 to vector<8x128xf32>
    %963 = arith.cmpf ogt, %954, %962 : vector<8x128xf32>
    %964 = arith.andi %961, %963 : vector<8x128xi1>
    %c72_i32 = arith.constant 72 : i32
    %965 = vector.broadcast %c72_i32 : i32 to vector<8x128xi32>
    %966 = arith.cmpi sgt, %17, %965 : vector<8x128xi32>
    %967 = arith.andi %964, %966 : vector<8x128xi1>
    %cst_119 = arith.constant 1.000000e+00 : f32
    %cst_120 = arith.constant 0.000000e+00 : f32
    %968 = vector.broadcast %cst_119 : f32 to vector<8x128xf32>
    %969 = vector.broadcast %cst_120 : f32 to vector<8x128xf32>
    %970 = arith.select %967, %968, %969 : vector<8x128xi1>, vector<8x128xf32>
    %971 = vector.extract_strided_slice %926 {offsets = [0, 72], sizes = [1, 8], strides = [1, 1]} : vector<1x128xf32> to vector<1x8xf32>
    %972 = vector.extract_strided_slice %970 {offsets = [0, 72], sizes = [8, 8], strides = [1, 1]} : vector<8x128xf32> to vector<8x8xf32>
    %973 = vector.extract_strided_slice %971 {offsets = [0, 0], sizes = [1, 1], strides = [1, 1]} : vector<1x8xf32> to vector<1x1xf32>
    %974 = vector.extract_strided_slice %972 {offsets = [0, 0], sizes = [1, 8], strides = [1, 1]} : vector<8x8xf32> to vector<1x8xf32>
    %975 = arith.mulf %974, %971 : vector<1x8xf32>
    %976 = vector.broadcast %973 : vector<1x1xf32> to vector<1x8xf32>
    %977 = arith.mulf %976, %975 : vector<1x8xf32>
    %978 = arith.subf %971, %977 : vector<1x8xf32>
    %979 = vector.extract_strided_slice %978 {offsets = [0, 1], sizes = [1, 1], strides = [1, 1]} : vector<1x8xf32> to vector<1x1xf32>
    %980 = vector.extract_strided_slice %972 {offsets = [1, 0], sizes = [1, 8], strides = [1, 1]} : vector<8x8xf32> to vector<1x8xf32>
    %981 = arith.mulf %980, %978 : vector<1x8xf32>
    %982 = vector.broadcast %979 : vector<1x1xf32> to vector<1x8xf32>
    %983 = arith.mulf %982, %981 : vector<1x8xf32>
    %984 = arith.subf %978, %983 : vector<1x8xf32>
    %985 = vector.extract_strided_slice %984 {offsets = [0, 2], sizes = [1, 1], strides = [1, 1]} : vector<1x8xf32> to vector<1x1xf32>
    %986 = vector.extract_strided_slice %972 {offsets = [2, 0], sizes = [1, 8], strides = [1, 1]} : vector<8x8xf32> to vector<1x8xf32>
    %987 = arith.mulf %986, %984 : vector<1x8xf32>
    %988 = vector.broadcast %985 : vector<1x1xf32> to vector<1x8xf32>
    %989 = arith.mulf %988, %987 : vector<1x8xf32>
    %990 = arith.subf %984, %989 : vector<1x8xf32>
    %991 = vector.extract_strided_slice %990 {offsets = [0, 3], sizes = [1, 1], strides = [1, 1]} : vector<1x8xf32> to vector<1x1xf32>
    %992 = vector.extract_strided_slice %972 {offsets = [3, 0], sizes = [1, 8], strides = [1, 1]} : vector<8x8xf32> to vector<1x8xf32>
    %993 = arith.mulf %992, %990 : vector<1x8xf32>
    %994 = vector.broadcast %991 : vector<1x1xf32> to vector<1x8xf32>
    %995 = arith.mulf %994, %993 : vector<1x8xf32>
    %996 = arith.subf %990, %995 : vector<1x8xf32>
    %997 = vector.extract_strided_slice %996 {offsets = [0, 4], sizes = [1, 1], strides = [1, 1]} : vector<1x8xf32> to vector<1x1xf32>
    %998 = vector.extract_strided_slice %972 {offsets = [4, 0], sizes = [1, 8], strides = [1, 1]} : vector<8x8xf32> to vector<1x8xf32>
    %999 = arith.mulf %998, %996 : vector<1x8xf32>
    %1000 = vector.broadcast %997 : vector<1x1xf32> to vector<1x8xf32>
    %1001 = arith.mulf %1000, %999 : vector<1x8xf32>
    %1002 = arith.subf %996, %1001 : vector<1x8xf32>
    %1003 = vector.extract_strided_slice %1002 {offsets = [0, 5], sizes = [1, 1], strides = [1, 1]} : vector<1x8xf32> to vector<1x1xf32>
    %1004 = vector.extract_strided_slice %972 {offsets = [5, 0], sizes = [1, 8], strides = [1, 1]} : vector<8x8xf32> to vector<1x8xf32>
    %1005 = arith.mulf %1004, %1002 : vector<1x8xf32>
    %1006 = vector.broadcast %1003 : vector<1x1xf32> to vector<1x8xf32>
    %1007 = arith.mulf %1006, %1005 : vector<1x8xf32>
    %1008 = arith.subf %1002, %1007 : vector<1x8xf32>
    %1009 = vector.extract_strided_slice %1008 {offsets = [0, 6], sizes = [1, 1], strides = [1, 1]} : vector<1x8xf32> to vector<1x1xf32>
    %1010 = vector.extract_strided_slice %972 {offsets = [6, 0], sizes = [1, 8], strides = [1, 1]} : vector<8x8xf32> to vector<1x8xf32>
    %1011 = arith.mulf %1010, %1008 : vector<1x8xf32>
    %1012 = vector.broadcast %1009 : vector<1x1xf32> to vector<1x8xf32>
    %1013 = arith.mulf %1012, %1011 : vector<1x8xf32>
    %1014 = arith.subf %1008, %1013 : vector<1x8xf32>
    %1015 = vector.extract_strided_slice %1014 {offsets = [0, 7], sizes = [1, 1], strides = [1, 1]} : vector<1x8xf32> to vector<1x1xf32>
    %1016 = vector.extract_strided_slice %972 {offsets = [7, 0], sizes = [1, 8], strides = [1, 1]} : vector<8x8xf32> to vector<1x8xf32>
    %1017 = arith.mulf %1016, %1014 : vector<1x8xf32>
    %1018 = vector.broadcast %1015 : vector<1x1xf32> to vector<1x8xf32>
    %1019 = arith.mulf %1018, %1017 : vector<1x8xf32>
    %1020 = arith.subf %1014, %1019 : vector<1x8xf32>
    %cst_121 = arith.constant dense<0.000000e+00> : vector<1x128xf32>
    %1021 = tpu.matmul %1020, %970, %cst_121 {dimension_numbers = #tpu.dot_dimension_numbers<[1], [0], [0], [1], [0, 0, 1, 1], [], []>} : vector<1x8xf32>, vector<8x128xf32>, vector<1x128xf32> -> vector<1x128xf32>
    %cst_122 = arith.constant 0.000000e+00 : f32
    %1022 = vector.broadcast %cst_122 : f32 to vector<1x128xf32>
    %1023 = arith.cmpf ogt, %1021, %1022 : vector<1x128xf32>
    %cst_123 = arith.constant 0.000000e+00 : f32
    %cst_124 = arith.constant 1.000000e+00 : f32
    %1024 = vector.broadcast %cst_123 : f32 to vector<1x128xf32>
    %1025 = vector.broadcast %cst_124 : f32 to vector<1x128xf32>
    %1026 = arith.select %1023, %1024, %1025 : vector<1x128xi1>, vector<1x128xf32>
    %1027 = arith.mulf %926, %1026 : vector<1x128xf32>
    %c0_125 = arith.constant 0 : index
    %c80 = arith.constant 80 : index
    %c0_126 = arith.constant 0 : index
    %1028 = vector.load %arg2[%c0_125, %c80, %c0_126] : memref<1x128x4xf32, #tpu.memory_space<vmem>>, vector<1x8x4xf32>
    %1029 = vector.shape_cast %1028 : vector<1x8x4xf32> to vector<8x4xf32>
    %1030 = vector.extract_strided_slice %1029 {offsets = [0, 0], sizes = [8, 1], strides = [1, 1]} : vector<8x4xf32> to vector<8x1xf32>
    %1031 = vector.extract_strided_slice %1029 {offsets = [0, 1], sizes = [8, 1], strides = [1, 1]} : vector<8x4xf32> to vector<8x1xf32>
    %1032 = vector.extract_strided_slice %1029 {offsets = [0, 2], sizes = [8, 1], strides = [1, 1]} : vector<8x4xf32> to vector<8x1xf32>
    %1033 = vector.extract_strided_slice %1029 {offsets = [0, 3], sizes = [8, 1], strides = [1, 1]} : vector<8x4xf32> to vector<8x1xf32>
    %1034 = arith.subf %1032, %1030 : vector<8x1xf32>
    %1035 = arith.subf %1033, %1031 : vector<8x1xf32>
    %1036 = arith.mulf %1034, %1035 : vector<8x1xf32>
    %1037 = vector.broadcast %1030 : vector<8x1xf32> to vector<8x128xf32>
    %1038 = vector.broadcast %2 : vector<1x128xf32> to vector<8x128xf32>
    %1039 = arith.maximumf %1037, %1038 : vector<8x128xf32>
    %1040 = vector.broadcast %1031 : vector<8x1xf32> to vector<8x128xf32>
    %1041 = vector.broadcast %3 : vector<1x128xf32> to vector<8x128xf32>
    %1042 = arith.maximumf %1040, %1041 : vector<8x128xf32>
    %1043 = vector.broadcast %1032 : vector<8x1xf32> to vector<8x128xf32>
    %1044 = vector.broadcast %4 : vector<1x128xf32> to vector<8x128xf32>
    %1045 = arith.minimumf %1043, %1044 : vector<8x128xf32>
    %1046 = vector.broadcast %1033 : vector<8x1xf32> to vector<8x128xf32>
    %1047 = vector.broadcast %5 : vector<1x128xf32> to vector<8x128xf32>
    %1048 = arith.minimumf %1046, %1047 : vector<8x128xf32>
    %1049 = arith.subf %1045, %1039 : vector<8x128xf32>
    %cst_127 = arith.constant 0.000000e+00 : f32
    %1050 = vector.broadcast %cst_127 : f32 to vector<8x128xf32>
    %1051 = arith.maximumf %1049, %1050 : vector<8x128xf32>
    %1052 = arith.subf %1048, %1042 : vector<8x128xf32>
    %cst_128 = arith.constant 0.000000e+00 : f32
    %1053 = vector.broadcast %cst_128 : f32 to vector<8x128xf32>
    %1054 = arith.maximumf %1052, %1053 : vector<8x128xf32>
    %1055 = arith.mulf %1051, %1054 : vector<8x128xf32>
    %1056 = vector.broadcast %1036 : vector<8x1xf32> to vector<8x128xf32>
    %1057 = vector.broadcast %9 : vector<1x128xf32> to vector<8x128xf32>
    %1058 = arith.addf %1056, %1057 : vector<8x128xf32>
    %1059 = arith.subf %1058, %1055 : vector<8x128xf32>
    %cst_129 = arith.constant 5.000000e-01 : f32
    %1060 = vector.broadcast %cst_129 : f32 to vector<8x128xf32>
    %1061 = arith.mulf %1060, %1059 : vector<8x128xf32>
    %1062 = arith.cmpf ogt, %1055, %1061 : vector<8x128xf32>
    %cst_130 = arith.constant 0.000000e+00 : f32
    %1063 = vector.broadcast %cst_130 : f32 to vector<8x128xf32>
    %1064 = arith.cmpf ogt, %1055, %1063 : vector<8x128xf32>
    %1065 = arith.andi %1062, %1064 : vector<8x128xi1>
    %c80_i32 = arith.constant 80 : i32
    %1066 = vector.broadcast %c80_i32 : i32 to vector<8x128xi32>
    %1067 = arith.cmpi sgt, %17, %1066 : vector<8x128xi32>
    %1068 = arith.andi %1065, %1067 : vector<8x128xi1>
    %cst_131 = arith.constant 1.000000e+00 : f32
    %cst_132 = arith.constant 0.000000e+00 : f32
    %1069 = vector.broadcast %cst_131 : f32 to vector<8x128xf32>
    %1070 = vector.broadcast %cst_132 : f32 to vector<8x128xf32>
    %1071 = arith.select %1068, %1069, %1070 : vector<8x128xi1>, vector<8x128xf32>
    %1072 = vector.extract_strided_slice %1027 {offsets = [0, 80], sizes = [1, 8], strides = [1, 1]} : vector<1x128xf32> to vector<1x8xf32>
    %1073 = vector.extract_strided_slice %1071 {offsets = [0, 80], sizes = [8, 8], strides = [1, 1]} : vector<8x128xf32> to vector<8x8xf32>
    %1074 = vector.extract_strided_slice %1072 {offsets = [0, 0], sizes = [1, 1], strides = [1, 1]} : vector<1x8xf32> to vector<1x1xf32>
    %1075 = vector.extract_strided_slice %1073 {offsets = [0, 0], sizes = [1, 8], strides = [1, 1]} : vector<8x8xf32> to vector<1x8xf32>
    %1076 = arith.mulf %1075, %1072 : vector<1x8xf32>
    %1077 = vector.broadcast %1074 : vector<1x1xf32> to vector<1x8xf32>
    %1078 = arith.mulf %1077, %1076 : vector<1x8xf32>
    %1079 = arith.subf %1072, %1078 : vector<1x8xf32>
    %1080 = vector.extract_strided_slice %1079 {offsets = [0, 1], sizes = [1, 1], strides = [1, 1]} : vector<1x8xf32> to vector<1x1xf32>
    %1081 = vector.extract_strided_slice %1073 {offsets = [1, 0], sizes = [1, 8], strides = [1, 1]} : vector<8x8xf32> to vector<1x8xf32>
    %1082 = arith.mulf %1081, %1079 : vector<1x8xf32>
    %1083 = vector.broadcast %1080 : vector<1x1xf32> to vector<1x8xf32>
    %1084 = arith.mulf %1083, %1082 : vector<1x8xf32>
    %1085 = arith.subf %1079, %1084 : vector<1x8xf32>
    %1086 = vector.extract_strided_slice %1085 {offsets = [0, 2], sizes = [1, 1], strides = [1, 1]} : vector<1x8xf32> to vector<1x1xf32>
    %1087 = vector.extract_strided_slice %1073 {offsets = [2, 0], sizes = [1, 8], strides = [1, 1]} : vector<8x8xf32> to vector<1x8xf32>
    %1088 = arith.mulf %1087, %1085 : vector<1x8xf32>
    %1089 = vector.broadcast %1086 : vector<1x1xf32> to vector<1x8xf32>
    %1090 = arith.mulf %1089, %1088 : vector<1x8xf32>
    %1091 = arith.subf %1085, %1090 : vector<1x8xf32>
    %1092 = vector.extract_strided_slice %1091 {offsets = [0, 3], sizes = [1, 1], strides = [1, 1]} : vector<1x8xf32> to vector<1x1xf32>
    %1093 = vector.extract_strided_slice %1073 {offsets = [3, 0], sizes = [1, 8], strides = [1, 1]} : vector<8x8xf32> to vector<1x8xf32>
    %1094 = arith.mulf %1093, %1091 : vector<1x8xf32>
    %1095 = vector.broadcast %1092 : vector<1x1xf32> to vector<1x8xf32>
    %1096 = arith.mulf %1095, %1094 : vector<1x8xf32>
    %1097 = arith.subf %1091, %1096 : vector<1x8xf32>
    %1098 = vector.extract_strided_slice %1097 {offsets = [0, 4], sizes = [1, 1], strides = [1, 1]} : vector<1x8xf32> to vector<1x1xf32>
    %1099 = vector.extract_strided_slice %1073 {offsets = [4, 0], sizes = [1, 8], strides = [1, 1]} : vector<8x8xf32> to vector<1x8xf32>
    %1100 = arith.mulf %1099, %1097 : vector<1x8xf32>
    %1101 = vector.broadcast %1098 : vector<1x1xf32> to vector<1x8xf32>
    %1102 = arith.mulf %1101, %1100 : vector<1x8xf32>
    %1103 = arith.subf %1097, %1102 : vector<1x8xf32>
    %1104 = vector.extract_strided_slice %1103 {offsets = [0, 5], sizes = [1, 1], strides = [1, 1]} : vector<1x8xf32> to vector<1x1xf32>
    %1105 = vector.extract_strided_slice %1073 {offsets = [5, 0], sizes = [1, 8], strides = [1, 1]} : vector<8x8xf32> to vector<1x8xf32>
    %1106 = arith.mulf %1105, %1103 : vector<1x8xf32>
    %1107 = vector.broadcast %1104 : vector<1x1xf32> to vector<1x8xf32>
    %1108 = arith.mulf %1107, %1106 : vector<1x8xf32>
    %1109 = arith.subf %1103, %1108 : vector<1x8xf32>
    %1110 = vector.extract_strided_slice %1109 {offsets = [0, 6], sizes = [1, 1], strides = [1, 1]} : vector<1x8xf32> to vector<1x1xf32>
    %1111 = vector.extract_strided_slice %1073 {offsets = [6, 0], sizes = [1, 8], strides = [1, 1]} : vector<8x8xf32> to vector<1x8xf32>
    %1112 = arith.mulf %1111, %1109 : vector<1x8xf32>
    %1113 = vector.broadcast %1110 : vector<1x1xf32> to vector<1x8xf32>
    %1114 = arith.mulf %1113, %1112 : vector<1x8xf32>
    %1115 = arith.subf %1109, %1114 : vector<1x8xf32>
    %1116 = vector.extract_strided_slice %1115 {offsets = [0, 7], sizes = [1, 1], strides = [1, 1]} : vector<1x8xf32> to vector<1x1xf32>
    %1117 = vector.extract_strided_slice %1073 {offsets = [7, 0], sizes = [1, 8], strides = [1, 1]} : vector<8x8xf32> to vector<1x8xf32>
    %1118 = arith.mulf %1117, %1115 : vector<1x8xf32>
    %1119 = vector.broadcast %1116 : vector<1x1xf32> to vector<1x8xf32>
    %1120 = arith.mulf %1119, %1118 : vector<1x8xf32>
    %1121 = arith.subf %1115, %1120 : vector<1x8xf32>
    %cst_133 = arith.constant dense<0.000000e+00> : vector<1x128xf32>
    %1122 = tpu.matmul %1121, %1071, %cst_133 {dimension_numbers = #tpu.dot_dimension_numbers<[1], [0], [0], [1], [0, 0, 1, 1], [], []>} : vector<1x8xf32>, vector<8x128xf32>, vector<1x128xf32> -> vector<1x128xf32>
    %cst_134 = arith.constant 0.000000e+00 : f32
    %1123 = vector.broadcast %cst_134 : f32 to vector<1x128xf32>
    %1124 = arith.cmpf ogt, %1122, %1123 : vector<1x128xf32>
    %cst_135 = arith.constant 0.000000e+00 : f32
    %cst_136 = arith.constant 1.000000e+00 : f32
    %1125 = vector.broadcast %cst_135 : f32 to vector<1x128xf32>
    %1126 = vector.broadcast %cst_136 : f32 to vector<1x128xf32>
    %1127 = arith.select %1124, %1125, %1126 : vector<1x128xi1>, vector<1x128xf32>
    %1128 = arith.mulf %1027, %1127 : vector<1x128xf32>
    %c0_137 = arith.constant 0 : index
    %c88 = arith.constant 88 : index
    %c0_138 = arith.constant 0 : index
    %1129 = vector.load %arg2[%c0_137, %c88, %c0_138] : memref<1x128x4xf32, #tpu.memory_space<vmem>>, vector<1x8x4xf32>
    %1130 = vector.shape_cast %1129 : vector<1x8x4xf32> to vector<8x4xf32>
    %1131 = vector.extract_strided_slice %1130 {offsets = [0, 0], sizes = [8, 1], strides = [1, 1]} : vector<8x4xf32> to vector<8x1xf32>
    %1132 = vector.extract_strided_slice %1130 {offsets = [0, 1], sizes = [8, 1], strides = [1, 1]} : vector<8x4xf32> to vector<8x1xf32>
    %1133 = vector.extract_strided_slice %1130 {offsets = [0, 2], sizes = [8, 1], strides = [1, 1]} : vector<8x4xf32> to vector<8x1xf32>
    %1134 = vector.extract_strided_slice %1130 {offsets = [0, 3], sizes = [8, 1], strides = [1, 1]} : vector<8x4xf32> to vector<8x1xf32>
    %1135 = arith.subf %1133, %1131 : vector<8x1xf32>
    %1136 = arith.subf %1134, %1132 : vector<8x1xf32>
    %1137 = arith.mulf %1135, %1136 : vector<8x1xf32>
    %1138 = vector.broadcast %1131 : vector<8x1xf32> to vector<8x128xf32>
    %1139 = vector.broadcast %2 : vector<1x128xf32> to vector<8x128xf32>
    %1140 = arith.maximumf %1138, %1139 : vector<8x128xf32>
    %1141 = vector.broadcast %1132 : vector<8x1xf32> to vector<8x128xf32>
    %1142 = vector.broadcast %3 : vector<1x128xf32> to vector<8x128xf32>
    %1143 = arith.maximumf %1141, %1142 : vector<8x128xf32>
    %1144 = vector.broadcast %1133 : vector<8x1xf32> to vector<8x128xf32>
    %1145 = vector.broadcast %4 : vector<1x128xf32> to vector<8x128xf32>
    %1146 = arith.minimumf %1144, %1145 : vector<8x128xf32>
    %1147 = vector.broadcast %1134 : vector<8x1xf32> to vector<8x128xf32>
    %1148 = vector.broadcast %5 : vector<1x128xf32> to vector<8x128xf32>
    %1149 = arith.minimumf %1147, %1148 : vector<8x128xf32>
    %1150 = arith.subf %1146, %1140 : vector<8x128xf32>
    %cst_139 = arith.constant 0.000000e+00 : f32
    %1151 = vector.broadcast %cst_139 : f32 to vector<8x128xf32>
    %1152 = arith.maximumf %1150, %1151 : vector<8x128xf32>
    %1153 = arith.subf %1149, %1143 : vector<8x128xf32>
    %cst_140 = arith.constant 0.000000e+00 : f32
    %1154 = vector.broadcast %cst_140 : f32 to vector<8x128xf32>
    %1155 = arith.maximumf %1153, %1154 : vector<8x128xf32>
    %1156 = arith.mulf %1152, %1155 : vector<8x128xf32>
    %1157 = vector.broadcast %1137 : vector<8x1xf32> to vector<8x128xf32>
    %1158 = vector.broadcast %9 : vector<1x128xf32> to vector<8x128xf32>
    %1159 = arith.addf %1157, %1158 : vector<8x128xf32>
    %1160 = arith.subf %1159, %1156 : vector<8x128xf32>
    %cst_141 = arith.constant 5.000000e-01 : f32
    %1161 = vector.broadcast %cst_141 : f32 to vector<8x128xf32>
    %1162 = arith.mulf %1161, %1160 : vector<8x128xf32>
    %1163 = arith.cmpf ogt, %1156, %1162 : vector<8x128xf32>
    %cst_142 = arith.constant 0.000000e+00 : f32
    %1164 = vector.broadcast %cst_142 : f32 to vector<8x128xf32>
    %1165 = arith.cmpf ogt, %1156, %1164 : vector<8x128xf32>
    %1166 = arith.andi %1163, %1165 : vector<8x128xi1>
    %c88_i32 = arith.constant 88 : i32
    %1167 = vector.broadcast %c88_i32 : i32 to vector<8x128xi32>
    %1168 = arith.cmpi sgt, %17, %1167 : vector<8x128xi32>
    %1169 = arith.andi %1166, %1168 : vector<8x128xi1>
    %cst_143 = arith.constant 1.000000e+00 : f32
    %cst_144 = arith.constant 0.000000e+00 : f32
    %1170 = vector.broadcast %cst_143 : f32 to vector<8x128xf32>
    %1171 = vector.broadcast %cst_144 : f32 to vector<8x128xf32>
    %1172 = arith.select %1169, %1170, %1171 : vector<8x128xi1>, vector<8x128xf32>
    %1173 = vector.extract_strided_slice %1128 {offsets = [0, 88], sizes = [1, 8], strides = [1, 1]} : vector<1x128xf32> to vector<1x8xf32>
    %1174 = vector.extract_strided_slice %1172 {offsets = [0, 88], sizes = [8, 8], strides = [1, 1]} : vector<8x128xf32> to vector<8x8xf32>
    %1175 = vector.extract_strided_slice %1173 {offsets = [0, 0], sizes = [1, 1], strides = [1, 1]} : vector<1x8xf32> to vector<1x1xf32>
    %1176 = vector.extract_strided_slice %1174 {offsets = [0, 0], sizes = [1, 8], strides = [1, 1]} : vector<8x8xf32> to vector<1x8xf32>
    %1177 = arith.mulf %1176, %1173 : vector<1x8xf32>
    %1178 = vector.broadcast %1175 : vector<1x1xf32> to vector<1x8xf32>
    %1179 = arith.mulf %1178, %1177 : vector<1x8xf32>
    %1180 = arith.subf %1173, %1179 : vector<1x8xf32>
    %1181 = vector.extract_strided_slice %1180 {offsets = [0, 1], sizes = [1, 1], strides = [1, 1]} : vector<1x8xf32> to vector<1x1xf32>
    %1182 = vector.extract_strided_slice %1174 {offsets = [1, 0], sizes = [1, 8], strides = [1, 1]} : vector<8x8xf32> to vector<1x8xf32>
    %1183 = arith.mulf %1182, %1180 : vector<1x8xf32>
    %1184 = vector.broadcast %1181 : vector<1x1xf32> to vector<1x8xf32>
    %1185 = arith.mulf %1184, %1183 : vector<1x8xf32>
    %1186 = arith.subf %1180, %1185 : vector<1x8xf32>
    %1187 = vector.extract_strided_slice %1186 {offsets = [0, 2], sizes = [1, 1], strides = [1, 1]} : vector<1x8xf32> to vector<1x1xf32>
    %1188 = vector.extract_strided_slice %1174 {offsets = [2, 0], sizes = [1, 8], strides = [1, 1]} : vector<8x8xf32> to vector<1x8xf32>
    %1189 = arith.mulf %1188, %1186 : vector<1x8xf32>
    %1190 = vector.broadcast %1187 : vector<1x1xf32> to vector<1x8xf32>
    %1191 = arith.mulf %1190, %1189 : vector<1x8xf32>
    %1192 = arith.subf %1186, %1191 : vector<1x8xf32>
    %1193 = vector.extract_strided_slice %1192 {offsets = [0, 3], sizes = [1, 1], strides = [1, 1]} : vector<1x8xf32> to vector<1x1xf32>
    %1194 = vector.extract_strided_slice %1174 {offsets = [3, 0], sizes = [1, 8], strides = [1, 1]} : vector<8x8xf32> to vector<1x8xf32>
    %1195 = arith.mulf %1194, %1192 : vector<1x8xf32>
    %1196 = vector.broadcast %1193 : vector<1x1xf32> to vector<1x8xf32>
    %1197 = arith.mulf %1196, %1195 : vector<1x8xf32>
    %1198 = arith.subf %1192, %1197 : vector<1x8xf32>
    %1199 = vector.extract_strided_slice %1198 {offsets = [0, 4], sizes = [1, 1], strides = [1, 1]} : vector<1x8xf32> to vector<1x1xf32>
    %1200 = vector.extract_strided_slice %1174 {offsets = [4, 0], sizes = [1, 8], strides = [1, 1]} : vector<8x8xf32> to vector<1x8xf32>
    %1201 = arith.mulf %1200, %1198 : vector<1x8xf32>
    %1202 = vector.broadcast %1199 : vector<1x1xf32> to vector<1x8xf32>
    %1203 = arith.mulf %1202, %1201 : vector<1x8xf32>
    %1204 = arith.subf %1198, %1203 : vector<1x8xf32>
    %1205 = vector.extract_strided_slice %1204 {offsets = [0, 5], sizes = [1, 1], strides = [1, 1]} : vector<1x8xf32> to vector<1x1xf32>
    %1206 = vector.extract_strided_slice %1174 {offsets = [5, 0], sizes = [1, 8], strides = [1, 1]} : vector<8x8xf32> to vector<1x8xf32>
    %1207 = arith.mulf %1206, %1204 : vector<1x8xf32>
    %1208 = vector.broadcast %1205 : vector<1x1xf32> to vector<1x8xf32>
    %1209 = arith.mulf %1208, %1207 : vector<1x8xf32>
    %1210 = arith.subf %1204, %1209 : vector<1x8xf32>
    %1211 = vector.extract_strided_slice %1210 {offsets = [0, 6], sizes = [1, 1], strides = [1, 1]} : vector<1x8xf32> to vector<1x1xf32>
    %1212 = vector.extract_strided_slice %1174 {offsets = [6, 0], sizes = [1, 8], strides = [1, 1]} : vector<8x8xf32> to vector<1x8xf32>
    %1213 = arith.mulf %1212, %1210 : vector<1x8xf32>
    %1214 = vector.broadcast %1211 : vector<1x1xf32> to vector<1x8xf32>
    %1215 = arith.mulf %1214, %1213 : vector<1x8xf32>
    %1216 = arith.subf %1210, %1215 : vector<1x8xf32>
    %1217 = vector.extract_strided_slice %1216 {offsets = [0, 7], sizes = [1, 1], strides = [1, 1]} : vector<1x8xf32> to vector<1x1xf32>
    %1218 = vector.extract_strided_slice %1174 {offsets = [7, 0], sizes = [1, 8], strides = [1, 1]} : vector<8x8xf32> to vector<1x8xf32>
    %1219 = arith.mulf %1218, %1216 : vector<1x8xf32>
    %1220 = vector.broadcast %1217 : vector<1x1xf32> to vector<1x8xf32>
    %1221 = arith.mulf %1220, %1219 : vector<1x8xf32>
    %1222 = arith.subf %1216, %1221 : vector<1x8xf32>
    %cst_145 = arith.constant dense<0.000000e+00> : vector<1x128xf32>
    %1223 = tpu.matmul %1222, %1172, %cst_145 {dimension_numbers = #tpu.dot_dimension_numbers<[1], [0], [0], [1], [0, 0, 1, 1], [], []>} : vector<1x8xf32>, vector<8x128xf32>, vector<1x128xf32> -> vector<1x128xf32>
    %cst_146 = arith.constant 0.000000e+00 : f32
    %1224 = vector.broadcast %cst_146 : f32 to vector<1x128xf32>
    %1225 = arith.cmpf ogt, %1223, %1224 : vector<1x128xf32>
    %cst_147 = arith.constant 0.000000e+00 : f32
    %cst_148 = arith.constant 1.000000e+00 : f32
    %1226 = vector.broadcast %cst_147 : f32 to vector<1x128xf32>
    %1227 = vector.broadcast %cst_148 : f32 to vector<1x128xf32>
    %1228 = arith.select %1225, %1226, %1227 : vector<1x128xi1>, vector<1x128xf32>
    %1229 = arith.mulf %1128, %1228 : vector<1x128xf32>
    %c0_149 = arith.constant 0 : index
    %c96 = arith.constant 96 : index
    %c0_150 = arith.constant 0 : index
    %1230 = vector.load %arg2[%c0_149, %c96, %c0_150] : memref<1x128x4xf32, #tpu.memory_space<vmem>>, vector<1x8x4xf32>
    %1231 = vector.shape_cast %1230 : vector<1x8x4xf32> to vector<8x4xf32>
    %1232 = vector.extract_strided_slice %1231 {offsets = [0, 0], sizes = [8, 1], strides = [1, 1]} : vector<8x4xf32> to vector<8x1xf32>
    %1233 = vector.extract_strided_slice %1231 {offsets = [0, 1], sizes = [8, 1], strides = [1, 1]} : vector<8x4xf32> to vector<8x1xf32>
    %1234 = vector.extract_strided_slice %1231 {offsets = [0, 2], sizes = [8, 1], strides = [1, 1]} : vector<8x4xf32> to vector<8x1xf32>
    %1235 = vector.extract_strided_slice %1231 {offsets = [0, 3], sizes = [8, 1], strides = [1, 1]} : vector<8x4xf32> to vector<8x1xf32>
    %1236 = arith.subf %1234, %1232 : vector<8x1xf32>
    %1237 = arith.subf %1235, %1233 : vector<8x1xf32>
    %1238 = arith.mulf %1236, %1237 : vector<8x1xf32>
    %1239 = vector.broadcast %1232 : vector<8x1xf32> to vector<8x128xf32>
    %1240 = vector.broadcast %2 : vector<1x128xf32> to vector<8x128xf32>
    %1241 = arith.maximumf %1239, %1240 : vector<8x128xf32>
    %1242 = vector.broadcast %1233 : vector<8x1xf32> to vector<8x128xf32>
    %1243 = vector.broadcast %3 : vector<1x128xf32> to vector<8x128xf32>
    %1244 = arith.maximumf %1242, %1243 : vector<8x128xf32>
    %1245 = vector.broadcast %1234 : vector<8x1xf32> to vector<8x128xf32>
    %1246 = vector.broadcast %4 : vector<1x128xf32> to vector<8x128xf32>
    %1247 = arith.minimumf %1245, %1246 : vector<8x128xf32>
    %1248 = vector.broadcast %1235 : vector<8x1xf32> to vector<8x128xf32>
    %1249 = vector.broadcast %5 : vector<1x128xf32> to vector<8x128xf32>
    %1250 = arith.minimumf %1248, %1249 : vector<8x128xf32>
    %1251 = arith.subf %1247, %1241 : vector<8x128xf32>
    %cst_151 = arith.constant 0.000000e+00 : f32
    %1252 = vector.broadcast %cst_151 : f32 to vector<8x128xf32>
    %1253 = arith.maximumf %1251, %1252 : vector<8x128xf32>
    %1254 = arith.subf %1250, %1244 : vector<8x128xf32>
    %cst_152 = arith.constant 0.000000e+00 : f32
    %1255 = vector.broadcast %cst_152 : f32 to vector<8x128xf32>
    %1256 = arith.maximumf %1254, %1255 : vector<8x128xf32>
    %1257 = arith.mulf %1253, %1256 : vector<8x128xf32>
    %1258 = vector.broadcast %1238 : vector<8x1xf32> to vector<8x128xf32>
    %1259 = vector.broadcast %9 : vector<1x128xf32> to vector<8x128xf32>
    %1260 = arith.addf %1258, %1259 : vector<8x128xf32>
    %1261 = arith.subf %1260, %1257 : vector<8x128xf32>
    %cst_153 = arith.constant 5.000000e-01 : f32
    %1262 = vector.broadcast %cst_153 : f32 to vector<8x128xf32>
    %1263 = arith.mulf %1262, %1261 : vector<8x128xf32>
    %1264 = arith.cmpf ogt, %1257, %1263 : vector<8x128xf32>
    %cst_154 = arith.constant 0.000000e+00 : f32
    %1265 = vector.broadcast %cst_154 : f32 to vector<8x128xf32>
    %1266 = arith.cmpf ogt, %1257, %1265 : vector<8x128xf32>
    %1267 = arith.andi %1264, %1266 : vector<8x128xi1>
    %c96_i32 = arith.constant 96 : i32
    %1268 = vector.broadcast %c96_i32 : i32 to vector<8x128xi32>
    %1269 = arith.cmpi sgt, %17, %1268 : vector<8x128xi32>
    %1270 = arith.andi %1267, %1269 : vector<8x128xi1>
    %cst_155 = arith.constant 1.000000e+00 : f32
    %cst_156 = arith.constant 0.000000e+00 : f32
    %1271 = vector.broadcast %cst_155 : f32 to vector<8x128xf32>
    %1272 = vector.broadcast %cst_156 : f32 to vector<8x128xf32>
    %1273 = arith.select %1270, %1271, %1272 : vector<8x128xi1>, vector<8x128xf32>
    %1274 = vector.extract_strided_slice %1229 {offsets = [0, 96], sizes = [1, 8], strides = [1, 1]} : vector<1x128xf32> to vector<1x8xf32>
    %1275 = vector.extract_strided_slice %1273 {offsets = [0, 96], sizes = [8, 8], strides = [1, 1]} : vector<8x128xf32> to vector<8x8xf32>
    %1276 = vector.extract_strided_slice %1274 {offsets = [0, 0], sizes = [1, 1], strides = [1, 1]} : vector<1x8xf32> to vector<1x1xf32>
    %1277 = vector.extract_strided_slice %1275 {offsets = [0, 0], sizes = [1, 8], strides = [1, 1]} : vector<8x8xf32> to vector<1x8xf32>
    %1278 = arith.mulf %1277, %1274 : vector<1x8xf32>
    %1279 = vector.broadcast %1276 : vector<1x1xf32> to vector<1x8xf32>
    %1280 = arith.mulf %1279, %1278 : vector<1x8xf32>
    %1281 = arith.subf %1274, %1280 : vector<1x8xf32>
    %1282 = vector.extract_strided_slice %1281 {offsets = [0, 1], sizes = [1, 1], strides = [1, 1]} : vector<1x8xf32> to vector<1x1xf32>
    %1283 = vector.extract_strided_slice %1275 {offsets = [1, 0], sizes = [1, 8], strides = [1, 1]} : vector<8x8xf32> to vector<1x8xf32>
    %1284 = arith.mulf %1283, %1281 : vector<1x8xf32>
    %1285 = vector.broadcast %1282 : vector<1x1xf32> to vector<1x8xf32>
    %1286 = arith.mulf %1285, %1284 : vector<1x8xf32>
    %1287 = arith.subf %1281, %1286 : vector<1x8xf32>
    %1288 = vector.extract_strided_slice %1287 {offsets = [0, 2], sizes = [1, 1], strides = [1, 1]} : vector<1x8xf32> to vector<1x1xf32>
    %1289 = vector.extract_strided_slice %1275 {offsets = [2, 0], sizes = [1, 8], strides = [1, 1]} : vector<8x8xf32> to vector<1x8xf32>
    %1290 = arith.mulf %1289, %1287 : vector<1x8xf32>
    %1291 = vector.broadcast %1288 : vector<1x1xf32> to vector<1x8xf32>
    %1292 = arith.mulf %1291, %1290 : vector<1x8xf32>
    %1293 = arith.subf %1287, %1292 : vector<1x8xf32>
    %1294 = vector.extract_strided_slice %1293 {offsets = [0, 3], sizes = [1, 1], strides = [1, 1]} : vector<1x8xf32> to vector<1x1xf32>
    %1295 = vector.extract_strided_slice %1275 {offsets = [3, 0], sizes = [1, 8], strides = [1, 1]} : vector<8x8xf32> to vector<1x8xf32>
    %1296 = arith.mulf %1295, %1293 : vector<1x8xf32>
    %1297 = vector.broadcast %1294 : vector<1x1xf32> to vector<1x8xf32>
    %1298 = arith.mulf %1297, %1296 : vector<1x8xf32>
    %1299 = arith.subf %1293, %1298 : vector<1x8xf32>
    %1300 = vector.extract_strided_slice %1299 {offsets = [0, 4], sizes = [1, 1], strides = [1, 1]} : vector<1x8xf32> to vector<1x1xf32>
    %1301 = vector.extract_strided_slice %1275 {offsets = [4, 0], sizes = [1, 8], strides = [1, 1]} : vector<8x8xf32> to vector<1x8xf32>
    %1302 = arith.mulf %1301, %1299 : vector<1x8xf32>
    %1303 = vector.broadcast %1300 : vector<1x1xf32> to vector<1x8xf32>
    %1304 = arith.mulf %1303, %1302 : vector<1x8xf32>
    %1305 = arith.subf %1299, %1304 : vector<1x8xf32>
    %1306 = vector.extract_strided_slice %1305 {offsets = [0, 5], sizes = [1, 1], strides = [1, 1]} : vector<1x8xf32> to vector<1x1xf32>
    %1307 = vector.extract_strided_slice %1275 {offsets = [5, 0], sizes = [1, 8], strides = [1, 1]} : vector<8x8xf32> to vector<1x8xf32>
    %1308 = arith.mulf %1307, %1305 : vector<1x8xf32>
    %1309 = vector.broadcast %1306 : vector<1x1xf32> to vector<1x8xf32>
    %1310 = arith.mulf %1309, %1308 : vector<1x8xf32>
    %1311 = arith.subf %1305, %1310 : vector<1x8xf32>
    %1312 = vector.extract_strided_slice %1311 {offsets = [0, 6], sizes = [1, 1], strides = [1, 1]} : vector<1x8xf32> to vector<1x1xf32>
    %1313 = vector.extract_strided_slice %1275 {offsets = [6, 0], sizes = [1, 8], strides = [1, 1]} : vector<8x8xf32> to vector<1x8xf32>
    %1314 = arith.mulf %1313, %1311 : vector<1x8xf32>
    %1315 = vector.broadcast %1312 : vector<1x1xf32> to vector<1x8xf32>
    %1316 = arith.mulf %1315, %1314 : vector<1x8xf32>
    %1317 = arith.subf %1311, %1316 : vector<1x8xf32>
    %1318 = vector.extract_strided_slice %1317 {offsets = [0, 7], sizes = [1, 1], strides = [1, 1]} : vector<1x8xf32> to vector<1x1xf32>
    %1319 = vector.extract_strided_slice %1275 {offsets = [7, 0], sizes = [1, 8], strides = [1, 1]} : vector<8x8xf32> to vector<1x8xf32>
    %1320 = arith.mulf %1319, %1317 : vector<1x8xf32>
    %1321 = vector.broadcast %1318 : vector<1x1xf32> to vector<1x8xf32>
    %1322 = arith.mulf %1321, %1320 : vector<1x8xf32>
    %1323 = arith.subf %1317, %1322 : vector<1x8xf32>
    %cst_157 = arith.constant dense<0.000000e+00> : vector<1x128xf32>
    %1324 = tpu.matmul %1323, %1273, %cst_157 {dimension_numbers = #tpu.dot_dimension_numbers<[1], [0], [0], [1], [0, 0, 1, 1], [], []>} : vector<1x8xf32>, vector<8x128xf32>, vector<1x128xf32> -> vector<1x128xf32>
    %cst_158 = arith.constant 0.000000e+00 : f32
    %1325 = vector.broadcast %cst_158 : f32 to vector<1x128xf32>
    %1326 = arith.cmpf ogt, %1324, %1325 : vector<1x128xf32>
    %cst_159 = arith.constant 0.000000e+00 : f32
    %cst_160 = arith.constant 1.000000e+00 : f32
    %1327 = vector.broadcast %cst_159 : f32 to vector<1x128xf32>
    %1328 = vector.broadcast %cst_160 : f32 to vector<1x128xf32>
    %1329 = arith.select %1326, %1327, %1328 : vector<1x128xi1>, vector<1x128xf32>
    %1330 = arith.mulf %1229, %1329 : vector<1x128xf32>
    %c0_161 = arith.constant 0 : index
    %c104 = arith.constant 104 : index
    %c0_162 = arith.constant 0 : index
    %1331 = vector.load %arg2[%c0_161, %c104, %c0_162] : memref<1x128x4xf32, #tpu.memory_space<vmem>>, vector<1x8x4xf32>
    %1332 = vector.shape_cast %1331 : vector<1x8x4xf32> to vector<8x4xf32>
    %1333 = vector.extract_strided_slice %1332 {offsets = [0, 0], sizes = [8, 1], strides = [1, 1]} : vector<8x4xf32> to vector<8x1xf32>
    %1334 = vector.extract_strided_slice %1332 {offsets = [0, 1], sizes = [8, 1], strides = [1, 1]} : vector<8x4xf32> to vector<8x1xf32>
    %1335 = vector.extract_strided_slice %1332 {offsets = [0, 2], sizes = [8, 1], strides = [1, 1]} : vector<8x4xf32> to vector<8x1xf32>
    %1336 = vector.extract_strided_slice %1332 {offsets = [0, 3], sizes = [8, 1], strides = [1, 1]} : vector<8x4xf32> to vector<8x1xf32>
    %1337 = arith.subf %1335, %1333 : vector<8x1xf32>
    %1338 = arith.subf %1336, %1334 : vector<8x1xf32>
    %1339 = arith.mulf %1337, %1338 : vector<8x1xf32>
    %1340 = vector.broadcast %1333 : vector<8x1xf32> to vector<8x128xf32>
    %1341 = vector.broadcast %2 : vector<1x128xf32> to vector<8x128xf32>
    %1342 = arith.maximumf %1340, %1341 : vector<8x128xf32>
    %1343 = vector.broadcast %1334 : vector<8x1xf32> to vector<8x128xf32>
    %1344 = vector.broadcast %3 : vector<1x128xf32> to vector<8x128xf32>
    %1345 = arith.maximumf %1343, %1344 : vector<8x128xf32>
    %1346 = vector.broadcast %1335 : vector<8x1xf32> to vector<8x128xf32>
    %1347 = vector.broadcast %4 : vector<1x128xf32> to vector<8x128xf32>
    %1348 = arith.minimumf %1346, %1347 : vector<8x128xf32>
    %1349 = vector.broadcast %1336 : vector<8x1xf32> to vector<8x128xf32>
    %1350 = vector.broadcast %5 : vector<1x128xf32> to vector<8x128xf32>
    %1351 = arith.minimumf %1349, %1350 : vector<8x128xf32>
    %1352 = arith.subf %1348, %1342 : vector<8x128xf32>
    %cst_163 = arith.constant 0.000000e+00 : f32
    %1353 = vector.broadcast %cst_163 : f32 to vector<8x128xf32>
    %1354 = arith.maximumf %1352, %1353 : vector<8x128xf32>
    %1355 = arith.subf %1351, %1345 : vector<8x128xf32>
    %cst_164 = arith.constant 0.000000e+00 : f32
    %1356 = vector.broadcast %cst_164 : f32 to vector<8x128xf32>
    %1357 = arith.maximumf %1355, %1356 : vector<8x128xf32>
    %1358 = arith.mulf %1354, %1357 : vector<8x128xf32>
    %1359 = vector.broadcast %1339 : vector<8x1xf32> to vector<8x128xf32>
    %1360 = vector.broadcast %9 : vector<1x128xf32> to vector<8x128xf32>
    %1361 = arith.addf %1359, %1360 : vector<8x128xf32>
    %1362 = arith.subf %1361, %1358 : vector<8x128xf32>
    %cst_165 = arith.constant 5.000000e-01 : f32
    %1363 = vector.broadcast %cst_165 : f32 to vector<8x128xf32>
    %1364 = arith.mulf %1363, %1362 : vector<8x128xf32>
    %1365 = arith.cmpf ogt, %1358, %1364 : vector<8x128xf32>
    %cst_166 = arith.constant 0.000000e+00 : f32
    %1366 = vector.broadcast %cst_166 : f32 to vector<8x128xf32>
    %1367 = arith.cmpf ogt, %1358, %1366 : vector<8x128xf32>
    %1368 = arith.andi %1365, %1367 : vector<8x128xi1>
    %c104_i32 = arith.constant 104 : i32
    %1369 = vector.broadcast %c104_i32 : i32 to vector<8x128xi32>
    %1370 = arith.cmpi sgt, %17, %1369 : vector<8x128xi32>
    %1371 = arith.andi %1368, %1370 : vector<8x128xi1>
    %cst_167 = arith.constant 1.000000e+00 : f32
    %cst_168 = arith.constant 0.000000e+00 : f32
    %1372 = vector.broadcast %cst_167 : f32 to vector<8x128xf32>
    %1373 = vector.broadcast %cst_168 : f32 to vector<8x128xf32>
    %1374 = arith.select %1371, %1372, %1373 : vector<8x128xi1>, vector<8x128xf32>
    %1375 = vector.extract_strided_slice %1330 {offsets = [0, 104], sizes = [1, 8], strides = [1, 1]} : vector<1x128xf32> to vector<1x8xf32>
    %1376 = vector.extract_strided_slice %1374 {offsets = [0, 104], sizes = [8, 8], strides = [1, 1]} : vector<8x128xf32> to vector<8x8xf32>
    %1377 = vector.extract_strided_slice %1375 {offsets = [0, 0], sizes = [1, 1], strides = [1, 1]} : vector<1x8xf32> to vector<1x1xf32>
    %1378 = vector.extract_strided_slice %1376 {offsets = [0, 0], sizes = [1, 8], strides = [1, 1]} : vector<8x8xf32> to vector<1x8xf32>
    %1379 = arith.mulf %1378, %1375 : vector<1x8xf32>
    %1380 = vector.broadcast %1377 : vector<1x1xf32> to vector<1x8xf32>
    %1381 = arith.mulf %1380, %1379 : vector<1x8xf32>
    %1382 = arith.subf %1375, %1381 : vector<1x8xf32>
    %1383 = vector.extract_strided_slice %1382 {offsets = [0, 1], sizes = [1, 1], strides = [1, 1]} : vector<1x8xf32> to vector<1x1xf32>
    %1384 = vector.extract_strided_slice %1376 {offsets = [1, 0], sizes = [1, 8], strides = [1, 1]} : vector<8x8xf32> to vector<1x8xf32>
    %1385 = arith.mulf %1384, %1382 : vector<1x8xf32>
    %1386 = vector.broadcast %1383 : vector<1x1xf32> to vector<1x8xf32>
    %1387 = arith.mulf %1386, %1385 : vector<1x8xf32>
    %1388 = arith.subf %1382, %1387 : vector<1x8xf32>
    %1389 = vector.extract_strided_slice %1388 {offsets = [0, 2], sizes = [1, 1], strides = [1, 1]} : vector<1x8xf32> to vector<1x1xf32>
    %1390 = vector.extract_strided_slice %1376 {offsets = [2, 0], sizes = [1, 8], strides = [1, 1]} : vector<8x8xf32> to vector<1x8xf32>
    %1391 = arith.mulf %1390, %1388 : vector<1x8xf32>
    %1392 = vector.broadcast %1389 : vector<1x1xf32> to vector<1x8xf32>
    %1393 = arith.mulf %1392, %1391 : vector<1x8xf32>
    %1394 = arith.subf %1388, %1393 : vector<1x8xf32>
    %1395 = vector.extract_strided_slice %1394 {offsets = [0, 3], sizes = [1, 1], strides = [1, 1]} : vector<1x8xf32> to vector<1x1xf32>
    %1396 = vector.extract_strided_slice %1376 {offsets = [3, 0], sizes = [1, 8], strides = [1, 1]} : vector<8x8xf32> to vector<1x8xf32>
    %1397 = arith.mulf %1396, %1394 : vector<1x8xf32>
    %1398 = vector.broadcast %1395 : vector<1x1xf32> to vector<1x8xf32>
    %1399 = arith.mulf %1398, %1397 : vector<1x8xf32>
    %1400 = arith.subf %1394, %1399 : vector<1x8xf32>
    %1401 = vector.extract_strided_slice %1400 {offsets = [0, 4], sizes = [1, 1], strides = [1, 1]} : vector<1x8xf32> to vector<1x1xf32>
    %1402 = vector.extract_strided_slice %1376 {offsets = [4, 0], sizes = [1, 8], strides = [1, 1]} : vector<8x8xf32> to vector<1x8xf32>
    %1403 = arith.mulf %1402, %1400 : vector<1x8xf32>
    %1404 = vector.broadcast %1401 : vector<1x1xf32> to vector<1x8xf32>
    %1405 = arith.mulf %1404, %1403 : vector<1x8xf32>
    %1406 = arith.subf %1400, %1405 : vector<1x8xf32>
    %1407 = vector.extract_strided_slice %1406 {offsets = [0, 5], sizes = [1, 1], strides = [1, 1]} : vector<1x8xf32> to vector<1x1xf32>
    %1408 = vector.extract_strided_slice %1376 {offsets = [5, 0], sizes = [1, 8], strides = [1, 1]} : vector<8x8xf32> to vector<1x8xf32>
    %1409 = arith.mulf %1408, %1406 : vector<1x8xf32>
    %1410 = vector.broadcast %1407 : vector<1x1xf32> to vector<1x8xf32>
    %1411 = arith.mulf %1410, %1409 : vector<1x8xf32>
    %1412 = arith.subf %1406, %1411 : vector<1x8xf32>
    %1413 = vector.extract_strided_slice %1412 {offsets = [0, 6], sizes = [1, 1], strides = [1, 1]} : vector<1x8xf32> to vector<1x1xf32>
    %1414 = vector.extract_strided_slice %1376 {offsets = [6, 0], sizes = [1, 8], strides = [1, 1]} : vector<8x8xf32> to vector<1x8xf32>
    %1415 = arith.mulf %1414, %1412 : vector<1x8xf32>
    %1416 = vector.broadcast %1413 : vector<1x1xf32> to vector<1x8xf32>
    %1417 = arith.mulf %1416, %1415 : vector<1x8xf32>
    %1418 = arith.subf %1412, %1417 : vector<1x8xf32>
    %1419 = vector.extract_strided_slice %1418 {offsets = [0, 7], sizes = [1, 1], strides = [1, 1]} : vector<1x8xf32> to vector<1x1xf32>
    %1420 = vector.extract_strided_slice %1376 {offsets = [7, 0], sizes = [1, 8], strides = [1, 1]} : vector<8x8xf32> to vector<1x8xf32>
    %1421 = arith.mulf %1420, %1418 : vector<1x8xf32>
    %1422 = vector.broadcast %1419 : vector<1x1xf32> to vector<1x8xf32>
    %1423 = arith.mulf %1422, %1421 : vector<1x8xf32>
    %1424 = arith.subf %1418, %1423 : vector<1x8xf32>
    %cst_169 = arith.constant dense<0.000000e+00> : vector<1x128xf32>
    %1425 = tpu.matmul %1424, %1374, %cst_169 {dimension_numbers = #tpu.dot_dimension_numbers<[1], [0], [0], [1], [0, 0, 1, 1], [], []>} : vector<1x8xf32>, vector<8x128xf32>, vector<1x128xf32> -> vector<1x128xf32>
    %cst_170 = arith.constant 0.000000e+00 : f32
    %1426 = vector.broadcast %cst_170 : f32 to vector<1x128xf32>
    %1427 = arith.cmpf ogt, %1425, %1426 : vector<1x128xf32>
    %cst_171 = arith.constant 0.000000e+00 : f32
    %cst_172 = arith.constant 1.000000e+00 : f32
    %1428 = vector.broadcast %cst_171 : f32 to vector<1x128xf32>
    %1429 = vector.broadcast %cst_172 : f32 to vector<1x128xf32>
    %1430 = arith.select %1427, %1428, %1429 : vector<1x128xi1>, vector<1x128xf32>
    %1431 = arith.mulf %1330, %1430 : vector<1x128xf32>
    %c0_173 = arith.constant 0 : index
    %c112 = arith.constant 112 : index
    %c0_174 = arith.constant 0 : index
    %1432 = vector.load %arg2[%c0_173, %c112, %c0_174] : memref<1x128x4xf32, #tpu.memory_space<vmem>>, vector<1x8x4xf32>
    %1433 = vector.shape_cast %1432 : vector<1x8x4xf32> to vector<8x4xf32>
    %1434 = vector.extract_strided_slice %1433 {offsets = [0, 0], sizes = [8, 1], strides = [1, 1]} : vector<8x4xf32> to vector<8x1xf32>
    %1435 = vector.extract_strided_slice %1433 {offsets = [0, 1], sizes = [8, 1], strides = [1, 1]} : vector<8x4xf32> to vector<8x1xf32>
    %1436 = vector.extract_strided_slice %1433 {offsets = [0, 2], sizes = [8, 1], strides = [1, 1]} : vector<8x4xf32> to vector<8x1xf32>
    %1437 = vector.extract_strided_slice %1433 {offsets = [0, 3], sizes = [8, 1], strides = [1, 1]} : vector<8x4xf32> to vector<8x1xf32>
    %1438 = arith.subf %1436, %1434 : vector<8x1xf32>
    %1439 = arith.subf %1437, %1435 : vector<8x1xf32>
    %1440 = arith.mulf %1438, %1439 : vector<8x1xf32>
    %1441 = vector.broadcast %1434 : vector<8x1xf32> to vector<8x128xf32>
    %1442 = vector.broadcast %2 : vector<1x128xf32> to vector<8x128xf32>
    %1443 = arith.maximumf %1441, %1442 : vector<8x128xf32>
    %1444 = vector.broadcast %1435 : vector<8x1xf32> to vector<8x128xf32>
    %1445 = vector.broadcast %3 : vector<1x128xf32> to vector<8x128xf32>
    %1446 = arith.maximumf %1444, %1445 : vector<8x128xf32>
    %1447 = vector.broadcast %1436 : vector<8x1xf32> to vector<8x128xf32>
    %1448 = vector.broadcast %4 : vector<1x128xf32> to vector<8x128xf32>
    %1449 = arith.minimumf %1447, %1448 : vector<8x128xf32>
    %1450 = vector.broadcast %1437 : vector<8x1xf32> to vector<8x128xf32>
    %1451 = vector.broadcast %5 : vector<1x128xf32> to vector<8x128xf32>
    %1452 = arith.minimumf %1450, %1451 : vector<8x128xf32>
    %1453 = arith.subf %1449, %1443 : vector<8x128xf32>
    %cst_175 = arith.constant 0.000000e+00 : f32
    %1454 = vector.broadcast %cst_175 : f32 to vector<8x128xf32>
    %1455 = arith.maximumf %1453, %1454 : vector<8x128xf32>
    %1456 = arith.subf %1452, %1446 : vector<8x128xf32>
    %cst_176 = arith.constant 0.000000e+00 : f32
    %1457 = vector.broadcast %cst_176 : f32 to vector<8x128xf32>
    %1458 = arith.maximumf %1456, %1457 : vector<8x128xf32>
    %1459 = arith.mulf %1455, %1458 : vector<8x128xf32>
    %1460 = vector.broadcast %1440 : vector<8x1xf32> to vector<8x128xf32>
    %1461 = vector.broadcast %9 : vector<1x128xf32> to vector<8x128xf32>
    %1462 = arith.addf %1460, %1461 : vector<8x128xf32>
    %1463 = arith.subf %1462, %1459 : vector<8x128xf32>
    %cst_177 = arith.constant 5.000000e-01 : f32
    %1464 = vector.broadcast %cst_177 : f32 to vector<8x128xf32>
    %1465 = arith.mulf %1464, %1463 : vector<8x128xf32>
    %1466 = arith.cmpf ogt, %1459, %1465 : vector<8x128xf32>
    %cst_178 = arith.constant 0.000000e+00 : f32
    %1467 = vector.broadcast %cst_178 : f32 to vector<8x128xf32>
    %1468 = arith.cmpf ogt, %1459, %1467 : vector<8x128xf32>
    %1469 = arith.andi %1466, %1468 : vector<8x128xi1>
    %c112_i32 = arith.constant 112 : i32
    %1470 = vector.broadcast %c112_i32 : i32 to vector<8x128xi32>
    %1471 = arith.cmpi sgt, %17, %1470 : vector<8x128xi32>
    %1472 = arith.andi %1469, %1471 : vector<8x128xi1>
    %cst_179 = arith.constant 1.000000e+00 : f32
    %cst_180 = arith.constant 0.000000e+00 : f32
    %1473 = vector.broadcast %cst_179 : f32 to vector<8x128xf32>
    %1474 = vector.broadcast %cst_180 : f32 to vector<8x128xf32>
    %1475 = arith.select %1472, %1473, %1474 : vector<8x128xi1>, vector<8x128xf32>
    %1476 = vector.extract_strided_slice %1431 {offsets = [0, 112], sizes = [1, 8], strides = [1, 1]} : vector<1x128xf32> to vector<1x8xf32>
    %1477 = vector.extract_strided_slice %1475 {offsets = [0, 112], sizes = [8, 8], strides = [1, 1]} : vector<8x128xf32> to vector<8x8xf32>
    %1478 = vector.extract_strided_slice %1476 {offsets = [0, 0], sizes = [1, 1], strides = [1, 1]} : vector<1x8xf32> to vector<1x1xf32>
    %1479 = vector.extract_strided_slice %1477 {offsets = [0, 0], sizes = [1, 8], strides = [1, 1]} : vector<8x8xf32> to vector<1x8xf32>
    %1480 = arith.mulf %1479, %1476 : vector<1x8xf32>
    %1481 = vector.broadcast %1478 : vector<1x1xf32> to vector<1x8xf32>
    %1482 = arith.mulf %1481, %1480 : vector<1x8xf32>
    %1483 = arith.subf %1476, %1482 : vector<1x8xf32>
    %1484 = vector.extract_strided_slice %1483 {offsets = [0, 1], sizes = [1, 1], strides = [1, 1]} : vector<1x8xf32> to vector<1x1xf32>
    %1485 = vector.extract_strided_slice %1477 {offsets = [1, 0], sizes = [1, 8], strides = [1, 1]} : vector<8x8xf32> to vector<1x8xf32>
    %1486 = arith.mulf %1485, %1483 : vector<1x8xf32>
    %1487 = vector.broadcast %1484 : vector<1x1xf32> to vector<1x8xf32>
    %1488 = arith.mulf %1487, %1486 : vector<1x8xf32>
    %1489 = arith.subf %1483, %1488 : vector<1x8xf32>
    %1490 = vector.extract_strided_slice %1489 {offsets = [0, 2], sizes = [1, 1], strides = [1, 1]} : vector<1x8xf32> to vector<1x1xf32>
    %1491 = vector.extract_strided_slice %1477 {offsets = [2, 0], sizes = [1, 8], strides = [1, 1]} : vector<8x8xf32> to vector<1x8xf32>
    %1492 = arith.mulf %1491, %1489 : vector<1x8xf32>
    %1493 = vector.broadcast %1490 : vector<1x1xf32> to vector<1x8xf32>
    %1494 = arith.mulf %1493, %1492 : vector<1x8xf32>
    %1495 = arith.subf %1489, %1494 : vector<1x8xf32>
    %1496 = vector.extract_strided_slice %1495 {offsets = [0, 3], sizes = [1, 1], strides = [1, 1]} : vector<1x8xf32> to vector<1x1xf32>
    %1497 = vector.extract_strided_slice %1477 {offsets = [3, 0], sizes = [1, 8], strides = [1, 1]} : vector<8x8xf32> to vector<1x8xf32>
    %1498 = arith.mulf %1497, %1495 : vector<1x8xf32>
    %1499 = vector.broadcast %1496 : vector<1x1xf32> to vector<1x8xf32>
    %1500 = arith.mulf %1499, %1498 : vector<1x8xf32>
    %1501 = arith.subf %1495, %1500 : vector<1x8xf32>
    %1502 = vector.extract_strided_slice %1501 {offsets = [0, 4], sizes = [1, 1], strides = [1, 1]} : vector<1x8xf32> to vector<1x1xf32>
    %1503 = vector.extract_strided_slice %1477 {offsets = [4, 0], sizes = [1, 8], strides = [1, 1]} : vector<8x8xf32> to vector<1x8xf32>
    %1504 = arith.mulf %1503, %1501 : vector<1x8xf32>
    %1505 = vector.broadcast %1502 : vector<1x1xf32> to vector<1x8xf32>
    %1506 = arith.mulf %1505, %1504 : vector<1x8xf32>
    %1507 = arith.subf %1501, %1506 : vector<1x8xf32>
    %1508 = vector.extract_strided_slice %1507 {offsets = [0, 5], sizes = [1, 1], strides = [1, 1]} : vector<1x8xf32> to vector<1x1xf32>
    %1509 = vector.extract_strided_slice %1477 {offsets = [5, 0], sizes = [1, 8], strides = [1, 1]} : vector<8x8xf32> to vector<1x8xf32>
    %1510 = arith.mulf %1509, %1507 : vector<1x8xf32>
    %1511 = vector.broadcast %1508 : vector<1x1xf32> to vector<1x8xf32>
    %1512 = arith.mulf %1511, %1510 : vector<1x8xf32>
    %1513 = arith.subf %1507, %1512 : vector<1x8xf32>
    %1514 = vector.extract_strided_slice %1513 {offsets = [0, 6], sizes = [1, 1], strides = [1, 1]} : vector<1x8xf32> to vector<1x1xf32>
    %1515 = vector.extract_strided_slice %1477 {offsets = [6, 0], sizes = [1, 8], strides = [1, 1]} : vector<8x8xf32> to vector<1x8xf32>
    %1516 = arith.mulf %1515, %1513 : vector<1x8xf32>
    %1517 = vector.broadcast %1514 : vector<1x1xf32> to vector<1x8xf32>
    %1518 = arith.mulf %1517, %1516 : vector<1x8xf32>
    %1519 = arith.subf %1513, %1518 : vector<1x8xf32>
    %1520 = vector.extract_strided_slice %1519 {offsets = [0, 7], sizes = [1, 1], strides = [1, 1]} : vector<1x8xf32> to vector<1x1xf32>
    %1521 = vector.extract_strided_slice %1477 {offsets = [7, 0], sizes = [1, 8], strides = [1, 1]} : vector<8x8xf32> to vector<1x8xf32>
    %1522 = arith.mulf %1521, %1519 : vector<1x8xf32>
    %1523 = vector.broadcast %1520 : vector<1x1xf32> to vector<1x8xf32>
    %1524 = arith.mulf %1523, %1522 : vector<1x8xf32>
    %1525 = arith.subf %1519, %1524 : vector<1x8xf32>
    %cst_181 = arith.constant dense<0.000000e+00> : vector<1x128xf32>
    %1526 = tpu.matmul %1525, %1475, %cst_181 {dimension_numbers = #tpu.dot_dimension_numbers<[1], [0], [0], [1], [0, 0, 1, 1], [], []>} : vector<1x8xf32>, vector<8x128xf32>, vector<1x128xf32> -> vector<1x128xf32>
    %cst_182 = arith.constant 0.000000e+00 : f32
    %1527 = vector.broadcast %cst_182 : f32 to vector<1x128xf32>
    %1528 = arith.cmpf ogt, %1526, %1527 : vector<1x128xf32>
    %cst_183 = arith.constant 0.000000e+00 : f32
    %cst_184 = arith.constant 1.000000e+00 : f32
    %1529 = vector.broadcast %cst_183 : f32 to vector<1x128xf32>
    %1530 = vector.broadcast %cst_184 : f32 to vector<1x128xf32>
    %1531 = arith.select %1528, %1529, %1530 : vector<1x128xi1>, vector<1x128xf32>
    %1532 = arith.mulf %1431, %1531 : vector<1x128xf32>
    %c0_185 = arith.constant 0 : index
    %c120 = arith.constant 120 : index
    %c0_186 = arith.constant 0 : index
    %1533 = vector.load %arg2[%c0_185, %c120, %c0_186] : memref<1x128x4xf32, #tpu.memory_space<vmem>>, vector<1x8x4xf32>
    %1534 = vector.shape_cast %1533 : vector<1x8x4xf32> to vector<8x4xf32>
    %1535 = vector.extract_strided_slice %1534 {offsets = [0, 0], sizes = [8, 1], strides = [1, 1]} : vector<8x4xf32> to vector<8x1xf32>
    %1536 = vector.extract_strided_slice %1534 {offsets = [0, 1], sizes = [8, 1], strides = [1, 1]} : vector<8x4xf32> to vector<8x1xf32>
    %1537 = vector.extract_strided_slice %1534 {offsets = [0, 2], sizes = [8, 1], strides = [1, 1]} : vector<8x4xf32> to vector<8x1xf32>
    %1538 = vector.extract_strided_slice %1534 {offsets = [0, 3], sizes = [8, 1], strides = [1, 1]} : vector<8x4xf32> to vector<8x1xf32>
    %1539 = arith.subf %1537, %1535 : vector<8x1xf32>
    %1540 = arith.subf %1538, %1536 : vector<8x1xf32>
    %1541 = arith.mulf %1539, %1540 : vector<8x1xf32>
    %1542 = vector.broadcast %1535 : vector<8x1xf32> to vector<8x128xf32>
    %1543 = vector.broadcast %2 : vector<1x128xf32> to vector<8x128xf32>
    %1544 = arith.maximumf %1542, %1543 : vector<8x128xf32>
    %1545 = vector.broadcast %1536 : vector<8x1xf32> to vector<8x128xf32>
    %1546 = vector.broadcast %3 : vector<1x128xf32> to vector<8x128xf32>
    %1547 = arith.maximumf %1545, %1546 : vector<8x128xf32>
    %1548 = vector.broadcast %1537 : vector<8x1xf32> to vector<8x128xf32>
    %1549 = vector.broadcast %4 : vector<1x128xf32> to vector<8x128xf32>
    %1550 = arith.minimumf %1548, %1549 : vector<8x128xf32>
    %1551 = vector.broadcast %1538 : vector<8x1xf32> to vector<8x128xf32>
    %1552 = vector.broadcast %5 : vector<1x128xf32> to vector<8x128xf32>
    %1553 = arith.minimumf %1551, %1552 : vector<8x128xf32>
    %1554 = arith.subf %1550, %1544 : vector<8x128xf32>
    %cst_187 = arith.constant 0.000000e+00 : f32
    %1555 = vector.broadcast %cst_187 : f32 to vector<8x128xf32>
    %1556 = arith.maximumf %1554, %1555 : vector<8x128xf32>
    %1557 = arith.subf %1553, %1547 : vector<8x128xf32>
    %cst_188 = arith.constant 0.000000e+00 : f32
    %1558 = vector.broadcast %cst_188 : f32 to vector<8x128xf32>
    %1559 = arith.maximumf %1557, %1558 : vector<8x128xf32>
    %1560 = arith.mulf %1556, %1559 : vector<8x128xf32>
    %1561 = vector.broadcast %1541 : vector<8x1xf32> to vector<8x128xf32>
    %1562 = vector.broadcast %9 : vector<1x128xf32> to vector<8x128xf32>
    %1563 = arith.addf %1561, %1562 : vector<8x128xf32>
    %1564 = arith.subf %1563, %1560 : vector<8x128xf32>
    %cst_189 = arith.constant 5.000000e-01 : f32
    %1565 = vector.broadcast %cst_189 : f32 to vector<8x128xf32>
    %1566 = arith.mulf %1565, %1564 : vector<8x128xf32>
    %1567 = arith.cmpf ogt, %1560, %1566 : vector<8x128xf32>
    %cst_190 = arith.constant 0.000000e+00 : f32
    %1568 = vector.broadcast %cst_190 : f32 to vector<8x128xf32>
    %1569 = arith.cmpf ogt, %1560, %1568 : vector<8x128xf32>
    %1570 = arith.andi %1567, %1569 : vector<8x128xi1>
    %c120_i32 = arith.constant 120 : i32
    %1571 = vector.broadcast %c120_i32 : i32 to vector<8x128xi32>
    %1572 = arith.cmpi sgt, %17, %1571 : vector<8x128xi32>
    %1573 = arith.andi %1570, %1572 : vector<8x128xi1>
    %cst_191 = arith.constant 1.000000e+00 : f32
    %cst_192 = arith.constant 0.000000e+00 : f32
    %1574 = vector.broadcast %cst_191 : f32 to vector<8x128xf32>
    %1575 = vector.broadcast %cst_192 : f32 to vector<8x128xf32>
    %1576 = arith.select %1573, %1574, %1575 : vector<8x128xi1>, vector<8x128xf32>
    %1577 = vector.extract_strided_slice %1532 {offsets = [0, 120], sizes = [1, 8], strides = [1, 1]} : vector<1x128xf32> to vector<1x8xf32>
    %1578 = vector.extract_strided_slice %1576 {offsets = [0, 120], sizes = [8, 8], strides = [1, 1]} : vector<8x128xf32> to vector<8x8xf32>
    %1579 = vector.extract_strided_slice %1577 {offsets = [0, 0], sizes = [1, 1], strides = [1, 1]} : vector<1x8xf32> to vector<1x1xf32>
    %1580 = vector.extract_strided_slice %1578 {offsets = [0, 0], sizes = [1, 8], strides = [1, 1]} : vector<8x8xf32> to vector<1x8xf32>
    %1581 = arith.mulf %1580, %1577 : vector<1x8xf32>
    %1582 = vector.broadcast %1579 : vector<1x1xf32> to vector<1x8xf32>
    %1583 = arith.mulf %1582, %1581 : vector<1x8xf32>
    %1584 = arith.subf %1577, %1583 : vector<1x8xf32>
    %1585 = vector.extract_strided_slice %1584 {offsets = [0, 1], sizes = [1, 1], strides = [1, 1]} : vector<1x8xf32> to vector<1x1xf32>
    %1586 = vector.extract_strided_slice %1578 {offsets = [1, 0], sizes = [1, 8], strides = [1, 1]} : vector<8x8xf32> to vector<1x8xf32>
    %1587 = arith.mulf %1586, %1584 : vector<1x8xf32>
    %1588 = vector.broadcast %1585 : vector<1x1xf32> to vector<1x8xf32>
    %1589 = arith.mulf %1588, %1587 : vector<1x8xf32>
    %1590 = arith.subf %1584, %1589 : vector<1x8xf32>
    %1591 = vector.extract_strided_slice %1590 {offsets = [0, 2], sizes = [1, 1], strides = [1, 1]} : vector<1x8xf32> to vector<1x1xf32>
    %1592 = vector.extract_strided_slice %1578 {offsets = [2, 0], sizes = [1, 8], strides = [1, 1]} : vector<8x8xf32> to vector<1x8xf32>
    %1593 = arith.mulf %1592, %1590 : vector<1x8xf32>
    %1594 = vector.broadcast %1591 : vector<1x1xf32> to vector<1x8xf32>
    %1595 = arith.mulf %1594, %1593 : vector<1x8xf32>
    %1596 = arith.subf %1590, %1595 : vector<1x8xf32>
    %1597 = vector.extract_strided_slice %1596 {offsets = [0, 3], sizes = [1, 1], strides = [1, 1]} : vector<1x8xf32> to vector<1x1xf32>
    %1598 = vector.extract_strided_slice %1578 {offsets = [3, 0], sizes = [1, 8], strides = [1, 1]} : vector<8x8xf32> to vector<1x8xf32>
    %1599 = arith.mulf %1598, %1596 : vector<1x8xf32>
    %1600 = vector.broadcast %1597 : vector<1x1xf32> to vector<1x8xf32>
    %1601 = arith.mulf %1600, %1599 : vector<1x8xf32>
    %1602 = arith.subf %1596, %1601 : vector<1x8xf32>
    %1603 = vector.extract_strided_slice %1602 {offsets = [0, 4], sizes = [1, 1], strides = [1, 1]} : vector<1x8xf32> to vector<1x1xf32>
    %1604 = vector.extract_strided_slice %1578 {offsets = [4, 0], sizes = [1, 8], strides = [1, 1]} : vector<8x8xf32> to vector<1x8xf32>
    %1605 = arith.mulf %1604, %1602 : vector<1x8xf32>
    %1606 = vector.broadcast %1603 : vector<1x1xf32> to vector<1x8xf32>
    %1607 = arith.mulf %1606, %1605 : vector<1x8xf32>
    %1608 = arith.subf %1602, %1607 : vector<1x8xf32>
    %1609 = vector.extract_strided_slice %1608 {offsets = [0, 5], sizes = [1, 1], strides = [1, 1]} : vector<1x8xf32> to vector<1x1xf32>
    %1610 = vector.extract_strided_slice %1578 {offsets = [5, 0], sizes = [1, 8], strides = [1, 1]} : vector<8x8xf32> to vector<1x8xf32>
    %1611 = arith.mulf %1610, %1608 : vector<1x8xf32>
    %1612 = vector.broadcast %1609 : vector<1x1xf32> to vector<1x8xf32>
    %1613 = arith.mulf %1612, %1611 : vector<1x8xf32>
    %1614 = arith.subf %1608, %1613 : vector<1x8xf32>
    %1615 = vector.extract_strided_slice %1614 {offsets = [0, 6], sizes = [1, 1], strides = [1, 1]} : vector<1x8xf32> to vector<1x1xf32>
    %1616 = vector.extract_strided_slice %1578 {offsets = [6, 0], sizes = [1, 8], strides = [1, 1]} : vector<8x8xf32> to vector<1x8xf32>
    %1617 = arith.mulf %1616, %1614 : vector<1x8xf32>
    %1618 = vector.broadcast %1615 : vector<1x1xf32> to vector<1x8xf32>
    %1619 = arith.mulf %1618, %1617 : vector<1x8xf32>
    %1620 = arith.subf %1614, %1619 : vector<1x8xf32>
    %1621 = vector.extract_strided_slice %1620 {offsets = [0, 7], sizes = [1, 1], strides = [1, 1]} : vector<1x8xf32> to vector<1x1xf32>
    %1622 = vector.extract_strided_slice %1578 {offsets = [7, 0], sizes = [1, 8], strides = [1, 1]} : vector<8x8xf32> to vector<1x8xf32>
    %1623 = arith.mulf %1622, %1620 : vector<1x8xf32>
    %1624 = vector.broadcast %1621 : vector<1x1xf32> to vector<1x8xf32>
    %1625 = arith.mulf %1624, %1623 : vector<1x8xf32>
    %1626 = arith.subf %1620, %1625 : vector<1x8xf32>
    %cst_193 = arith.constant dense<0.000000e+00> : vector<1x128xf32>
    %1627 = tpu.matmul %1626, %1576, %cst_193 {dimension_numbers = #tpu.dot_dimension_numbers<[1], [0], [0], [1], [0, 0, 1, 1], [], []>} : vector<1x8xf32>, vector<8x128xf32>, vector<1x128xf32> -> vector<1x128xf32>
    %cst_194 = arith.constant 0.000000e+00 : f32
    %1628 = vector.broadcast %cst_194 : f32 to vector<1x128xf32>
    %1629 = arith.cmpf ogt, %1627, %1628 : vector<1x128xf32>
    %cst_195 = arith.constant 0.000000e+00 : f32
    %cst_196 = arith.constant 1.000000e+00 : f32
    %1630 = vector.broadcast %cst_195 : f32 to vector<1x128xf32>
    %1631 = vector.broadcast %cst_196 : f32 to vector<1x128xf32>
    %1632 = arith.select %1629, %1630, %1631 : vector<1x128xi1>, vector<1x128xf32>
    %1633 = arith.mulf %1532, %1632 : vector<1x128xf32>
    %c0_197 = arith.constant 0 : index
    %c0_198 = arith.constant 0 : index
    %c0_199 = arith.constant 0 : index
    %1634 = vector.load %arg3[%c0_197, %c0_198, %c0_199] : memref<1x1x128xf32, #tpu.memory_space<vmem>>, vector<1x1x128xf32>
    %1635 = vector.shape_cast %1634 : vector<1x1x128xf32> to vector<1x128xf32>
    %1636 = vector.shape_cast %1633 : vector<1x128xf32> to vector<1x1x128xf32>
    tpu.vector_store %arg3[%c0_197, %c0_198, %c0_199], %1636 {strides = array<i32>} : memref<1x1x128xf32, #tpu.memory_space<vmem>>, vector<1x1x128xf32>,
    %1637 = tpu.iota {dimensions = array<i32: 0>} : vector<128x1xi32>
    %1638 = tpu.iota {dimensions = array<i32: 1>} : vector<1x128xi32>
    %1639 = vector.broadcast %1637 : vector<128x1xi32> to vector<128x128xi32>
    %1640 = vector.broadcast %1638 : vector<1x128xi32> to vector<128x128xi32>
    %1641 = arith.cmpi sle, %1639, %1640 : vector<128x128xi32>
    %cst_200 = arith.constant 1.000000e+00 : f32
    %cst_201 = arith.constant 0.000000e+00 : f32
    %1642 = vector.broadcast %cst_200 : f32 to vector<128x128xf32>
    %1643 = vector.broadcast %cst_201 : f32 to vector<128x128xf32>
    %1644 = arith.select %1641, %1642, %1643 : vector<128x128xi1>, vector<128x128xf32>
    %cst_202 = arith.constant dense<0.000000e+00> : vector<1x128xf32>
    %1645 = tpu.matmul %1633, %1644, %cst_202 {dimension_numbers = #tpu.dot_dimension_numbers<[1], [0], [0], [1], [0, 0, 1, 1], [], []>} : vector<1x128xf32>, vector<128x128xf32>, vector<1x128xf32> -> vector<1x128xf32>
    %cst_203 = arith.constant dense<0.000000e+00> : vector<1xf32>
    %1646 = vector.multi_reduction <add>, %1633, %cst_203 [1] : vector<1x128xf32> to vector<1xf32>
    %1647 = vector.shape_cast %1646 : vector<1xf32> to vector<1x1xf32>
    %1648 = arith.sitofp %1638 : vector<1x128xi32> to vector<1x128xf32>
    %cst_204 = arith.constant 0.000000e+00 : f32
    %1649 = vector.broadcast %cst_204 : f32 to vector<1x128xf32>
    %1650 = arith.cmpf ogt, %1633, %1649 : vector<1x128xf32>
    %cst_205 = arith.constant 1.000000e+00 : f32
    %1651 = vector.broadcast %cst_205 : f32 to vector<1x128xf32>
    %1652 = arith.subf %1645, %1651 : vector<1x128xf32>
    %1653 = vector.broadcast %1647 : vector<1x1xf32> to vector<1x128xf32>
    %1654 = arith.addf %1653, %1648 : vector<1x128xf32>
    %1655 = arith.subf %1654, %1645 : vector<1x128xf32>
    %1656 = arith.select %1650, %1652, %1655 : vector<1x128xi1>, vector<1x128xf32>
    %1657 = arith.fptosi %1656 : vector<1x128xf32> to vector<1x128xi32>
    %c0_206 = arith.constant 0 : index
    %c0_207 = arith.constant 0 : index
    %c0_208 = arith.constant 0 : index
    %1658 = vector.load %arg4[%c0_206, %c0_207, %c0_208] : memref<1x1x128xi32, #tpu.memory_space<vmem>>, vector<1x1x128xi32>
    %1659 = vector.shape_cast %1658 : vector<1x1x128xi32> to vector<1x128xi32>
    %1660 = vector.shape_cast %1657 : vector<1x128xi32> to vector<1x1x128xi32>
    tpu.vector_store %arg4[%c0_206, %c0_207, %c0_208], %1660 {strides = array<i32>} : memref<1x1x128xi32, #tpu.memory_space<vmem>>, vector<1x1x128xi32>,
    return
  }
  func.func @transform_0(%arg0: i32) -> (i32, i32, i32) {
    %c0_i32 = arith.constant 0 : i32
    %c0_i32_0 = arith.constant 0 : i32
    %c0_i32_1 = arith.constant 0 : i32
    return %arg0, %c0_i32, %c0_i32_0 : i32, i32, i32
  }
  func.func @transform_1(%arg0: i32) -> (i32, i32, i32) {
    %c0_i32 = arith.constant 0 : i32
    %c0_i32_0 = arith.constant 0 : i32
    %c0_i32_1 = arith.constant 0 : i32
    return %arg0, %c0_i32, %c0_i32_0 : i32, i32, i32
  }
  func.func @transform_2(%arg0: i32) -> (i32, i32, i32) {
    %c0_i32 = arith.constant 0 : i32
    %c0_i32_0 = arith.constant 0 : i32
    %c0_i32_1 = arith.constant 0 : i32
    return %arg0, %c0_i32, %c0_i32_0 : i32, i32, i32
  }
  func.func @transform_3(%arg0: i32) -> (i32, i32, i32) {
    %c0_i32 = arith.constant 0 : i32
    %c0_i32_0 = arith.constant 0 : i32
    %c0_i32_1 = arith.constant 0 : i32
    return %arg0, %c0_i32, %c0_i32_0 : i32, i32, i32
  }
}

</mosaic_0001>

<llo_original>
// kernel: jit_wrapper_forward_batch.1
$region0: #{jit_wrapper_forward_batch.1}
  #allocation0 [shape = 'u32[]', space=smem, size = 0x4, offset = 0x4, fixed_abs, tag = 'smem constant byte address 0x4 - core index']
  #allocation1 [shape = 'u32[72,128]{1,0:T(1,128)}', space=vmem, size = 0x9000, scoped, tag = 'internal scratch']
  %s0 = inlined_call_operand.vmem [shape: f32[2,8,128], index: 0, kind: input, shape index: {}]
  %s1 = inlined_call_operand.vmem [shape: f32[2,128,4], index: 1, kind: input, shape index: {}]
  %s2 = inlined_call_operand.vmem [shape: f32[2,1,128], index: 2, kind: output, shape index: {0}]
  %s3 = inlined_call_operand.vmem [shape: s32[2,1,128], index: 3, kind: output, shape index: {1}]
  %4 = xla_tuple %s2, %s3
  %s5 = sld [smem:[#allocation0]]
  $region49: #{jit_wrapper_forward_batch.1} parent=0
    _
  %s7 = ssub.s32 1, %s5
  %s8 = scalar_select 0, %s7, %s5
  loop: start=0, step=1, limit=4
  $region2: #{jit_wrapper_forward_batch.1} parent=0 // loop_pre_header
    _
  $region3: #{jit_wrapper_forward_batch.1} parent=0 // loop_header
    %s10 = sphi 0, %s14
    %p11 = scmp.ge.s32.totalorder %s10, 4
    %s20 = sphi 0, %s22
    %s23 = sphi 0, %s20
    %s24 = sphi 0, %s23
    %s40 = sphi 0, %s24
    %s46 = sphi 0, %s48
    %s49 = sphi 0, %s46
    %s50 = sphi 0, %s49
    %s66 = sphi 0, %s50
    %s72 = sphi 0, %s74
    %s75 = sphi 0, %s72
    %s76 = sphi 0, %s75
    %s92 = sphi 0, %s76
    %s98 = sphi 0, %s100
    %s101 = sphi 0, %s98
    %s102 = sphi 0, %s101
    %s118 = sphi 0, %s102
  $region4: #{jit_wrapper_forward_batch.1} parent=0 // loop_header_branch
    %13 = sbr.rel (%p11) target = $region8
  $region5: #{jit_wrapper_forward_batch.1} parent=0 // loop_body
    %s15 = ssub.s32 %s10, 1
    %s16 = ssub.s32 %s10, 2
    %s17 = sadd.s32 %s10, 1
    %s18 = ssub.s32 %s10, %s17
    %p19 = scmp.eq.s32.totalorder %s18, 0
    %s21 = sadd.s32 %s20, 1
    %s22 = scalar_select %p19, %s20, %s21
    %p25 = pneg %p19
    %p26 = scmp.eq.s32.totalorder %s10, 1
    %p27 = por %p25, %p26
    %p28 = scmp.ne.s32.totalorder %s20, %s23
    %p29 = scmp.eq.s32.totalorder %s10, 0
    %p30 = por %p28, %p29
    %p31 = scmp.ne.s32.totalorder %s20, %s23
    %p32 = scmp.eq.s32.totalorder %s15, 1
    %p33 = por %p31, %p32
    %p34 = scmp.ne.s32.totalorder %s23, %s24
    %p35 = scmp.eq.s32.totalorder %s15, 0
    %p36 = por %p34, %p35
    %p37 = scmp.ne.s32.totalorder %s23, %s24
    %p38 = scmp.eq.s32.totalorder %s16, 1
    %p39 = por %p37, %p38
    %p41 = scmp.ne.s32.totalorder %s24, %s40
    %p42 = scmp.eq.s32.totalorder %s16, 0
    %p43 = por %p41, %p42
    %s44 = ssub.s32 %s10, %s17
    %p45 = scmp.eq.s32.totalorder %s44, 0
    %s47 = sadd.s32 %s46, 1
    %s48 = scalar_select %p45, %s46, %s47
    %p51 = pneg %p45
    %p52 = scmp.eq.s32.totalorder %s10, 1
    %p53 = por %p51, %p52
    %p54 = scmp.ne.s32.totalorder %s46, %s49
    %p55 = scmp.eq.s32.totalorder %s10, 0
    %p56 = por %p54, %p55
    %p57 = scmp.ne.s32.totalorder %s46, %s49
    %p58 = scmp.eq.s32.totalorder %s15, 1
    %p59 = por %p57, %p58
    %p60 = scmp.ne.s32.totalorder %s49, %s50
    %p61 = scmp.eq.s32.totalorder %s15, 0
    %p62 = por %p60, %p61
    %p63 = scmp.ne.s32.totalorder %s49, %s50
    %p64 = scmp.eq.s32.totalorder %s16, 1
    %p65 = por %p63, %p64
    %p67 = scmp.ne.s32.totalorder %s50, %s66
    %p68 = scmp.eq.s32.totalorder %s16, 0
    %p69 = por %p67, %p68
    %s70 = ssub.s32 %s10, %s17
    %p71 = scmp.eq.s32.totalorder %s70, 0
    %s73 = sadd.s32 %s72, 1
    %s74 = scalar_select %p71, %s72, %s73
    %p77 = pneg %p71
    %p78 = scmp.eq.s32.totalorder %s10, 1
    %p79 = por %p77, %p78
    %p80 = scmp.ne.s32.totalorder %s72, %s75
    %p81 = scmp.eq.s32.totalorder %s10, 0
    %p82 = por %p80, %p81
    %p83 = scmp.ne.s32.totalorder %s72, %s75
    %p84 = scmp.eq.s32.totalorder %s15, 1
    %p85 = por %p83, %p84
    %p86 = scmp.ne.s32.totalorder %s75, %s76
    %p87 = scmp.eq.s32.totalorder %s15, 0
    %p88 = por %p86, %p87
    %p89 = scmp.ne.s32.totalorder %s75, %s76
    %p90 = scmp.eq.s32.totalorder %s16, 1
    %p91 = por %p89, %p90
    %p93 = scmp.ne.s32.totalorder %s76, %s92
    %p94 = scmp.eq.s32.totalorder %s16, 0
    %p95 = por %p93, %p94
    %s96 = ssub.s32 %s10, %s17
    %p97 = scmp.eq.s32.totalorder %s96, 0
    %s99 = sadd.s32 %s98, 1
    %s100 = scalar_select %p97, %s98, %s99
    %p103 = pneg %p97
    %p104 = scmp.eq.s32.totalorder %s10, 1
    %p105 = por %p103, %p104
    %p106 = scmp.ne.s32.totalorder %s98, %s101
    %p107 = scmp.eq.s32.totalorder %s10, 0
    %p108 = por %p106, %p107
    %p109 = scmp.ne.s32.totalorder %s98, %s101
    %p110 = scmp.eq.s32.totalorder %s15, 1
    %p111 = por %p109, %p110
    %p112 = scmp.ne.s32.totalorder %s101, %s102
    %p113 = scmp.eq.s32.totalorder %s15, 0
    %p114 = por %p112, %p113
    %p115 = scmp.ne.s32.totalorder %s101, %s102
    %p116 = scmp.eq.s32.totalorder %s16, 1
    %p117 = por %p115, %p116
    %p119 = scmp.ne.s32.totalorder %s102, %s118
    %p120 = scmp.eq.s32.totalorder %s16, 0
    %p121 = por %p119, %p120
    %p122 = scmp.le.s32.totalorder 1, %s10
    %p123 = scmp.lt.s32.totalorder %s10, 3
    %p124 = pnand %p122, %p123
    %p125 = pneg %p124
    // Predicated region
    $region9: #{jit_wrapper_forward_batch.1} parent=5 // pred_check
      _
    $region10: #{jit_wrapper_forward_batch.1} parent=5 // pred_check_branch
      %127 = sbr.rel (%p124) target = $region12
    $region11: #{jit_wrapper_forward_batch.1} parent=5 // pred_region
      %s128 = ssub.s32 %s10, 1
    $region12: #{jit_wrapper_forward_batch.1} parent=5 // pred_fallthru
      _
    %p129 = scmp.lt.s32.totalorder %s10, 2
    // Predicated region
    $region13: #{jit_wrapper_forward_batch.1} parent=5 // pred_check
      %p130 = pneg %p129
    $region14: #{jit_wrapper_forward_batch.1} parent=5 // pred_check_branch
      %132 = sbr.rel (%p130) target = $region16
    $region15: #{jit_wrapper_forward_batch.1} parent=5 // pred_region
      // Predicated region
      $region17: #{jit_wrapper_forward_batch.1} parent=15 // pred_check
        %p133 = pneg %p30
      $region18: #{jit_wrapper_forward_batch.1} parent=15 // pred_check_branch
        %135 = sbr.rel (%p133) target = $region20
      $region19: #{jit_wrapper_forward_batch.1} parent=15 // pred_region
        %p136 = scmp.lt.s32.totalorder %s10, 1
        %s137 = scalar_select %p136, %s10, 1
        %s138 = smul.addr %s137, 8
        %s139 = scalar_lea.vmem %s0, %s138
      $region20: #{jit_wrapper_forward_batch.1} parent=15 // pred_fallthru
        _
      // Predicated region
      $region21: #{jit_wrapper_forward_batch.1} parent=15 // pred_check
        %p140 = pneg %p56
      $region22: #{jit_wrapper_forward_batch.1} parent=15 // pred_check_branch
        %142 = sbr.rel (%p140) target = $region24
      $region23: #{jit_wrapper_forward_batch.1} parent=15 // pred_region
        %p143 = scmp.lt.s32.totalorder %s10, 1
        %s144 = scalar_select %p143, %s10, 1
        %s145 = smul.addr %s144, 16
        %s146 = smul.addr %s145, 8
        %s147 = scalar_lea.vmem %s1, %s146
      $region24: #{jit_wrapper_forward_batch.1} parent=15 // pred_fallthru
        _
    $region16: #{jit_wrapper_forward_batch.1} parent=5 // pred_fallthru
      _
    %p148 = scmp.le.s32.totalorder 1, %s10
    %p149 = scmp.lt.s32.totalorder %s10, 3
    %p150 = pnand %p148, %p149
    %p151 = pneg %p150
    // Predicated region
    $region25: #{jit_wrapper_forward_batch.1} parent=5 // pred_check
      _
    $region26: #{jit_wrapper_forward_batch.1} parent=5 // pred_check_branch
      %153 = sbr.rel (%p150) target = $region28
    $region27: #{jit_wrapper_forward_batch.1} parent=5 // pred_region
      %s154 = ssub.s32 %s10, 1
      %p155 = scmp.lt.s32.totalorder %s15, 1
      %s156 = scalar_select %p155, %s15, 1
      %s157 = smul.addr %s156, 8
      %s158 = scalar_lea.vmem %s0, %s157
      %p159 = pneg %p36
      %p160 = pneg %p33
      %p161 = scmp.lt.s32.totalorder %s15, 1
      %s162 = scalar_select %p161, %s15, 1
      %s163 = smul.addr %s162, 16
      %s164 = smul.addr %s163, 8
      %s165 = scalar_lea.vmem %s1, %s164
      %p166 = pneg %p62
      %p167 = pneg %p59
      %p168 = pneg %p88
      %p169 = pneg %p85
      %p170 = scmp.lt.s32.totalorder %s15, 1
      %s171 = scalar_select %p170, %s15, 1
      %s172 = scalar_lea.vmem %s2, %s171
      %p173 = pneg %p114
      %p174 = pneg %p111
      %p175 = scmp.lt.s32.totalorder %s15, 1
      %s176 = scalar_select %p175, %s15, 1
      %s177 = scalar_lea.vmem %s3, %s176
      %p178 = scmp.lt.s32.totalorder %s15, 1
      %s179 = scalar_select %p178, %s15, 1
      %s180 = smul.addr %s179, 8
      %s181 = scalar_lea.vmem %s0, %s180
      %p182 = scmp.lt.s32.totalorder %s15, 1
      %s183 = scalar_select %p182, %s15, 1
      %s184 = smul.addr %s183, 16
      %s185 = smul.addr %s184, 8
      %s186 = scalar_lea.vmem %s1, %s185
      %p187 = scmp.lt.s32.totalorder %s15, 1
      %s188 = scalar_select %p187, %s15, 1
      %s189 = scalar_lea.vmem %s2, %s188
      %p190 = scmp.lt.s32.totalorder %s15, 1
      %s191 = scalar_select %p190, %s15, 1
      %s192 = scalar_lea.vmem %s3, %s191
      %v193 = vld [vmem:[%s181] sm:$0xff]
      %v195 = vrot.slane %v193, 6
      %v197 = vsub.f32 %v193, %v195
      %v199 = vrot.slane %v197, 1
      %v201 = vmul.f32 %v197, %v199
      %vm202 = vcmp.gt.f32.partialorder %v193, 0.5
      %v203 = vsel %vm202, 1.0, 0.0
      %v204 = vlaneseq
      %v205 = vand.u32 %v204, 127
      %v206 = vlaneseq
      %v207 = vshrl.u32 %v206, 7
      %v208 = vsub.s32 %v205, %v207
      %v209 = vld [vmem:[%s186] sm:$0xff]
      %211 = vrot.lane.b32.xlu0 %v209, 2
      %v212 = vpop.permute.xlu0 %211
      %v214 = vsub.f32 %v209, %v212
      %216 = vrot.lane.b32.xlu0 %v214, 127
      %v217 = vpop.permute.xlu0 %216
      %v219 = vmul.f32 %v214, %v217
      %220 = vset.pattern.permute.xlu0 0
      %221 = vperm.xlu0 %220, %v209
      %v222 = vpop.permute.xlu0 %221
      %v224 = vperm.slane %v193, 0
      %v225 = vmax.f32 %v222, %v224
      %226 = vset.pattern.permute.xlu0 1
      %227 = vperm.xlu0 %226, %v209
      %v228 = vpop.permute.xlu0 %227
      %v230 = vperm.slane %v193, 1
      %v231 = vmax.f32 %v228, %v230
      %232 = vset.pattern.permute.xlu0 2
      %233 = vperm.xlu0 %232, %v209
      %v234 = vpop.permute.xlu0 %233
      %v236 = vperm.slane %v193, 2
      %v237 = vmin.f32 %v234, %v236
      %238 = vset.pattern.permute.xlu0 3
      %239 = vperm.xlu0 %238, %v209
      %v240 = vpop.permute.xlu0 %239
      %v242 = vperm.slane %v193, 3
      %v243 = vmin.f32 %v240, %v242
      %v244 = vsub.f32 %v237, %v225
      %v245 = vmax.f32 %v244, 0.0
      %v246 = vsub.f32 %v243, %v231
      %v247 = vmax.f32 %v246, 0.0
      %v248 = vmul.f32 %v245, %v247
      %250 = vset.pattern.permute.xlu0 2
      %251 = vperm.xlu0 %250, %v219
      %v252 = vpop.permute.xlu0 %251
      %v254 = vperm.slane %v201, 2
      %v255 = vadd.f32 %v252, %v254
      %v256 = vsub.f32 %v255, %v248
      %v257 = vmul.f32 %v256, 0.5
      %vm258 = vcmp.gt.f32.partialorder %v248, %v257
      %vm259 = vcmp.gt.f32.partialorder %v248, 0.0
      %vm260 = vmand %vm258, %vm259
      %vm261 = vcmp.gt.s32.totalorder %v208, 0
      %vm262 = vmand %vm260, %vm261
      %v263 = vsel %vm262, 1.0, 0.0
      %v265 = vrot.slane %v203, 4
      %v267 = vmul.f32 %v263, %v265
      %268 = vset.pattern.permute.xlu0 0
      %269 = vperm.xlu0 %268, %v203
      %v270 = vpop.permute.xlu0 %269
      %v273 = vrot.slane %v267, 4
      %v275 = vmul.f32 %v270, %v273
      %v276 = vsub.f32 %v203, %v275
      %v278 = vrot.slane %v276, 3
      %v280 = vmul.f32 %v263, %v278
      %281 = vset.pattern.permute.xlu0 1
      %282 = vperm.xlu0 %281, %v276
      %v283 = vpop.permute.xlu0 %282
      %v286 = vrot.slane %v280, 5
      %v288 = vmul.f32 %v283, %v286
      %v289 = vsub.f32 %v276, %v288
      %v291 = vrot.slane %v289, 2
      %v293 = vmul.f32 %v263, %v291
      %294 = vset.pattern.permute.xlu0 2
      %295 = vperm.xlu0 %294, %v289
      %v296 = vpop.permute.xlu0 %295
      %v299 = vrot.slane %v293, 6
      %v301 = vmul.f32 %v296, %v299
      %v302 = vsub.f32 %v289, %v301
      %v304 = vrot.slane %v302, 1
      %v306 = vmul.f32 %v263, %v304
      %307 = vset.pattern.permute.xlu0 3
      %308 = vperm.xlu0 %307, %v302
      %v309 = vpop.permute.xlu0 %308
      %v312 = vrot.slane %v306, 7
      %v314 = vmul.f32 %v309, %v312
      %v315 = vsub.f32 %v302, %v314
      %v316 = vmul.f32 %v263, %v315
      %318 = vset.pattern.permute.xlu0 4
      %319 = vperm.xlu0 %318, %v315
      %v320 = vpop.permute.xlu0 %319
      %v322 = vmul.f32 %v320, %v316
      %v323 = vsub.f32 %v315, %v322
      %v325 = vrot.slane %v323, 7
      %v327 = vmul.f32 %v263, %v325
      %328 = vset.pattern.permute.xlu0 5
      %329 = vperm.xlu0 %328, %v323
      %v330 = vpop.permute.xlu0 %329
      %v333 = vrot.slane %v327, 1
      %v335 = vmul.f32 %v330, %v333
      %v336 = vsub.f32 %v323, %v335
      %v338 = vrot.slane %v336, 6
      %v340 = vmul.f32 %v263, %v338
      %341 = vset.pattern.permute.xlu0 6
      %342 = vperm.xlu0 %341, %v336
      %v343 = vpop.permute.xlu0 %342
      %v346 = vrot.slane %v340, 2
      %v348 = vmul.f32 %v343, %v346
      %v349 = vsub.f32 %v336, %v348
      %v351 = vrot.slane %v349, 5
      %v353 = vmul.f32 %v263, %v351
      %354 = vset.pattern.permute.xlu0 7
      %355 = vperm.xlu0 %354, %v349
      %v356 = vpop.permute.xlu0 %355
      %v359 = vrot.slane %v353, 3
      %v361 = vmul.f32 %v356, %v359
      %v362 = vsub.f32 %v349, %v361
      %v364 = vrot.slane %v362, 4
      %vm365 = vcmask 64512
      %v366 = vsel %vm365, %v364, 0
      %368 = vmatpush.msra.mxu0 0.0
      %369 = vmatpush.msra.mxu0 0.0
      %370 = vmatpush.msra.mxu0 0.0
      %371 = vmatpush.msra.mxu0 0.0
      %372 = vmatpush.msra.mxu0 0.0
      %373 = vmatpush.msra.mxu0 0.0
      %374 = vmatpush.msra.mxu0 0.0
      %375 = vmatpush.msra.mxu0 0.0
      %376 = vmatpush.msra.mxu0 0.0
      %377 = vmatpush.msra.mxu0 0.0
      %378 = vmatpush.msra.mxu0 0.0
      %379 = vmatpush.msra.mxu0 0.0
      %380 = vmatpush.msra.mxu0 0.0
      %381 = vmatpush.msra.mxu0 0.0
      %382 = vmatpush.msra.mxu0 0.0
      %383 = vmatpush.msra.mxu0 %v263
      %384 = vmatmul.f32.gmra.mxu0 %v366
      %v385 = vpop.f32.mrf.mxu0
      %v386 = vadd.f32 0.0, %v385
      %387 = vdwg.mxu0
      %vm388 = vcmp.gt.f32.partialorder %v386, 0.0
      %v389 = vsel %vm388, 0.0, 1.0
      %v391 = vrot.slane %v389, 4
      %v393 = vmul.f32 %v203, %v391
      %v394 = vld [vmem:[%s186 + $0x8] sm:$0xff]
      %396 = vrot.lane.b32.xlu0 %v394, 2
      %v397 = vpop.permute.xlu0 %396
      %v399 = vsub.f32 %v394, %v397
      %401 = vrot.lane.b32.xlu0 %v399, 127
      %v402 = vpop.permute.xlu0 %401
      %v404 = vmul.f32 %v399, %v402
      %405 = vset.pattern.permute.xlu0 0
      %406 = vperm.xlu0 %405, %v394
      %v407 = vpop.permute.xlu0 %406
      %v409 = vmax.f32 %v407, %v224
      %410 = vset.pattern.permute.xlu0 1
      %411 = vperm.xlu0 %410, %v394
      %v412 = vpop.permute.xlu0 %411
      %v414 = vmax.f32 %v412, %v230
      %415 = vset.pattern.permute.xlu0 2
      %416 = vperm.xlu0 %415, %v394
      %v417 = vpop.permute.xlu0 %416
      %v419 = vmin.f32 %v417, %v236
      %420 = vset.pattern.permute.xlu0 3
      %421 = vperm.xlu0 %420, %v394
      %v422 = vpop.permute.xlu0 %421
      %v424 = vmin.f32 %v422, %v242
      %v425 = vsub.f32 %v419, %v409
      %v426 = vmax.f32 %v425, 0.0
      %v427 = vsub.f32 %v424, %v414
      %v428 = vmax.f32 %v427, 0.0
      %v429 = vmul.f32 %v426, %v428
      %431 = vset.pattern.permute.xlu0 2
      %432 = vperm.xlu0 %431, %v404
      %v433 = vpop.permute.xlu0 %432
      %v435 = vadd.f32 %v433, %v254
      %v436 = vsub.f32 %v435, %v429
      %v437 = vmul.f32 %v436, 0.5
      %vm438 = vcmp.gt.f32.partialorder %v429, %v437
      %vm439 = vcmp.gt.f32.partialorder %v429, 0.0
      %vm440 = vmand %vm438, %vm439
      %vm441 = vcmp.gt.s32.totalorder %v208, 8
      %vm442 = vmand %vm440, %vm441
      %v443 = vsel %vm442, 1.0, 0.0
      %v445 = vrot.slane %v393, 4
      %v447 = vmul.f32 %v443, %v445
      %448 = vset.pattern.permute.xlu0 8
      %449 = vperm.xlu0 %448, %v393
      %v450 = vpop.permute.xlu0 %449
      %v453 = vrot.slane %v447, 4
      %454 = vrot.lane.b32.xlu0 %v453, 120
      %v455 = vpop.permute.xlu0 %454
      %v457 = vmul.f32 %v450, %v455
      %459 = vrot.lane.b32.xlu0 %v457, 8
      %v460 = vpop.permute.xlu0 %459
      %v462 = vsub.f32 %v393, %v460
      %v464 = vrot.slane %v462, 3
      %v466 = vmul.f32 %v443, %v464
      %467 = vset.pattern.permute.xlu0 9
      %468 = vperm.xlu0 %467, %v462
      %v469 = vpop.permute.xlu0 %468
      %v472 = vrot.slane %v466, 5
      %473 = vrot.lane.b32.xlu0 %v472, 120
      %v474 = vpop.permute.xlu0 %473
      %v476 = vmul.f32 %v469, %v474
      %478 = vrot.lane.b32.xlu0 %v476, 8
      %v479 = vpop.permute.xlu0 %478
      %v481 = vsub.f32 %v462, %v479
      %v483 = vrot.slane %v481, 2
      %v485 = vmul.f32 %v443, %v483
      %486 = vset.pattern.permute.xlu0 10
      %487 = vperm.xlu0 %486, %v481
      %v488 = vpop.permute.xlu0 %487
      %v491 = vrot.slane %v485, 6
      %492 = vrot.lane.b32.xlu0 %v491, 120
      %v493 = vpop.permute.xlu0 %492
      %v495 = vmul.f32 %v488, %v493
      %497 = vrot.lane.b32.xlu0 %v495, 8
      %v498 = vpop.permute.xlu0 %497
      %v500 = vsub.f32 %v481, %v498
      %v502 = vrot.slane %v500, 1
      %v504 = vmul.f32 %v443, %v502
      %505 = vset.pattern.permute.xlu0 11
      %506 = vperm.xlu0 %505, %v500
      %v507 = vpop.permute.xlu0 %506
      %v510 = vrot.slane %v504, 7
      %511 = vrot.lane.b32.xlu0 %v510, 120
      %v512 = vpop.permute.xlu0 %511
      %v514 = vmul.f32 %v507, %v512
      %516 = vrot.lane.b32.xlu0 %v514, 8
      %v517 = vpop.permute.xlu0 %516
      %v519 = vsub.f32 %v500, %v517
      %v520 = vmul.f32 %v443, %v519
      %522 = vset.pattern.permute.xlu0 12
      %523 = vperm.xlu0 %522, %v519
      %v524 = vpop.permute.xlu0 %523
      %v526 = vmul.f32 %v524, %v520
      %v527 = vsub.f32 %v519, %v526
      %v529 = vrot.slane %v527, 7
      %v531 = vmul.f32 %v443, %v529
      %532 = vset.pattern.permute.xlu0 13
      %533 = vperm.xlu0 %532, %v527
      %v534 = vpop.permute.xlu0 %533
      %v537 = vrot.slane %v531, 1
      %538 = vrot.lane.b32.xlu0 %v537, 120
      %v539 = vpop.permute.xlu0 %538
      %v541 = vmul.f32 %v534, %v539
      %543 = vrot.lane.b32.xlu0 %v541, 8
      %v544 = vpop.permute.xlu0 %543
      %v546 = vsub.f32 %v527, %v544
      %v548 = vrot.slane %v546, 6
      %v550 = vmul.f32 %v443, %v548
      %551 = vset.pattern.permute.xlu0 14
      %552 = vperm.xlu0 %551, %v546
      %v553 = vpop.permute.xlu0 %552
      %v556 = vrot.slane %v550, 2
      %557 = vrot.lane.b32.xlu0 %v556, 120
      %v558 = vpop.permute.xlu0 %557
      %v560 = vmul.f32 %v553, %v558
      %562 = vrot.lane.b32.xlu0 %v560, 8
      %v563 = vpop.permute.xlu0 %562
      %v565 = vsub.f32 %v546, %v563
      %v567 = vrot.slane %v565, 5
      %v569 = vmul.f32 %v443, %v567
      %570 = vset.pattern.permute.xlu0 15
      %571 = vperm.xlu0 %570, %v565
      %v572 = vpop.permute.xlu0 %571
      %v575 = vrot.slane %v569, 3
      %576 = vrot.lane.b32.xlu0 %v575, 120
      %v577 = vpop.permute.xlu0 %576
      %v579 = vmul.f32 %v572, %v577
      %581 = vrot.lane.b32.xlu0 %v579, 8
      %v582 = vpop.permute.xlu0 %581
      %v584 = vsub.f32 %v565, %v582
      %v586 = vrot.slane %v584, 4
      %587 = vrot.lane.b32.xlu0 %v586, 120
      %v588 = vpop.permute.xlu0 %587
      %v589 = vsel %vm365, %v588, 0
      %591 = vmatpush.msra.mxu0 0.0
      %592 = vmatpush.msra.mxu0 0.0
      %593 = vmatpush.msra.mxu0 0.0
      %594 = vmatpush.msra.mxu0 0.0
      %595 = vmatpush.msra.mxu0 0.0
      %596 = vmatpush.msra.mxu0 0.0
      %597 = vmatpush.msra.mxu0 0.0
      %598 = vmatpush.msra.mxu0 0.0
      %599 = vmatpush.msra.mxu0 0.0
      %600 = vmatpush.msra.mxu0 0.0
      %601 = vmatpush.msra.mxu0 0.0
      %602 = vmatpush.msra.mxu0 0.0
      %603 = vmatpush.msra.mxu0 0.0
      %604 = vmatpush.msra.mxu0 0.0
      %605 = vmatpush.msra.mxu0 0.0
      %606 = vmatpush.msra.mxu0 %v443
      %607 = vmatmul.f32.gmra.mxu0 %v589
      %v608 = vpop.f32.mrf.mxu0
      %v609 = vadd.f32 0.0, %v608
      %610 = vdwg.mxu0
      %vm611 = vcmp.gt.f32.partialorder %v609, 0.0
      %v612 = vsel %vm611, 0.0, 1.0
      %v614 = vrot.slane %v612, 4
      %v616 = vmul.f32 %v393, %v614
      %v617 = vld [vmem:[%s186 + $0x10] sm:$0xff]
      %619 = vrot.lane.b32.xlu0 %v617, 2
      %v620 = vpop.permute.xlu0 %619
      %v622 = vsub.f32 %v617, %v620
      %624 = vrot.lane.b32.xlu0 %v622, 127
      %v625 = vpop.permute.xlu0 %624
      %v627 = vmul.f32 %v622, %v625
      %628 = vset.pattern.permute.xlu0 0
      %629 = vperm.xlu0 %628, %v617
      %v630 = vpop.permute.xlu0 %629
      %v632 = vmax.f32 %v630, %v224
      %633 = vset.pattern.permute.xlu0 1
      %634 = vperm.xlu0 %633, %v617
      %v635 = vpop.permute.xlu0 %634
      %v637 = vmax.f32 %v635, %v230
      %638 = vset.pattern.permute.xlu0 2
      %639 = vperm.xlu0 %638, %v617
      %v640 = vpop.permute.xlu0 %639
      %v642 = vmin.f32 %v640, %v236
      %643 = vset.pattern.permute.xlu0 3
      %644 = vperm.xlu0 %643, %v617
      %v645 = vpop.permute.xlu0 %644
      %v647 = vmin.f32 %v645, %v242
      %v648 = vsub.f32 %v642, %v632
      %v649 = vmax.f32 %v648, 0.0
      %v650 = vsub.f32 %v647, %v637
      %v651 = vmax.f32 %v650, 0.0
      %v652 = vmul.f32 %v649, %v651
      %654 = vset.pattern.permute.xlu0 2
      %655 = vperm.xlu0 %654, %v627
      %v656 = vpop.permute.xlu0 %655
      %v658 = vadd.f32 %v656, %v254
      %v659 = vsub.f32 %v658, %v652
      %v660 = vmul.f32 %v659, 0.5
      %vm661 = vcmp.gt.f32.partialorder %v652, %v660
      %vm662 = vcmp.gt.f32.partialorder %v652, 0.0
      %vm663 = vmand %vm661, %vm662
      %vm664 = vcmp.gt.s32.totalorder %v208, 16
      %vm665 = vmand %vm663, %vm664
      %v666 = vsel %vm665, 1.0, 0.0
      %v668 = vrot.slane %v616, 4
      %v670 = vmul.f32 %v666, %v668
      %671 = vset.pattern.permute.xlu0 16
      %672 = vperm.xlu0 %671, %v616
      %v673 = vpop.permute.xlu0 %672
      %v676 = vrot.slane %v670, 4
      %677 = vrot.lane.b32.xlu0 %v676, 112
      %v678 = vpop.permute.xlu0 %677
      %v680 = vmul.f32 %v673, %v678
      %682 = vrot.lane.b32.xlu0 %v680, 16
      %v683 = vpop.permute.xlu0 %682
      %v685 = vsub.f32 %v616, %v683
      %v687 = vrot.slane %v685, 3
      %v689 = vmul.f32 %v666, %v687
      %690 = vset.pattern.permute.xlu0 17
      %691 = vperm.xlu0 %690, %v685
      %v692 = vpop.permute.xlu0 %691
      %v695 = vrot.slane %v689, 5
      %696 = vrot.lane.b32.xlu0 %v695, 112
      %v697 = vpop.permute.xlu0 %696
      %v699 = vmul.f32 %v692, %v697
      %701 = vrot.lane.b32.xlu0 %v699, 16
      %v702 = vpop.permute.xlu0 %701
      %v704 = vsub.f32 %v685, %v702
      %v706 = vrot.slane %v704, 2
      %v708 = vmul.f32 %v666, %v706
      %709 = vset.pattern.permute.xlu0 18
      %710 = vperm.xlu0 %709, %v704
      %v711 = vpop.permute.xlu0 %710
      %v714 = vrot.slane %v708, 6
      %715 = vrot.lane.b32.xlu0 %v714, 112
      %v716 = vpop.permute.xlu0 %715
      %v718 = vmul.f32 %v711, %v716
      %720 = vrot.lane.b32.xlu0 %v718, 16
      %v721 = vpop.permute.xlu0 %720
      %v723 = vsub.f32 %v704, %v721
      %v725 = vrot.slane %v723, 1
      %v727 = vmul.f32 %v666, %v725
      %728 = vset.pattern.permute.xlu0 19
      %729 = vperm.xlu0 %728, %v723
      %v730 = vpop.permute.xlu0 %729
      %v733 = vrot.slane %v727, 7
      %734 = vrot.lane.b32.xlu0 %v733, 112
      %v735 = vpop.permute.xlu0 %734
      %v737 = vmul.f32 %v730, %v735
      %739 = vrot.lane.b32.xlu0 %v737, 16
      %v740 = vpop.permute.xlu0 %739
      %v742 = vsub.f32 %v723, %v740
      %v743 = vmul.f32 %v666, %v742
      %745 = vset.pattern.permute.xlu0 20
      %746 = vperm.xlu0 %745, %v742
      %v747 = vpop.permute.xlu0 %746
      %v749 = vmul.f32 %v747, %v743
      %v750 = vsub.f32 %v742, %v749
      %v752 = vrot.slane %v750, 7
      %v754 = vmul.f32 %v666, %v752
      %755 = vset.pattern.permute.xlu0 21
      %756 = vperm.xlu0 %755, %v750
      %v757 = vpop.permute.xlu0 %756
      %v760 = vrot.slane %v754, 1
      %761 = vrot.lane.b32.xlu0 %v760, 112
      %v762 = vpop.permute.xlu0 %761
      %v764 = vmul.f32 %v757, %v762
      %766 = vrot.lane.b32.xlu0 %v764, 16
      %v767 = vpop.permute.xlu0 %766
      %v769 = vsub.f32 %v750, %v767
      %v771 = vrot.slane %v769, 6
      %v773 = vmul.f32 %v666, %v771
      %774 = vset.pattern.permute.xlu0 22
      %775 = vperm.xlu0 %774, %v769
      %v776 = vpop.permute.xlu0 %775
      %v779 = vrot.slane %v773, 2
      %780 = vrot.lane.b32.xlu0 %v779, 112
      %v781 = vpop.permute.xlu0 %780
      %v783 = vmul.f32 %v776, %v781
      %785 = vrot.lane.b32.xlu0 %v783, 16
      %v786 = vpop.permute.xlu0 %785
      %v788 = vsub.f32 %v769, %v786
      %v790 = vrot.slane %v788, 5
      %v792 = vmul.f32 %v666, %v790
      %793 = vset.pattern.permute.xlu0 23
      %794 = vperm.xlu0 %793, %v788
      %v795 = vpop.permute.xlu0 %794
      %v798 = vrot.slane %v792, 3
      %799 = vrot.lane.b32.xlu0 %v798, 112
      %v800 = vpop.permute.xlu0 %799
      %v802 = vmul.f32 %v795, %v800
      %804 = vrot.lane.b32.xlu0 %v802, 16
      %v805 = vpop.permute.xlu0 %804
      %v807 = vsub.f32 %v788, %v805
      %v809 = vrot.slane %v807, 4
      %810 = vrot.lane.b32.xlu0 %v809, 112
      %v811 = vpop.permute.xlu0 %810
      %v812 = vsel %vm365, %v811, 0
      %814 = vmatpush.msra.mxu0 0.0
      %815 = vmatpush.msra.mxu0 0.0
      %816 = vmatpush.msra.mxu0 0.0
      %817 = vmatpush.msra.mxu0 0.0
      %818 = vmatpush.msra.mxu0 0.0
      %819 = vmatpush.msra.mxu0 0.0
      %820 = vmatpush.msra.mxu0 0.0
      %821 = vmatpush.msra.mxu0 0.0
      %822 = vmatpush.msra.mxu0 0.0
      %823 = vmatpush.msra.mxu0 0.0
      %824 = vmatpush.msra.mxu0 0.0
      %825 = vmatpush.msra.mxu0 0.0
      %826 = vmatpush.msra.mxu0 0.0
      %827 = vmatpush.msra.mxu0 0.0
      %828 = vmatpush.msra.mxu0 0.0
      %829 = vmatpush.msra.mxu0 %v666
      %830 = vmatmul.f32.gmra.mxu0 %v812
      %v831 = vpop.f32.mrf.mxu0
      %v832 = vadd.f32 0.0, %v831
      %833 = vdwg.mxu0
      %vm834 = vcmp.gt.f32.partialorder %v832, 0.0
      %v835 = vsel %vm834, 0.0, 1.0
      %v837 = vrot.slane %v835, 4
      %v839 = vmul.f32 %v616, %v837
      %v840 = vld [vmem:[%s186 + $0x18] sm:$0xff]
      %842 = vrot.lane.b32.xlu0 %v840, 2
      %v843 = vpop.permute.xlu0 %842
      %v845 = vsub.f32 %v840, %v843
      %847 = vrot.lane.b32.xlu0 %v845, 127
      %v848 = vpop.permute.xlu0 %847
      %v850 = vmul.f32 %v845, %v848
      %851 = vset.pattern.permute.xlu0 0
      %852 = vperm.xlu0 %851, %v840
      %v853 = vpop.permute.xlu0 %852
      %v855 = vmax.f32 %v853, %v224
      %856 = vset.pattern.permute.xlu0 1
      %857 = vperm.xlu0 %856, %v840
      %v858 = vpop.permute.xlu0 %857
      %v860 = vmax.f32 %v858, %v230
      %861 = vset.pattern.permute.xlu0 2
      %862 = vperm.xlu0 %861, %v840
      %v863 = vpop.permute.xlu0 %862
      %v865 = vmin.f32 %v863, %v236
      %866 = vset.pattern.permute.xlu0 3
      %867 = vperm.xlu0 %866, %v840
      %v868 = vpop.permute.xlu0 %867
      %v870 = vmin.f32 %v868, %v242
      %v871 = vsub.f32 %v865, %v855
      %v872 = vmax.f32 %v871, 0.0
      %v873 = vsub.f32 %v870, %v860
      %v874 = vmax.f32 %v873, 0.0
      %v875 = vmul.f32 %v872, %v874
      %877 = vset.pattern.permute.xlu0 2
      %878 = vperm.xlu0 %877, %v850
      %v879 = vpop.permute.xlu0 %878
      %v881 = vadd.f32 %v879, %v254
      %v882 = vsub.f32 %v881, %v875
      %v883 = vmul.f32 %v882, 0.5
      %vm884 = vcmp.gt.f32.partialorder %v875, %v883
      %vm885 = vcmp.gt.f32.partialorder %v875, 0.0
      %vm886 = vmand %vm884, %vm885
      %vm887 = vcmp.gt.s32.totalorder %v208, 24
      %vm888 = vmand %vm886, %vm887
      %v889 = vsel %vm888, 1.0, 0.0
      %v891 = vrot.slane %v839, 4
      %v893 = vmul.f32 %v889, %v891
      %894 = vset.pattern.permute.xlu0 24
      %895 = vperm.xlu0 %894, %v839
      %v896 = vpop.permute.xlu0 %895
      %v899 = vrot.slane %v893, 4
      %900 = vrot.lane.b32.xlu0 %v899, 104
      %v901 = vpop.permute.xlu0 %900
      %v903 = vmul.f32 %v896, %v901
      %905 = vrot.lane.b32.xlu0 %v903, 24
      %v906 = vpop.permute.xlu0 %905
      %v908 = vsub.f32 %v839, %v906
      %v910 = vrot.slane %v908, 3
      %v912 = vmul.f32 %v889, %v910
      %913 = vset.pattern.permute.xlu0 25
      %914 = vperm.xlu0 %913, %v908
      %v915 = vpop.permute.xlu0 %914
      %v918 = vrot.slane %v912, 5
      %919 = vrot.lane.b32.xlu0 %v918, 104
      %v920 = vpop.permute.xlu0 %919
      %v922 = vmul.f32 %v915, %v920
      %924 = vrot.lane.b32.xlu0 %v922, 24
      %v925 = vpop.permute.xlu0 %924
      %v927 = vsub.f32 %v908, %v925
      %v929 = vrot.slane %v927, 2
      %v931 = vmul.f32 %v889, %v929
      %932 = vset.pattern.permute.xlu0 26
      %933 = vperm.xlu0 %932, %v927
      %v934 = vpop.permute.xlu0 %933
      %v937 = vrot.slane %v931, 6
      %938 = vrot.lane.b32.xlu0 %v937, 104
      %v939 = vpop.permute.xlu0 %938
      %v941 = vmul.f32 %v934, %v939
      %943 = vrot.lane.b32.xlu0 %v941, 24
      %v944 = vpop.permute.xlu0 %943
      %v946 = vsub.f32 %v927, %v944
      %v948 = vrot.slane %v946, 1
      %v950 = vmul.f32 %v889, %v948
      %951 = vset.pattern.permute.xlu0 27
      %952 = vperm.xlu0 %951, %v946
      %v953 = vpop.permute.xlu0 %952
      %v956 = vrot.slane %v950, 7
      %957 = vrot.lane.b32.xlu0 %v956, 104
      %v958 = vpop.permute.xlu0 %957
      %v960 = vmul.f32 %v953, %v958
      %962 = vrot.lane.b32.xlu0 %v960, 24
      %v963 = vpop.permute.xlu0 %962
      %v965 = vsub.f32 %v946, %v963
      %v966 = vmul.f32 %v889, %v965
      %968 = vset.pattern.permute.xlu0 28
      %969 = vperm.xlu0 %968, %v965
      %v970 = vpop.permute.xlu0 %969
      %v972 = vmul.f32 %v970, %v966
      %v973 = vsub.f32 %v965, %v972
      %v975 = vrot.slane %v973, 7
      %v977 = vmul.f32 %v889, %v975
      %978 = vset.pattern.permute.xlu0 29
      %979 = vperm.xlu0 %978, %v973
      %v980 = vpop.permute.xlu0 %979
      %v983 = vrot.slane %v977, 1
      %984 = vrot.lane.b32.xlu0 %v983, 104
      %v985 = vpop.permute.xlu0 %984
      %v987 = vmul.f32 %v980, %v985
      %989 = vrot.lane.b32.xlu0 %v987, 24
      %v990 = vpop.permute.xlu0 %989
      %v992 = vsub.f32 %v973, %v990
      %v994 = vrot.slane %v992, 6
      %v996 = vmul.f32 %v889, %v994
      %997 = vset.pattern.permute.xlu0 30
      %998 = vperm.xlu0 %997, %v992
      %v999 = vpop.permute.xlu0 %998
      %v1002 = vrot.slane %v996, 2
      %1003 = vrot.lane.b32.xlu0 %v1002, 104
      %v1004 = vpop.permute.xlu0 %1003
      %v1006 = vmul.f32 %v999, %v1004
      %1008 = vrot.lane.b32.xlu0 %v1006, 24
      %v1009 = vpop.permute.xlu0 %1008
      %v1011 = vsub.f32 %v992, %v1009
      %v1013 = vrot.slane %v1011, 5
      %v1015 = vmul.f32 %v889, %v1013
      %1016 = vset.pattern.permute.xlu0 31
      %1017 = vperm.xlu0 %1016, %v1011
      %v1018 = vpop.permute.xlu0 %1017
      %v1021 = vrot.slane %v1015, 3
      %1022 = vrot.lane.b32.xlu0 %v1021, 104
      %v1023 = vpop.permute.xlu0 %1022
      %v1025 = vmul.f32 %v1018, %v1023
      %1027 = vrot.lane.b32.xlu0 %v1025, 24
      %v1028 = vpop.permute.xlu0 %1027
      %v1030 = vsub.f32 %v1011, %v1028
      %v1032 = vrot.slane %v1030, 4
      %1033 = vrot.lane.b32.xlu0 %v1032, 104
      %v1034 = vpop.permute.xlu0 %1033
      %v1035 = vsel %vm365, %v1034, 0
      %1037 = vmatpush.msra.mxu0 0.0
      %1038 = vmatpush.msra.mxu0 0.0
      %1039 = vmatpush.msra.mxu0 0.0
      %1040 = vmatpush.msra.mxu0 0.0
      %1041 = vmatpush.msra.mxu0 0.0
      %1042 = vmatpush.msra.mxu0 0.0
      %1043 = vmatpush.msra.mxu0 0.0
      %1044 = vmatpush.msra.mxu0 0.0
      %1045 = vmatpush.msra.mxu0 0.0
      %1046 = vmatpush.msra.mxu0 0.0
      %1047 = vmatpush.msra.mxu0 0.0
      %1048 = vmatpush.msra.mxu0 0.0
      %1049 = vmatpush.msra.mxu0 0.0
      %1050 = vmatpush.msra.mxu0 0.0
      %1051 = vmatpush.msra.mxu0 0.0
      %1052 = vmatpush.msra.mxu0 %v889
      %1053 = vmatmul.f32.gmra.mxu0 %v1035
      %v1054 = vpop.f32.mrf.mxu0
      %v1055 = vadd.f32 0.0, %v1054
      %1056 = vdwg.mxu0
      %vm1057 = vcmp.gt.f32.partialorder %v1055, 0.0
      %v1058 = vsel %vm1057, 0.0, 1.0
      %v1060 = vrot.slane %v1058, 4
      %v1062 = vmul.f32 %v839, %v1060
      %v1063 = vld [vmem:[%s186 + $0x20] sm:$0xff]
      %1065 = vrot.lane.b32.xlu0 %v1063, 2
      %v1066 = vpop.permute.xlu0 %1065
      %v1068 = vsub.f32 %v1063, %v1066
      %1070 = vrot.lane.b32.xlu0 %v1068, 127
      %v1071 = vpop.permute.xlu0 %1070
      %v1073 = vmul.f32 %v1068, %v1071
      %1074 = vset.pattern.permute.xlu0 0
      %1075 = vperm.xlu0 %1074, %v1063
      %v1076 = vpop.permute.xlu0 %1075
      %v1078 = vmax.f32 %v1076, %v224
      %1079 = vset.pattern.permute.xlu0 1
      %1080 = vperm.xlu0 %1079, %v1063
      %v1081 = vpop.permute.xlu0 %1080
      %v1083 = vmax.f32 %v1081, %v230
      %1084 = vset.pattern.permute.xlu0 2
      %1085 = vperm.xlu0 %1084, %v1063
      %v1086 = vpop.permute.xlu0 %1085
      %v1088 = vmin.f32 %v1086, %v236
      %1089 = vset.pattern.permute.xlu0 3
      %1090 = vperm.xlu0 %1089, %v1063
      %v1091 = vpop.permute.xlu0 %1090
      %v1093 = vmin.f32 %v1091, %v242
      %v1094 = vsub.f32 %v1088, %v1078
      %v1095 = vmax.f32 %v1094, 0.0
      %v1096 = vsub.f32 %v1093, %v1083
      %v1097 = vmax.f32 %v1096, 0.0
      %v1098 = vmul.f32 %v1095, %v1097
      %1100 = vset.pattern.permute.xlu0 2
      %1101 = vperm.xlu0 %1100, %v1073
      %v1102 = vpop.permute.xlu0 %1101
      %v1104 = vadd.f32 %v1102, %v254
      %v1105 = vsub.f32 %v1104, %v1098
      %v1106 = vmul.f32 %v1105, 0.5
      %vm1107 = vcmp.gt.f32.partialorder %v1098, %v1106
      %vm1108 = vcmp.gt.f32.partialorder %v1098, 0.0
      %vm1109 = vmand %vm1107, %vm1108
      %vm1110 = vcmp.gt.s32.totalorder %v208, 32
      %vm1111 = vmand %vm1109, %vm1110
      %v1112 = vsel %vm1111, 1.0, 0.0
      %v1114 = vrot.slane %v1062, 4
      %v1116 = vmul.f32 %v1112, %v1114
      %1117 = vset.pattern.permute.xlu0 32
      %1118 = vperm.xlu0 %1117, %v1062
      %v1119 = vpop.permute.xlu0 %1118
      %v1122 = vrot.slane %v1116, 4
      %1123 = vrot.lane.b32.xlu0 %v1122, 96
      %v1124 = vpop.permute.xlu0 %1123
      %v1126 = vmul.f32 %v1119, %v1124
      %1128 = vrot.lane.b32.xlu0 %v1126, 32
      %v1129 = vpop.permute.xlu0 %1128
      %v1131 = vsub.f32 %v1062, %v1129
      %v1133 = vrot.slane %v1131, 3
      %v1135 = vmul.f32 %v1112, %v1133
      %1136 = vset.pattern.permute.xlu0 33
      %1137 = vperm.xlu0 %1136, %v1131
      %v1138 = vpop.permute.xlu0 %1137
      %v1141 = vrot.slane %v1135, 5
      %1142 = vrot.lane.b32.xlu0 %v1141, 96
      %v1143 = vpop.permute.xlu0 %1142
      %v1145 = vmul.f32 %v1138, %v1143
      %1147 = vrot.lane.b32.xlu0 %v1145, 32
      %v1148 = vpop.permute.xlu0 %1147
      %v1150 = vsub.f32 %v1131, %v1148
      %v1152 = vrot.slane %v1150, 2
      %v1154 = vmul.f32 %v1112, %v1152
      %1155 = vset.pattern.permute.xlu0 34
      %1156 = vperm.xlu0 %1155, %v1150
      %v1157 = vpop.permute.xlu0 %1156
      %v1160 = vrot.slane %v1154, 6
      %1161 = vrot.lane.b32.xlu0 %v1160, 96
      %v1162 = vpop.permute.xlu0 %1161
      %v1164 = vmul.f32 %v1157, %v1162
      %1166 = vrot.lane.b32.xlu0 %v1164, 32
      %v1167 = vpop.permute.xlu0 %1166
      %v1169 = vsub.f32 %v1150, %v1167
      %v1171 = vrot.slane %v1169, 1
      %v1173 = vmul.f32 %v1112, %v1171
      %1174 = vset.pattern.permute.xlu0 35
      %1175 = vperm.xlu0 %1174, %v1169
      %v1176 = vpop.permute.xlu0 %1175
      %v1179 = vrot.slane %v1173, 7
      %1180 = vrot.lane.b32.xlu0 %v1179, 96
      %v1181 = vpop.permute.xlu0 %1180
      %v1183 = vmul.f32 %v1176, %v1181
      %1185 = vrot.lane.b32.xlu0 %v1183, 32
      %v1186 = vpop.permute.xlu0 %1185
      %v1188 = vsub.f32 %v1169, %v1186
      %v1189 = vmul.f32 %v1112, %v1188
      %1191 = vset.pattern.permute.xlu0 36
      %1192 = vperm.xlu0 %1191, %v1188
      %v1193 = vpop.permute.xlu0 %1192
      %v1195 = vmul.f32 %v1193, %v1189
      %v1196 = vsub.f32 %v1188, %v1195
      %v1198 = vrot.slane %v1196, 7
      %v1200 = vmul.f32 %v1112, %v1198
      %1201 = vset.pattern.permute.xlu0 37
      %1202 = vperm.xlu0 %1201, %v1196
      %v1203 = vpop.permute.xlu0 %1202
      %v1206 = vrot.slane %v1200, 1
      %1207 = vrot.lane.b32.xlu0 %v1206, 96
      %v1208 = vpop.permute.xlu0 %1207
      %v1210 = vmul.f32 %v1203, %v1208
      %1212 = vrot.lane.b32.xlu0 %v1210, 32
      %v1213 = vpop.permute.xlu0 %1212
      %v1215 = vsub.f32 %v1196, %v1213
      %v1217 = vrot.slane %v1215, 6
      %v1219 = vmul.f32 %v1112, %v1217
      %1220 = vset.pattern.permute.xlu0 38
      %1221 = vperm.xlu0 %1220, %v1215
      %v1222 = vpop.permute.xlu0 %1221
      %v1225 = vrot.slane %v1219, 2
      %1226 = vrot.lane.b32.xlu0 %v1225, 96
      %v1227 = vpop.permute.xlu0 %1226
      %v1229 = vmul.f32 %v1222, %v1227
      %1231 = vrot.lane.b32.xlu0 %v1229, 32
      %v1232 = vpop.permute.xlu0 %1231
      %v1234 = vsub.f32 %v1215, %v1232
      %v1236 = vrot.slane %v1234, 5
      %v1238 = vmul.f32 %v1112, %v1236
      %1239 = vset.pattern.permute.xlu0 39
      %1240 = vperm.xlu0 %1239, %v1234
      %v1241 = vpop.permute.xlu0 %1240
      %v1244 = vrot.slane %v1238, 3
      %1245 = vrot.lane.b32.xlu0 %v1244, 96
      %v1246 = vpop.permute.xlu0 %1245
      %v1248 = vmul.f32 %v1241, %v1246
      %1250 = vrot.lane.b32.xlu0 %v1248, 32
      %v1251 = vpop.permute.xlu0 %1250
      %v1253 = vsub.f32 %v1234, %v1251
      %v1255 = vrot.slane %v1253, 4
      %1256 = vrot.lane.b32.xlu0 %v1255, 96
      %v1257 = vpop.permute.xlu0 %1256
      %v1258 = vsel %vm365, %v1257, 0
      %1260 = vmatpush.msra.mxu0 0.0
      %1261 = vmatpush.msra.mxu0 0.0
      %1262 = vmatpush.msra.mxu0 0.0
      %1263 = vmatpush.msra.mxu0 0.0
      %1264 = vmatpush.msra.mxu0 0.0
      %1265 = vmatpush.msra.mxu0 0.0
      %1266 = vmatpush.msra.mxu0 0.0
      %1267 = vmatpush.msra.mxu0 0.0
      %1268 = vmatpush.msra.mxu0 0.0
      %1269 = vmatpush.msra.mxu0 0.0
      %1270 = vmatpush.msra.mxu0 0.0
      %1271 = vmatpush.msra.mxu0 0.0
      %1272 = vmatpush.msra.mxu0 0.0
      %1273 = vmatpush.msra.mxu0 0.0
      %1274 = vmatpush.msra.mxu0 0.0
      %1275 = vmatpush.msra.mxu0 %v1112
      %1276 = vmatmul.f32.gmra.mxu0 %v1258
      %v1277 = vpop.f32.mrf.mxu0
      %v1278 = vadd.f32 0.0, %v1277
      %1279 = vdwg.mxu0
      %vm1280 = vcmp.gt.f32.partialorder %v1278, 0.0
      %v1281 = vsel %vm1280, 0.0, 1.0
      %v1283 = vrot.slane %v1281, 4
      %v1285 = vmul.f32 %v1062, %v1283
      %v1286 = vld [vmem:[%s186 + $0x28] sm:$0xff]
      %1288 = vrot.lane.b32.xlu0 %v1286, 2
      %v1289 = vpop.permute.xlu0 %1288
      %v1291 = vsub.f32 %v1286, %v1289
      %1293 = vrot.lane.b32.xlu0 %v1291, 127
      %v1294 = vpop.permute.xlu0 %1293
      %v1296 = vmul.f32 %v1291, %v1294
      %1297 = vset.pattern.permute.xlu0 0
      %1298 = vperm.xlu0 %1297, %v1286
      %v1299 = vpop.permute.xlu0 %1298
      %v1301 = vmax.f32 %v1299, %v224
      %1302 = vset.pattern.permute.xlu0 1
      %1303 = vperm.xlu0 %1302, %v1286
      %v1304 = vpop.permute.xlu0 %1303
      %v1306 = vmax.f32 %v1304, %v230
      %1307 = vset.pattern.permute.xlu0 2
      %1308 = vperm.xlu0 %1307, %v1286
      %v1309 = vpop.permute.xlu0 %1308
      %v1311 = vmin.f32 %v1309, %v236
      %1312 = vset.pattern.permute.xlu0 3
      %1313 = vperm.xlu0 %1312, %v1286
      %v1314 = vpop.permute.xlu0 %1313
      %v1316 = vmin.f32 %v1314, %v242
      %v1317 = vsub.f32 %v1311, %v1301
      %v1318 = vmax.f32 %v1317, 0.0
      %v1319 = vsub.f32 %v1316, %v1306
      %v1320 = vmax.f32 %v1319, 0.0
      %v1321 = vmul.f32 %v1318, %v1320
      %1323 = vset.pattern.permute.xlu0 2
      %1324 = vperm.xlu0 %1323, %v1296
      %v1325 = vpop.permute.xlu0 %1324
      %v1327 = vadd.f32 %v1325, %v254
      %v1328 = vsub.f32 %v1327, %v1321
      %v1329 = vmul.f32 %v1328, 0.5
      %vm1330 = vcmp.gt.f32.partialorder %v1321, %v1329
      %vm1331 = vcmp.gt.f32.partialorder %v1321, 0.0
      %vm1332 = vmand %vm1330, %vm1331
      %vm1333 = vcmp.gt.s32.totalorder %v208, 40
      %vm1334 = vmand %vm1332, %vm1333
      %v1335 = vsel %vm1334, 1.0, 0.0
      %v1337 = vrot.slane %v1285, 4
      %v1339 = vmul.f32 %v1335, %v1337
      %1340 = vset.pattern.permute.xlu0 40
      %1341 = vperm.xlu0 %1340, %v1285
      %v1342 = vpop.permute.xlu0 %1341
      %v1345 = vrot.slane %v1339, 4
      %1346 = vrot.lane.b32.xlu0 %v1345, 88
      %v1347 = vpop.permute.xlu0 %1346
      %v1349 = vmul.f32 %v1342, %v1347
      %1351 = vrot.lane.b32.xlu0 %v1349, 40
      %v1352 = vpop.permute.xlu0 %1351
      %v1354 = vsub.f32 %v1285, %v1352
      %v1356 = vrot.slane %v1354, 3
      %v1358 = vmul.f32 %v1335, %v1356
      %1359 = vset.pattern.permute.xlu0 41
      %1360 = vperm.xlu0 %1359, %v1354
      %v1361 = vpop.permute.xlu0 %1360
      %v1364 = vrot.slane %v1358, 5
      %1365 = vrot.lane.b32.xlu0 %v1364, 88
      %v1366 = vpop.permute.xlu0 %1365
      %v1368 = vmul.f32 %v1361, %v1366
      %1370 = vrot.lane.b32.xlu0 %v1368, 40
      %v1371 = vpop.permute.xlu0 %1370
      %v1373 = vsub.f32 %v1354, %v1371
      %v1375 = vrot.slane %v1373, 2
      %v1377 = vmul.f32 %v1335, %v1375
      %1378 = vset.pattern.permute.xlu0 42
      %1379 = vperm.xlu0 %1378, %v1373
      %v1380 = vpop.permute.xlu0 %1379
      %v1383 = vrot.slane %v1377, 6
      %1384 = vrot.lane.b32.xlu0 %v1383, 88
      %v1385 = vpop.permute.xlu0 %1384
      %v1387 = vmul.f32 %v1380, %v1385
      %1389 = vrot.lane.b32.xlu0 %v1387, 40
      %v1390 = vpop.permute.xlu0 %1389
      %v1392 = vsub.f32 %v1373, %v1390
      %v1394 = vrot.slane %v1392, 1
      %v1396 = vmul.f32 %v1335, %v1394
      %1397 = vset.pattern.permute.xlu0 43
      %1398 = vperm.xlu0 %1397, %v1392
      %v1399 = vpop.permute.xlu0 %1398
      %v1402 = vrot.slane %v1396, 7
      %1403 = vrot.lane.b32.xlu0 %v1402, 88
      %v1404 = vpop.permute.xlu0 %1403
      %v1406 = vmul.f32 %v1399, %v1404
      %1408 = vrot.lane.b32.xlu0 %v1406, 40
      %v1409 = vpop.permute.xlu0 %1408
      %v1411 = vsub.f32 %v1392, %v1409
      %v1412 = vmul.f32 %v1335, %v1411
      %1414 = vset.pattern.permute.xlu0 44
      %1415 = vperm.xlu0 %1414, %v1411
      %v1416 = vpop.permute.xlu0 %1415
      %v1418 = vmul.f32 %v1416, %v1412
      %v1419 = vsub.f32 %v1411, %v1418
      %v1421 = vrot.slane %v1419, 7
      %v1423 = vmul.f32 %v1335, %v1421
      %1424 = vset.pattern.permute.xlu0 45
      %1425 = vperm.xlu0 %1424, %v1419
      %v1426 = vpop.permute.xlu0 %1425
      %v1429 = vrot.slane %v1423, 1
      %1430 = vrot.lane.b32.xlu0 %v1429, 88
      %v1431 = vpop.permute.xlu0 %1430
      %v1433 = vmul.f32 %v1426, %v1431
      %1435 = vrot.lane.b32.xlu0 %v1433, 40
      %v1436 = vpop.permute.xlu0 %1435
      %v1438 = vsub.f32 %v1419, %v1436
      %v1440 = vrot.slane %v1438, 6
      %v1442 = vmul.f32 %v1335, %v1440
      %1443 = vset.pattern.permute.xlu0 46
      %1444 = vperm.xlu0 %1443, %v1438
      %v1445 = vpop.permute.xlu0 %1444
      %v1448 = vrot.slane %v1442, 2
      %1449 = vrot.lane.b32.xlu0 %v1448, 88
      %v1450 = vpop.permute.xlu0 %1449
      %v1452 = vmul.f32 %v1445, %v1450
      %1454 = vrot.lane.b32.xlu0 %v1452, 40
      %v1455 = vpop.permute.xlu0 %1454
      %v1457 = vsub.f32 %v1438, %v1455
      %v1459 = vrot.slane %v1457, 5
      %v1461 = vmul.f32 %v1335, %v1459
      %1462 = vset.pattern.permute.xlu0 47
      %1463 = vperm.xlu0 %1462, %v1457
      %v1464 = vpop.permute.xlu0 %1463
      %v1467 = vrot.slane %v1461, 3
      %1468 = vrot.lane.b32.xlu0 %v1467, 88
      %v1469 = vpop.permute.xlu0 %1468
      %v1471 = vmul.f32 %v1464, %v1469
      %1473 = vrot.lane.b32.xlu0 %v1471, 40
      %v1474 = vpop.permute.xlu0 %1473
      %v1476 = vsub.f32 %v1457, %v1474
      %v1478 = vrot.slane %v1476, 4
      %1479 = vrot.lane.b32.xlu0 %v1478, 88
      %v1480 = vpop.permute.xlu0 %1479
      %v1481 = vsel %vm365, %v1480, 0
      %1483 = vmatpush.msra.mxu0 0.0
      %1484 = vmatpush.msra.mxu0 0.0
      %1485 = vmatpush.msra.mxu0 0.0
      %1486 = vmatpush.msra.mxu0 0.0
      %1487 = vmatpush.msra.mxu0 0.0
      %1488 = vmatpush.msra.mxu0 0.0
      %1489 = vmatpush.msra.mxu0 0.0
      %1490 = vmatpush.msra.mxu0 0.0
      %1491 = vmatpush.msra.mxu0 0.0
      %1492 = vmatpush.msra.mxu0 0.0
      %1493 = vmatpush.msra.mxu0 0.0
      %1494 = vmatpush.msra.mxu0 0.0
      %1495 = vmatpush.msra.mxu0 0.0
      %1496 = vmatpush.msra.mxu0 0.0
      %1497 = vmatpush.msra.mxu0 0.0
      %1498 = vmatpush.msra.mxu0 %v1335
      %1499 = vmatmul.f32.gmra.mxu0 %v1481
      %v1500 = vpop.f32.mrf.mxu0
      %v1501 = vadd.f32 0.0, %v1500
      %1502 = vdwg.mxu0
      %vm1503 = vcmp.gt.f32.partialorder %v1501, 0.0
      %v1504 = vsel %vm1503, 0.0, 1.0
      %v1506 = vrot.slane %v1504, 4
      %v1508 = vmul.f32 %v1285, %v1506
      %v1509 = vld [vmem:[%s186 + $0x30] sm:$0xff]
      %1511 = vrot.lane.b32.xlu0 %v1509, 2
      %v1512 = vpop.permute.xlu0 %1511
      %v1514 = vsub.f32 %v1509, %v1512
      %1516 = vrot.lane.b32.xlu0 %v1514, 127
      %v1517 = vpop.permute.xlu0 %1516
      %v1519 = vmul.f32 %v1514, %v1517
      %1520 = vset.pattern.permute.xlu0 0
      %1521 = vperm.xlu0 %1520, %v1509
      %v1522 = vpop.permute.xlu0 %1521
      %v1524 = vmax.f32 %v1522, %v224
      %1525 = vset.pattern.permute.xlu0 1
      %1526 = vperm.xlu0 %1525, %v1509
      %v1527 = vpop.permute.xlu0 %1526
      %v1529 = vmax.f32 %v1527, %v230
      %1530 = vset.pattern.permute.xlu0 2
      %1531 = vperm.xlu0 %1530, %v1509
      %v1532 = vpop.permute.xlu0 %1531
      %v1534 = vmin.f32 %v1532, %v236
      %1535 = vset.pattern.permute.xlu0 3
      %1536 = vperm.xlu0 %1535, %v1509
      %v1537 = vpop.permute.xlu0 %1536
      %v1539 = vmin.f32 %v1537, %v242
      %v1540 = vsub.f32 %v1534, %v1524
      %v1541 = vmax.f32 %v1540, 0.0
      %v1542 = vsub.f32 %v1539, %v1529
      %v1543 = vmax.f32 %v1542, 0.0
      %v1544 = vmul.f32 %v1541, %v1543
      %1546 = vset.pattern.permute.xlu0 2
      %1547 = vperm.xlu0 %1546, %v1519
      %v1548 = vpop.permute.xlu0 %1547
      %v1550 = vadd.f32 %v1548, %v254
      %v1551 = vsub.f32 %v1550, %v1544
      %v1552 = vmul.f32 %v1551, 0.5
      %vm1553 = vcmp.gt.f32.partialorder %v1544, %v1552
      %vm1554 = vcmp.gt.f32.partialorder %v1544, 0.0
      %vm1555 = vmand %vm1553, %vm1554
      %vm1556 = vcmp.gt.s32.totalorder %v208, 48
      %vm1557 = vmand %vm1555, %vm1556
      %v1558 = vsel %vm1557, 1.0, 0.0
      %v1560 = vrot.slane %v1508, 4
      %v1562 = vmul.f32 %v1558, %v1560
      %1563 = vset.pattern.permute.xlu0 48
      %1564 = vperm.xlu0 %1563, %v1508
      %v1565 = vpop.permute.xlu0 %1564
      %v1568 = vrot.slane %v1562, 4
      %1569 = vrot.lane.b32.xlu0 %v1568, 80
      %v1570 = vpop.permute.xlu0 %1569
      %v1572 = vmul.f32 %v1565, %v1570
      %1574 = vrot.lane.b32.xlu0 %v1572, 48
      %v1575 = vpop.permute.xlu0 %1574
      %v1577 = vsub.f32 %v1508, %v1575
      %v1579 = vrot.slane %v1577, 3
      %v1581 = vmul.f32 %v1558, %v1579
      %1582 = vset.pattern.permute.xlu0 49
      %1583 = vperm.xlu0 %1582, %v1577
      %v1584 = vpop.permute.xlu0 %1583
      %v1587 = vrot.slane %v1581, 5
      %1588 = vrot.lane.b32.xlu0 %v1587, 80
      %v1589 = vpop.permute.xlu0 %1588
      %v1591 = vmul.f32 %v1584, %v1589
      %1593 = vrot.lane.b32.xlu0 %v1591, 48
      %v1594 = vpop.permute.xlu0 %1593
      %v1596 = vsub.f32 %v1577, %v1594
      %v1598 = vrot.slane %v1596, 2
      %v1600 = vmul.f32 %v1558, %v1598
      %1601 = vset.pattern.permute.xlu0 50
      %1602 = vperm.xlu0 %1601, %v1596
      %v1603 = vpop.permute.xlu0 %1602
      %v1606 = vrot.slane %v1600, 6
      %1607 = vrot.lane.b32.xlu0 %v1606, 80
      %v1608 = vpop.permute.xlu0 %1607
      %v1610 = vmul.f32 %v1603, %v1608
      %1612 = vrot.lane.b32.xlu0 %v1610, 48
      %v1613 = vpop.permute.xlu0 %1612
      %v1615 = vsub.f32 %v1596, %v1613
      %v1617 = vrot.slane %v1615, 1
      %v1619 = vmul.f32 %v1558, %v1617
      %1620 = vset.pattern.permute.xlu0 51
      %1621 = vperm.xlu0 %1620, %v1615
      %v1622 = vpop.permute.xlu0 %1621
      %v1625 = vrot.slane %v1619, 7
      %1626 = vrot.lane.b32.xlu0 %v1625, 80
      %v1627 = vpop.permute.xlu0 %1626
      %v1629 = vmul.f32 %v1622, %v1627
      %1631 = vrot.lane.b32.xlu0 %v1629, 48
      %v1632 = vpop.permute.xlu0 %1631
      %v1634 = vsub.f32 %v1615, %v1632
      %v1635 = vmul.f32 %v1558, %v1634
      %1637 = vset.pattern.permute.xlu0 52
      %1638 = vperm.xlu0 %1637, %v1634
      %v1639 = vpop.permute.xlu0 %1638
      %v1641 = vmul.f32 %v1639, %v1635
      %v1642 = vsub.f32 %v1634, %v1641
      %v1644 = vrot.slane %v1642, 7
      %v1646 = vmul.f32 %v1558, %v1644
      %1647 = vset.pattern.permute.xlu0 53
      %1648 = vperm.xlu0 %1647, %v1642
      %v1649 = vpop.permute.xlu0 %1648
      %v1652 = vrot.slane %v1646, 1
      %1653 = vrot.lane.b32.xlu0 %v1652, 80
      %v1654 = vpop.permute.xlu0 %1653
      %v1656 = vmul.f32 %v1649, %v1654
      %1658 = vrot.lane.b32.xlu0 %v1656, 48
      %v1659 = vpop.permute.xlu0 %1658
      %v1661 = vsub.f32 %v1642, %v1659
      %v1663 = vrot.slane %v1661, 6
      %v1665 = vmul.f32 %v1558, %v1663
      %1666 = vset.pattern.permute.xlu0 54
      %1667 = vperm.xlu0 %1666, %v1661
      %v1668 = vpop.permute.xlu0 %1667
      %v1671 = vrot.slane %v1665, 2
      %1672 = vrot.lane.b32.xlu0 %v1671, 80
      %v1673 = vpop.permute.xlu0 %1672
      %v1675 = vmul.f32 %v1668, %v1673
      %1677 = vrot.lane.b32.xlu0 %v1675, 48
      %v1678 = vpop.permute.xlu0 %1677
      %v1680 = vsub.f32 %v1661, %v1678
      %v1682 = vrot.slane %v1680, 5
      %v1684 = vmul.f32 %v1558, %v1682
      %1685 = vset.pattern.permute.xlu0 55
      %1686 = vperm.xlu0 %1685, %v1680
      %v1687 = vpop.permute.xlu0 %1686
      %v1690 = vrot.slane %v1684, 3
      %1691 = vrot.lane.b32.xlu0 %v1690, 80
      %v1692 = vpop.permute.xlu0 %1691
      %v1694 = vmul.f32 %v1687, %v1692
      %1696 = vrot.lane.b32.xlu0 %v1694, 48
      %v1697 = vpop.permute.xlu0 %1696
      %v1699 = vsub.f32 %v1680, %v1697
      %v1701 = vrot.slane %v1699, 4
      %1702 = vrot.lane.b32.xlu0 %v1701, 80
      %v1703 = vpop.permute.xlu0 %1702
      %v1704 = vsel %vm365, %v1703, 0
      %1706 = vmatpush.msra.mxu0 0.0
      %1707 = vmatpush.msra.mxu0 0.0
      %1708 = vmatpush.msra.mxu0 0.0
      %1709 = vmatpush.msra.mxu0 0.0
      %1710 = vmatpush.msra.mxu0 0.0
      %1711 = vmatpush.msra.mxu0 0.0
      %1712 = vmatpush.msra.mxu0 0.0
      %1713 = vmatpush.msra.mxu0 0.0
      %1714 = vmatpush.msra.mxu0 0.0
      %1715 = vmatpush.msra.mxu0 0.0
      %1716 = vmatpush.msra.mxu0 0.0
      %1717 = vmatpush.msra.mxu0 0.0
      %1718 = vmatpush.msra.mxu0 0.0
      %1719 = vmatpush.msra.mxu0 0.0
      %1720 = vmatpush.msra.mxu0 0.0
      %1721 = vmatpush.msra.mxu0 %v1558
      %1722 = vmatmul.f32.gmra.mxu0 %v1704
      %v1723 = vpop.f32.mrf.mxu0
      %v1724 = vadd.f32 0.0, %v1723
      %1725 = vdwg.mxu0
      %vm1726 = vcmp.gt.f32.partialorder %v1724, 0.0
      %v1727 = vsel %vm1726, 0.0, 1.0
      %v1729 = vrot.slane %v1727, 4
      %v1731 = vmul.f32 %v1508, %v1729
      %v1732 = vld [vmem:[%s186 + $0x38] sm:$0xff]
      %1734 = vrot.lane.b32.xlu0 %v1732, 2
      %v1735 = vpop.permute.xlu0 %1734
      %v1737 = vsub.f32 %v1732, %v1735
      %1739 = vrot.lane.b32.xlu0 %v1737, 127
      %v1740 = vpop.permute.xlu0 %1739
      %v1742 = vmul.f32 %v1737, %v1740
      %1743 = vset.pattern.permute.xlu0 0
      %1744 = vperm.xlu0 %1743, %v1732
      %v1745 = vpop.permute.xlu0 %1744
      %v1747 = vmax.f32 %v1745, %v224
      %1748 = vset.pattern.permute.xlu0 1
      %1749 = vperm.xlu0 %1748, %v1732
      %v1750 = vpop.permute.xlu0 %1749
      %v1752 = vmax.f32 %v1750, %v230
      %1753 = vset.pattern.permute.xlu0 2
      %1754 = vperm.xlu0 %1753, %v1732
      %v1755 = vpop.permute.xlu0 %1754
      %v1757 = vmin.f32 %v1755, %v236
      %1758 = vset.pattern.permute.xlu0 3
      %1759 = vperm.xlu0 %1758, %v1732
      %v1760 = vpop.permute.xlu0 %1759
      %v1762 = vmin.f32 %v1760, %v242
      %v1763 = vsub.f32 %v1757, %v1747
      %v1764 = vmax.f32 %v1763, 0.0
      %v1765 = vsub.f32 %v1762, %v1752
      %v1766 = vmax.f32 %v1765, 0.0
      %v1767 = vmul.f32 %v1764, %v1766
      %1769 = vset.pattern.permute.xlu0 2
      %1770 = vperm.xlu0 %1769, %v1742
      %v1771 = vpop.permute.xlu0 %1770
      %v1773 = vadd.f32 %v1771, %v254
      %v1774 = vsub.f32 %v1773, %v1767
      %v1775 = vmul.f32 %v1774, 0.5
      %vm1776 = vcmp.gt.f32.partialorder %v1767, %v1775
      %vm1777 = vcmp.gt.f32.partialorder %v1767, 0.0
      %vm1778 = vmand %vm1776, %vm1777
      %vm1779 = vcmp.gt.s32.totalorder %v208, 56
      %vm1780 = vmand %vm1778, %vm1779
      %v1781 = vsel %vm1780, 1.0, 0.0
      %v1783 = vrot.slane %v1731, 4
      %v1785 = vmul.f32 %v1781, %v1783
      %1786 = vset.pattern.permute.xlu0 56
      %1787 = vperm.xlu0 %1786, %v1731
      %v1788 = vpop.permute.xlu0 %1787
      %v1791 = vrot.slane %v1785, 4
      %1792 = vrot.lane.b32.xlu0 %v1791, 72
      %v1793 = vpop.permute.xlu0 %1792
      %v1795 = vmul.f32 %v1788, %v1793
      %1797 = vrot.lane.b32.xlu0 %v1795, 56
      %v1798 = vpop.permute.xlu0 %1797
      %v1800 = vsub.f32 %v1731, %v1798
      %v1802 = vrot.slane %v1800, 3
      %v1804 = vmul.f32 %v1781, %v1802
      %1805 = vset.pattern.permute.xlu0 57
      %1806 = vperm.xlu0 %1805, %v1800
      %v1807 = vpop.permute.xlu0 %1806
      %v1810 = vrot.slane %v1804, 5
      %1811 = vrot.lane.b32.xlu0 %v1810, 72
      %v1812 = vpop.permute.xlu0 %1811
      %v1814 = vmul.f32 %v1807, %v1812
      %1816 = vrot.lane.b32.xlu0 %v1814, 56
      %v1817 = vpop.permute.xlu0 %1816
      %v1819 = vsub.f32 %v1800, %v1817
      %v1821 = vrot.slane %v1819, 2
      %v1823 = vmul.f32 %v1781, %v1821
      %1824 = vset.pattern.permute.xlu0 58
      %1825 = vperm.xlu0 %1824, %v1819
      %v1826 = vpop.permute.xlu0 %1825
      %v1829 = vrot.slane %v1823, 6
      %1830 = vrot.lane.b32.xlu0 %v1829, 72
      %v1831 = vpop.permute.xlu0 %1830
      %v1833 = vmul.f32 %v1826, %v1831
      %1835 = vrot.lane.b32.xlu0 %v1833, 56
      %v1836 = vpop.permute.xlu0 %1835
      %v1838 = vsub.f32 %v1819, %v1836
      %v1840 = vrot.slane %v1838, 1
      %v1842 = vmul.f32 %v1781, %v1840
      %1843 = vset.pattern.permute.xlu0 59
      %1844 = vperm.xlu0 %1843, %v1838
      %v1845 = vpop.permute.xlu0 %1844
      %v1848 = vrot.slane %v1842, 7
      %1849 = vrot.lane.b32.xlu0 %v1848, 72
      %v1850 = vpop.permute.xlu0 %1849
      %v1852 = vmul.f32 %v1845, %v1850
      %1854 = vrot.lane.b32.xlu0 %v1852, 56
      %v1855 = vpop.permute.xlu0 %1854
      %v1857 = vsub.f32 %v1838, %v1855
      %v1858 = vmul.f32 %v1781, %v1857
      %1860 = vset.pattern.permute.xlu0 60
      %1861 = vperm.xlu0 %1860, %v1857
      %v1862 = vpop.permute.xlu0 %1861
      %v1864 = vmul.f32 %v1862, %v1858
      %v1865 = vsub.f32 %v1857, %v1864
      %v1867 = vrot.slane %v1865, 7
      %v1869 = vmul.f32 %v1781, %v1867
      %1870 = vset.pattern.permute.xlu0 61
      %1871 = vperm.xlu0 %1870, %v1865
      %v1872 = vpop.permute.xlu0 %1871
      %v1875 = vrot.slane %v1869, 1
      %1876 = vrot.lane.b32.xlu0 %v1875, 72
      %v1877 = vpop.permute.xlu0 %1876
      %v1879 = vmul.f32 %v1872, %v1877
      %1881 = vrot.lane.b32.xlu0 %v1879, 56
      %v1882 = vpop.permute.xlu0 %1881
      %v1884 = vsub.f32 %v1865, %v1882
      %v1886 = vrot.slane %v1884, 6
      %v1888 = vmul.f32 %v1781, %v1886
      %1889 = vset.pattern.permute.xlu0 62
      %1890 = vperm.xlu0 %1889, %v1884
      %v1891 = vpop.permute.xlu0 %1890
      %v1894 = vrot.slane %v1888, 2
      %1895 = vrot.lane.b32.xlu0 %v1894, 72
      %v1896 = vpop.permute.xlu0 %1895
      %v1898 = vmul.f32 %v1891, %v1896
      %1900 = vrot.lane.b32.xlu0 %v1898, 56
      %v1901 = vpop.permute.xlu0 %1900
      %v1903 = vsub.f32 %v1884, %v1901
      %v1905 = vrot.slane %v1903, 5
      %v1907 = vmul.f32 %v1781, %v1905
      %1908 = vset.pattern.permute.xlu0 63
      %1909 = vperm.xlu0 %1908, %v1903
      %v1910 = vpop.permute.xlu0 %1909
      %v1913 = vrot.slane %v1907, 3
      %1914 = vrot.lane.b32.xlu0 %v1913, 72
      %v1915 = vpop.permute.xlu0 %1914
      %v1917 = vmul.f32 %v1910, %v1915
      %1919 = vrot.lane.b32.xlu0 %v1917, 56
      %v1920 = vpop.permute.xlu0 %1919
      %v1922 = vsub.f32 %v1903, %v1920
      %v1924 = vrot.slane %v1922, 4
      %1925 = vrot.lane.b32.xlu0 %v1924, 72
      %v1926 = vpop.permute.xlu0 %1925
      %v1927 = vsel %vm365, %v1926, 0
      %1929 = vmatpush.msra.mxu0 0.0
      %1930 = vmatpush.msra.mxu0 0.0
      %1931 = vmatpush.msra.mxu0 0.0
      %1932 = vmatpush.msra.mxu0 0.0
      %1933 = vmatpush.msra.mxu0 0.0
      %1934 = vmatpush.msra.mxu0 0.0
      %1935 = vmatpush.msra.mxu0 0.0
      %1936 = vmatpush.msra.mxu0 0.0
      %1937 = vmatpush.msra.mxu0 0.0
      %1938 = vmatpush.msra.mxu0 0.0
      %1939 = vmatpush.msra.mxu0 0.0
      %1940 = vmatpush.msra.mxu0 0.0
      %1941 = vmatpush.msra.mxu0 0.0
      %1942 = vmatpush.msra.mxu0 0.0
      %1943 = vmatpush.msra.mxu0 0.0
      %1944 = vmatpush.msra.mxu0 %v1781
      %1945 = vmatmul.f32.gmra.mxu0 %v1927
      %v1946 = vpop.f32.mrf.mxu0
      %v1947 = vadd.f32 0.0, %v1946
      %1948 = vdwg.mxu0
      %vm1949 = vcmp.gt.f32.partialorder %v1947, 0.0
      %v1950 = vsel %vm1949, 0.0, 1.0
      %v1952 = vrot.slane %v1950, 4
      %v1954 = vmul.f32 %v1731, %v1952
      %v1955 = vld [vmem:[%s186 + $0x40] sm:$0xff]
      %1957 = vrot.lane.b32.xlu0 %v1955, 2
      %v1958 = vpop.permute.xlu0 %1957
      %v1960 = vsub.f32 %v1955, %v1958
      %1962 = vrot.lane.b32.xlu0 %v1960, 127
      %v1963 = vpop.permute.xlu0 %1962
      %v1965 = vmul.f32 %v1960, %v1963
      %1966 = vset.pattern.permute.xlu0 0
      %1967 = vperm.xlu0 %1966, %v1955
      %v1968 = vpop.permute.xlu0 %1967
      %v1970 = vmax.f32 %v1968, %v224
      %1971 = vset.pattern.permute.xlu0 1
      %1972 = vperm.xlu0 %1971, %v1955
      %v1973 = vpop.permute.xlu0 %1972
      %v1975 = vmax.f32 %v1973, %v230
      %1976 = vset.pattern.permute.xlu0 2
      %1977 = vperm.xlu0 %1976, %v1955
      %v1978 = vpop.permute.xlu0 %1977
      %v1980 = vmin.f32 %v1978, %v236
      %1981 = vset.pattern.permute.xlu0 3
      %1982 = vperm.xlu0 %1981, %v1955
      %v1983 = vpop.permute.xlu0 %1982
      %v1985 = vmin.f32 %v1983, %v242
      %v1986 = vsub.f32 %v1980, %v1970
      %v1987 = vmax.f32 %v1986, 0.0
      %v1988 = vsub.f32 %v1985, %v1975
      %v1989 = vmax.f32 %v1988, 0.0
      %v1990 = vmul.f32 %v1987, %v1989
      %1992 = vset.pattern.permute.xlu0 2
      %1993 = vperm.xlu0 %1992, %v1965
      %v1994 = vpop.permute.xlu0 %1993
      %v1996 = vadd.f32 %v1994, %v254
      %v1997 = vsub.f32 %v1996, %v1990
      %v1998 = vmul.f32 %v1997, 0.5
      %vm1999 = vcmp.gt.f32.partialorder %v1990, %v1998
      %vm2000 = vcmp.gt.f32.partialorder %v1990, 0.0
      %vm2001 = vmand %vm1999, %vm2000
      %vm2002 = vcmp.gt.s32.totalorder %v208, 64
      %vm2003 = vmand %vm2001, %vm2002
      %v2004 = vsel %vm2003, 1.0, 0.0
      %v2006 = vrot.slane %v1954, 4
      %v2008 = vmul.f32 %v2004, %v2006
      %2009 = vset.pattern.permute.xlu0 64
      %2010 = vperm.xlu0 %2009, %v1954
      %v2011 = vpop.permute.xlu0 %2010
      %v2014 = vrot.slane %v2008, 4
      %2015 = vrot.lane.b32.xlu0 %v2014, 64
      %v2016 = vpop.permute.xlu0 %2015
      %v2018 = vmul.f32 %v2011, %v2016
      %2020 = vrot.lane.b32.xlu0 %v2018, 64
      %v2021 = vpop.permute.xlu0 %2020
      %v2023 = vsub.f32 %v1954, %v2021
      %v2025 = vrot.slane %v2023, 3
      %v2027 = vmul.f32 %v2004, %v2025
      %2028 = vset.pattern.permute.xlu0 65
      %2029 = vperm.xlu0 %2028, %v2023
      %v2030 = vpop.permute.xlu0 %2029
      %v2033 = vrot.slane %v2027, 5
      %2034 = vrot.lane.b32.xlu0 %v2033, 64
      %v2035 = vpop.permute.xlu0 %2034
      %v2037 = vmul.f32 %v2030, %v2035
      %2039 = vrot.lane.b32.xlu0 %v2037, 64
      %v2040 = vpop.permute.xlu0 %2039
      %v2042 = vsub.f32 %v2023, %v2040
      %v2044 = vrot.slane %v2042, 2
      %v2046 = vmul.f32 %v2004, %v2044
      %2047 = vset.pattern.permute.xlu0 66
      %2048 = vperm.xlu0 %2047, %v2042
      %v2049 = vpop.permute.xlu0 %2048
      %v2052 = vrot.slane %v2046, 6
      %2053 = vrot.lane.b32.xlu0 %v2052, 64
      %v2054 = vpop.permute.xlu0 %2053
      %v2056 = vmul.f32 %v2049, %v2054
      %2058 = vrot.lane.b32.xlu0 %v2056, 64
      %v2059 = vpop.permute.xlu0 %2058
      %v2061 = vsub.f32 %v2042, %v2059
      %v2063 = vrot.slane %v2061, 1
      %v2065 = vmul.f32 %v2004, %v2063
      %2066 = vset.pattern.permute.xlu0 67
      %2067 = vperm.xlu0 %2066, %v2061
      %v2068 = vpop.permute.xlu0 %2067
      %v2071 = vrot.slane %v2065, 7
      %2072 = vrot.lane.b32.xlu0 %v2071, 64
      %v2073 = vpop.permute.xlu0 %2072
      %v2075 = vmul.f32 %v2068, %v2073
      %2077 = vrot.lane.b32.xlu0 %v2075, 64
      %v2078 = vpop.permute.xlu0 %2077
      %v2080 = vsub.f32 %v2061, %v2078
      %v2081 = vmul.f32 %v2004, %v2080
      %2083 = vset.pattern.permute.xlu0 68
      %2084 = vperm.xlu0 %2083, %v2080
      %v2085 = vpop.permute.xlu0 %2084
      %v2087 = vmul.f32 %v2085, %v2081
      %v2088 = vsub.f32 %v2080, %v2087
      %v2090 = vrot.slane %v2088, 7
      %v2092 = vmul.f32 %v2004, %v2090
      %2093 = vset.pattern.permute.xlu0 69
      %2094 = vperm.xlu0 %2093, %v2088
      %v2095 = vpop.permute.xlu0 %2094
      %v2098 = vrot.slane %v2092, 1
      %2099 = vrot.lane.b32.xlu0 %v2098, 64
      %v2100 = vpop.permute.xlu0 %2099
      %v2102 = vmul.f32 %v2095, %v2100
      %2104 = vrot.lane.b32.xlu0 %v2102, 64
      %v2105 = vpop.permute.xlu0 %2104
      %v2107 = vsub.f32 %v2088, %v2105
      %v2109 = vrot.slane %v2107, 6
      %v2111 = vmul.f32 %v2004, %v2109
      %2112 = vset.pattern.permute.xlu0 70
      %2113 = vperm.xlu0 %2112, %v2107
      %v2114 = vpop.permute.xlu0 %2113
      %v2117 = vrot.slane %v2111, 2
      %2118 = vrot.lane.b32.xlu0 %v2117, 64
      %v2119 = vpop.permute.xlu0 %2118
      %v2121 = vmul.f32 %v2114, %v2119
      %2123 = vrot.lane.b32.xlu0 %v2121, 64
      %v2124 = vpop.permute.xlu0 %2123
      %v2126 = vsub.f32 %v2107, %v2124
      %v2128 = vrot.slane %v2126, 5
      %v2130 = vmul.f32 %v2004, %v2128
      %2131 = vset.pattern.permute.xlu0 71
      %2132 = vperm.xlu0 %2131, %v2126
      %v2133 = vpop.permute.xlu0 %2132
      %v2136 = vrot.slane %v2130, 3
      %2137 = vrot.lane.b32.xlu0 %v2136, 64
      %v2138 = vpop.permute.xlu0 %2137
      %v2140 = vmul.f32 %v2133, %v2138
      %2142 = vrot.lane.b32.xlu0 %v2140, 64
      %v2143 = vpop.permute.xlu0 %2142
      %v2145 = vsub.f32 %v2126, %v2143
      %v2147 = vrot.slane %v2145, 4
      %2148 = vrot.lane.b32.xlu0 %v2147, 64
      %v2149 = vpop.permute.xlu0 %2148
      %v2150 = vsel %vm365, %v2149, 0
      %2152 = vmatpush.msra.mxu0 0.0
      %2153 = vmatpush.msra.mxu0 0.0
      %2154 = vmatpush.msra.mxu0 0.0
      %2155 = vmatpush.msra.mxu0 0.0
      %2156 = vmatpush.msra.mxu0 0.0
      %2157 = vmatpush.msra.mxu0 0.0
      %2158 = vmatpush.msra.mxu0 0.0
      %2159 = vmatpush.msra.mxu0 0.0
      %2160 = vmatpush.msra.mxu0 0.0
      %2161 = vmatpush.msra.mxu0 0.0
      %2162 = vmatpush.msra.mxu0 0.0
      %2163 = vmatpush.msra.mxu0 0.0
      %2164 = vmatpush.msra.mxu0 0.0
      %2165 = vmatpush.msra.mxu0 0.0
      %2166 = vmatpush.msra.mxu0 0.0
      %2167 = vmatpush.msra.mxu0 %v2004
      %2168 = vmatmul.f32.gmra.mxu0 %v2150
      %v2169 = vpop.f32.mrf.mxu0
      %v2170 = vadd.f32 0.0, %v2169
      %2171 = vdwg.mxu0
      %vm2172 = vcmp.gt.f32.partialorder %v2170, 0.0
      %v2173 = vsel %vm2172, 0.0, 1.0
      %v2175 = vrot.slane %v2173, 4
      %v2177 = vmul.f32 %v1954, %v2175
      %v2178 = vld [vmem:[%s186 + $0x48] sm:$0xff]
      %2180 = vrot.lane.b32.xlu0 %v2178, 2
      %v2181 = vpop.permute.xlu0 %2180
      %v2183 = vsub.f32 %v2178, %v2181
      %2185 = vrot.lane.b32.xlu0 %v2183, 127
      %v2186 = vpop.permute.xlu0 %2185
      %v2188 = vmul.f32 %v2183, %v2186
      %2189 = vset.pattern.permute.xlu0 0
      %2190 = vperm.xlu0 %2189, %v2178
      %v2191 = vpop.permute.xlu0 %2190
      %v2193 = vmax.f32 %v2191, %v224
      %2194 = vset.pattern.permute.xlu0 1
      %2195 = vperm.xlu0 %2194, %v2178
      %v2196 = vpop.permute.xlu0 %2195
      %v2198 = vmax.f32 %v2196, %v230
      %2199 = vset.pattern.permute.xlu0 2
      %2200 = vperm.xlu0 %2199, %v2178
      %v2201 = vpop.permute.xlu0 %2200
      %v2203 = vmin.f32 %v2201, %v236
      %2204 = vset.pattern.permute.xlu0 3
      %2205 = vperm.xlu0 %2204, %v2178
      %v2206 = vpop.permute.xlu0 %2205
      %v2208 = vmin.f32 %v2206, %v242
      %v2209 = vsub.f32 %v2203, %v2193
      %v2210 = vmax.f32 %v2209, 0.0
      %v2211 = vsub.f32 %v2208, %v2198
      %v2212 = vmax.f32 %v2211, 0.0
      %v2213 = vmul.f32 %v2210, %v2212
      %2215 = vset.pattern.permute.xlu0 2
      %2216 = vperm.xlu0 %2215, %v2188
      %v2217 = vpop.permute.xlu0 %2216
      %v2219 = vadd.f32 %v2217, %v254
      %v2220 = vsub.f32 %v2219, %v2213
      %v2221 = vmul.f32 %v2220, 0.5
      %vm2222 = vcmp.gt.f32.partialorder %v2213, %v2221
      %vm2223 = vcmp.gt.f32.partialorder %v2213, 0.0
      %vm2224 = vmand %vm2222, %vm2223
      %vm2225 = vcmp.gt.s32.totalorder %v208, 72
      %vm2226 = vmand %vm2224, %vm2225
      %v2227 = vsel %vm2226, 1.0, 0.0
      %v2229 = vrot.slane %v2177, 4
      %v2231 = vmul.f32 %v2227, %v2229
      %2232 = vset.pattern.permute.xlu0 72
      %2233 = vperm.xlu0 %2232, %v2177
      %v2234 = vpop.permute.xlu0 %2233
      %v2237 = vrot.slane %v2231, 4
      %2238 = vrot.lane.b32.xlu0 %v2237, 56
      %v2239 = vpop.permute.xlu0 %2238
      %v2241 = vmul.f32 %v2234, %v2239
      %2243 = vrot.lane.b32.xlu0 %v2241, 72
      %v2244 = vpop.permute.xlu0 %2243
      %v2246 = vsub.f32 %v2177, %v2244
      %v2248 = vrot.slane %v2246, 3
      %v2250 = vmul.f32 %v2227, %v2248
      %2251 = vset.pattern.permute.xlu0 73
      %2252 = vperm.xlu0 %2251, %v2246
      %v2253 = vpop.permute.xlu0 %2252
      %v2256 = vrot.slane %v2250, 5
      %2257 = vrot.lane.b32.xlu0 %v2256, 56
      %v2258 = vpop.permute.xlu0 %2257
      %v2260 = vmul.f32 %v2253, %v2258
      %2262 = vrot.lane.b32.xlu0 %v2260, 72
      %v2263 = vpop.permute.xlu0 %2262
      %v2265 = vsub.f32 %v2246, %v2263
      %v2267 = vrot.slane %v2265, 2
      %v2269 = vmul.f32 %v2227, %v2267
      %2270 = vset.pattern.permute.xlu0 74
      %2271 = vperm.xlu0 %2270, %v2265
      %v2272 = vpop.permute.xlu0 %2271
      %v2275 = vrot.slane %v2269, 6
      %2276 = vrot.lane.b32.xlu0 %v2275, 56
      %v2277 = vpop.permute.xlu0 %2276
      %v2279 = vmul.f32 %v2272, %v2277
      %2281 = vrot.lane.b32.xlu0 %v2279, 72
      %v2282 = vpop.permute.xlu0 %2281
      %v2284 = vsub.f32 %v2265, %v2282
      %v2286 = vrot.slane %v2284, 1
      %v2288 = vmul.f32 %v2227, %v2286
      %2289 = vset.pattern.permute.xlu0 75
      %2290 = vperm.xlu0 %2289, %v2284
      %v2291 = vpop.permute.xlu0 %2290
      %v2294 = vrot.slane %v2288, 7
      %2295 = vrot.lane.b32.xlu0 %v2294, 56
      %v2296 = vpop.permute.xlu0 %2295
      %v2298 = vmul.f32 %v2291, %v2296
      %2300 = vrot.lane.b32.xlu0 %v2298, 72
      %v2301 = vpop.permute.xlu0 %2300
      %v2303 = vsub.f32 %v2284, %v2301
      %v2304 = vmul.f32 %v2227, %v2303
      %2306 = vset.pattern.permute.xlu0 76
      %2307 = vperm.xlu0 %2306, %v2303
      %v2308 = vpop.permute.xlu0 %2307
      %v2310 = vmul.f32 %v2308, %v2304
      %v2311 = vsub.f32 %v2303, %v2310
      %v2313 = vrot.slane %v2311, 7
      %v2315 = vmul.f32 %v2227, %v2313
      %2316 = vset.pattern.permute.xlu0 77
      %2317 = vperm.xlu0 %2316, %v2311
      %v2318 = vpop.permute.xlu0 %2317
      %v2321 = vrot.slane %v2315, 1
      %2322 = vrot.lane.b32.xlu0 %v2321, 56
      %v2323 = vpop.permute.xlu0 %2322
      %v2325 = vmul.f32 %v2318, %v2323
      %2327 = vrot.lane.b32.xlu0 %v2325, 72
      %v2328 = vpop.permute.xlu0 %2327
      %v2330 = vsub.f32 %v2311, %v2328
      %v2332 = vrot.slane %v2330, 6
      %v2334 = vmul.f32 %v2227, %v2332
      %2335 = vset.pattern.permute.xlu0 78
      %2336 = vperm.xlu0 %2335, %v2330
      %v2337 = vpop.permute.xlu0 %2336
      %v2340 = vrot.slane %v2334, 2
      %2341 = vrot.lane.b32.xlu0 %v2340, 56
      %v2342 = vpop.permute.xlu0 %2341
      %v2344 = vmul.f32 %v2337, %v2342
      %2346 = vrot.lane.b32.xlu0 %v2344, 72
      %v2347 = vpop.permute.xlu0 %2346
      %v2349 = vsub.f32 %v2330, %v2347
      %v2351 = vrot.slane %v2349, 5
      %v2353 = vmul.f32 %v2227, %v2351
      %2354 = vset.pattern.permute.xlu0 79
      %2355 = vperm.xlu0 %2354, %v2349
      %v2356 = vpop.permute.xlu0 %2355
      %v2359 = vrot.slane %v2353, 3
      %2360 = vrot.lane.b32.xlu0 %v2359, 56
      %v2361 = vpop.permute.xlu0 %2360
      %v2363 = vmul.f32 %v2356, %v2361
      %2365 = vrot.lane.b32.xlu0 %v2363, 72
      %v2366 = vpop.permute.xlu0 %2365
      %v2368 = vsub.f32 %v2349, %v2366
      %v2370 = vrot.slane %v2368, 4
      %2371 = vrot.lane.b32.xlu0 %v2370, 56
      %v2372 = vpop.permute.xlu0 %2371
      %v2373 = vsel %vm365, %v2372, 0
      %2375 = vmatpush.msra.mxu0 0.0
      %2376 = vmatpush.msra.mxu0 0.0
      %2377 = vmatpush.msra.mxu0 0.0
      %2378 = vmatpush.msra.mxu0 0.0
      %2379 = vmatpush.msra.mxu0 0.0
      %2380 = vmatpush.msra.mxu0 0.0
      %2381 = vmatpush.msra.mxu0 0.0
      %2382 = vmatpush.msra.mxu0 0.0
      %2383 = vmatpush.msra.mxu0 0.0
      %2384 = vmatpush.msra.mxu0 0.0
      %2385 = vmatpush.msra.mxu0 0.0
      %2386 = vmatpush.msra.mxu0 0.0
      %2387 = vmatpush.msra.mxu0 0.0
      %2388 = vmatpush.msra.mxu0 0.0
      %2389 = vmatpush.msra.mxu0 0.0
      %2390 = vmatpush.msra.mxu0 %v2227
      %2391 = vmatmul.f32.gmra.mxu0 %v2373
      %v2392 = vpop.f32.mrf.mxu0
      %v2393 = vadd.f32 0.0, %v2392
      %2394 = vdwg.mxu0
      %vm2395 = vcmp.gt.f32.partialorder %v2393, 0.0
      %v2396 = vsel %vm2395, 0.0, 1.0
      %v2398 = vrot.slane %v2396, 4
      %v2400 = vmul.f32 %v2177, %v2398
      %v2401 = vld [vmem:[%s186 + $0x50] sm:$0xff]
      %2403 = vrot.lane.b32.xlu0 %v2401, 2
      %v2404 = vpop.permute.xlu0 %2403
      %v2406 = vsub.f32 %v2401, %v2404
      %2408 = vrot.lane.b32.xlu0 %v2406, 127
      %v2409 = vpop.permute.xlu0 %2408
      %v2411 = vmul.f32 %v2406, %v2409
      %2412 = vset.pattern.permute.xlu0 0
      %2413 = vperm.xlu0 %2412, %v2401
      %v2414 = vpop.permute.xlu0 %2413
      %v2416 = vmax.f32 %v2414, %v224
      %2417 = vset.pattern.permute.xlu0 1
      %2418 = vperm.xlu0 %2417, %v2401
      %v2419 = vpop.permute.xlu0 %2418
      %v2421 = vmax.f32 %v2419, %v230
      %2422 = vset.pattern.permute.xlu0 2
      %2423 = vperm.xlu0 %2422, %v2401
      %v2424 = vpop.permute.xlu0 %2423
      %v2426 = vmin.f32 %v2424, %v236
      %2427 = vset.pattern.permute.xlu0 3
      %2428 = vperm.xlu0 %2427, %v2401
      %v2429 = vpop.permute.xlu0 %2428
      %v2431 = vmin.f32 %v2429, %v242
      %v2432 = vsub.f32 %v2426, %v2416
      %v2433 = vmax.f32 %v2432, 0.0
      %v2434 = vsub.f32 %v2431, %v2421
      %v2435 = vmax.f32 %v2434, 0.0
      %v2436 = vmul.f32 %v2433, %v2435
      %2438 = vset.pattern.permute.xlu0 2
      %2439 = vperm.xlu0 %2438, %v2411
      %v2440 = vpop.permute.xlu0 %2439
      %v2442 = vadd.f32 %v2440, %v254
      %v2443 = vsub.f32 %v2442, %v2436
      %v2444 = vmul.f32 %v2443, 0.5
      %vm2445 = vcmp.gt.f32.partialorder %v2436, %v2444
      %vm2446 = vcmp.gt.f32.partialorder %v2436, 0.0
      %vm2447 = vmand %vm2445, %vm2446
      %vm2448 = vcmp.gt.s32.totalorder %v208, 80
      %vm2449 = vmand %vm2447, %vm2448
      %v2450 = vsel %vm2449, 1.0, 0.0
      %v2452 = vrot.slane %v2400, 4
      %v2454 = vmul.f32 %v2450, %v2452
      %2455 = vset.pattern.permute.xlu0 80
      %2456 = vperm.xlu0 %2455, %v2400
      %v2457 = vpop.permute.xlu0 %2456
      %v2460 = vrot.slane %v2454, 4
      %2461 = vrot.lane.b32.xlu0 %v2460, 48
      %v2462 = vpop.permute.xlu0 %2461
      %v2464 = vmul.f32 %v2457, %v2462
      %2466 = vrot.lane.b32.xlu0 %v2464, 80
      %v2467 = vpop.permute.xlu0 %2466
      %v2469 = vsub.f32 %v2400, %v2467
      %v2471 = vrot.slane %v2469, 3
      %v2473 = vmul.f32 %v2450, %v2471
      %2474 = vset.pattern.permute.xlu0 81
      %2475 = vperm.xlu0 %2474, %v2469
      %v2476 = vpop.permute.xlu0 %2475
      %v2479 = vrot.slane %v2473, 5
      %2480 = vrot.lane.b32.xlu0 %v2479, 48
      %v2481 = vpop.permute.xlu0 %2480
      %v2483 = vmul.f32 %v2476, %v2481
      %2485 = vrot.lane.b32.xlu0 %v2483, 80
      %v2486 = vpop.permute.xlu0 %2485
      %v2488 = vsub.f32 %v2469, %v2486
      %v2490 = vrot.slane %v2488, 2
      %v2492 = vmul.f32 %v2450, %v2490
      %2493 = vset.pattern.permute.xlu0 82
      %2494 = vperm.xlu0 %2493, %v2488
      %v2495 = vpop.permute.xlu0 %2494
      %v2498 = vrot.slane %v2492, 6
      %2499 = vrot.lane.b32.xlu0 %v2498, 48
      %v2500 = vpop.permute.xlu0 %2499
      %v2502 = vmul.f32 %v2495, %v2500
      %2504 = vrot.lane.b32.xlu0 %v2502, 80
      %v2505 = vpop.permute.xlu0 %2504
      %v2507 = vsub.f32 %v2488, %v2505
      %v2509 = vrot.slane %v2507, 1
      %v2511 = vmul.f32 %v2450, %v2509
      %2512 = vset.pattern.permute.xlu0 83
      %2513 = vperm.xlu0 %2512, %v2507
      %v2514 = vpop.permute.xlu0 %2513
      %v2517 = vrot.slane %v2511, 7
      %2518 = vrot.lane.b32.xlu0 %v2517, 48
      %v2519 = vpop.permute.xlu0 %2518
      %v2521 = vmul.f32 %v2514, %v2519
      %2523 = vrot.lane.b32.xlu0 %v2521, 80
      %v2524 = vpop.permute.xlu0 %2523
      %v2526 = vsub.f32 %v2507, %v2524
      %v2527 = vmul.f32 %v2450, %v2526
      %2529 = vset.pattern.permute.xlu0 84
      %2530 = vperm.xlu0 %2529, %v2526
      %v2531 = vpop.permute.xlu0 %2530
      %v2533 = vmul.f32 %v2531, %v2527
      %v2534 = vsub.f32 %v2526, %v2533
      %v2536 = vrot.slane %v2534, 7
      %v2538 = vmul.f32 %v2450, %v2536
      %2539 = vset.pattern.permute.xlu0 85
      %2540 = vperm.xlu0 %2539, %v2534
      %v2541 = vpop.permute.xlu0 %2540
      %v2544 = vrot.slane %v2538, 1
      %2545 = vrot.lane.b32.xlu0 %v2544, 48
      %v2546 = vpop.permute.xlu0 %2545
      %v2548 = vmul.f32 %v2541, %v2546
      %2550 = vrot.lane.b32.xlu0 %v2548, 80
      %v2551 = vpop.permute.xlu0 %2550
      %v2553 = vsub.f32 %v2534, %v2551
      %v2555 = vrot.slane %v2553, 6
      %v2557 = vmul.f32 %v2450, %v2555
      %2558 = vset.pattern.permute.xlu0 86
      %2559 = vperm.xlu0 %2558, %v2553
      %v2560 = vpop.permute.xlu0 %2559
      %v2563 = vrot.slane %v2557, 2
      %2564 = vrot.lane.b32.xlu0 %v2563, 48
      %v2565 = vpop.permute.xlu0 %2564
      %v2567 = vmul.f32 %v2560, %v2565
      %2569 = vrot.lane.b32.xlu0 %v2567, 80
      %v2570 = vpop.permute.xlu0 %2569
      %v2572 = vsub.f32 %v2553, %v2570
      %v2574 = vrot.slane %v2572, 5
      %v2576 = vmul.f32 %v2450, %v2574
      %2577 = vset.pattern.permute.xlu0 87
      %2578 = vperm.xlu0 %2577, %v2572
      %v2579 = vpop.permute.xlu0 %2578
      %v2582 = vrot.slane %v2576, 3
      %2583 = vrot.lane.b32.xlu0 %v2582, 48
      %v2584 = vpop.permute.xlu0 %2583
      %v2586 = vmul.f32 %v2579, %v2584
      %2588 = vrot.lane.b32.xlu0 %v2586, 80
      %v2589 = vpop.permute.xlu0 %2588
      %v2591 = vsub.f32 %v2572, %v2589
      %v2593 = vrot.slane %v2591, 4
      %2594 = vrot.lane.b32.xlu0 %v2593, 48
      %v2595 = vpop.permute.xlu0 %2594
      %v2596 = vsel %vm365, %v2595, 0
      %2598 = vmatpush.msra.mxu0 0.0
      %2599 = vmatpush.msra.mxu0 0.0
      %2600 = vmatpush.msra.mxu0 0.0
      %2601 = vmatpush.msra.mxu0 0.0
      %2602 = vmatpush.msra.mxu0 0.0
      %2603 = vmatpush.msra.mxu0 0.0
      %2604 = vmatpush.msra.mxu0 0.0
      %2605 = vmatpush.msra.mxu0 0.0
      %2606 = vmatpush.msra.mxu0 0.0
      %2607 = vmatpush.msra.mxu0 0.0
      %2608 = vmatpush.msra.mxu0 0.0
      %2609 = vmatpush.msra.mxu0 0.0
      %2610 = vmatpush.msra.mxu0 0.0
      %2611 = vmatpush.msra.mxu0 0.0
      %2612 = vmatpush.msra.mxu0 0.0
      %2613 = vmatpush.msra.mxu0 %v2450
      %2614 = vmatmul.f32.gmra.mxu0 %v2596
      %v2615 = vpop.f32.mrf.mxu0
      %v2616 = vadd.f32 0.0, %v2615
      %2617 = vdwg.mxu0
      %vm2618 = vcmp.gt.f32.partialorder %v2616, 0.0
      %v2619 = vsel %vm2618, 0.0, 1.0
      %v2621 = vrot.slane %v2619, 4
      %v2623 = vmul.f32 %v2400, %v2621
      %v2624 = vld [vmem:[%s186 + $0x58] sm:$0xff]
      %2626 = vrot.lane.b32.xlu0 %v2624, 2
      %v2627 = vpop.permute.xlu0 %2626
      %v2629 = vsub.f32 %v2624, %v2627
      %2631 = vrot.lane.b32.xlu0 %v2629, 127
      %v2632 = vpop.permute.xlu0 %2631
      %v2634 = vmul.f32 %v2629, %v2632
      %2635 = vset.pattern.permute.xlu0 0
      %2636 = vperm.xlu0 %2635, %v2624
      %v2637 = vpop.permute.xlu0 %2636
      %v2639 = vmax.f32 %v2637, %v224
      %2640 = vset.pattern.permute.xlu0 1
      %2641 = vperm.xlu0 %2640, %v2624
      %v2642 = vpop.permute.xlu0 %2641
      %v2644 = vmax.f32 %v2642, %v230
      %2645 = vset.pattern.permute.xlu0 2
      %2646 = vperm.xlu0 %2645, %v2624
      %v2647 = vpop.permute.xlu0 %2646
      %v2649 = vmin.f32 %v2647, %v236
      %2650 = vset.pattern.permute.xlu0 3
      %2651 = vperm.xlu0 %2650, %v2624
      %v2652 = vpop.permute.xlu0 %2651
      %v2654 = vmin.f32 %v2652, %v242
      %v2655 = vsub.f32 %v2649, %v2639
      %v2656 = vmax.f32 %v2655, 0.0
      %v2657 = vsub.f32 %v2654, %v2644
      %v2658 = vmax.f32 %v2657, 0.0
      %v2659 = vmul.f32 %v2656, %v2658
      %2661 = vset.pattern.permute.xlu0 2
      %2662 = vperm.xlu0 %2661, %v2634
      %v2663 = vpop.permute.xlu0 %2662
      %v2665 = vadd.f32 %v2663, %v254
      %v2666 = vsub.f32 %v2665, %v2659
      %v2667 = vmul.f32 %v2666, 0.5
      %vm2668 = vcmp.gt.f32.partialorder %v2659, %v2667
      %vm2669 = vcmp.gt.f32.partialorder %v2659, 0.0
      %vm2670 = vmand %vm2668, %vm2669
      %vm2671 = vcmp.gt.s32.totalorder %v208, 88
      %vm2672 = vmand %vm2670, %vm2671
      %v2673 = vsel %vm2672, 1.0, 0.0
      %v2675 = vrot.slane %v2623, 4
      %v2677 = vmul.f32 %v2673, %v2675
      %2678 = vset.pattern.permute.xlu0 88
      %2679 = vperm.xlu0 %2678, %v2623
      %v2680 = vpop.permute.xlu0 %2679
      %v2683 = vrot.slane %v2677, 4
      %2684 = vrot.lane.b32.xlu0 %v2683, 40
      %v2685 = vpop.permute.xlu0 %2684
      %v2687 = vmul.f32 %v2680, %v2685
      %2689 = vrot.lane.b32.xlu0 %v2687, 88
      %v2690 = vpop.permute.xlu0 %2689
      %v2692 = vsub.f32 %v2623, %v2690
      %v2694 = vrot.slane %v2692, 3
      %v2696 = vmul.f32 %v2673, %v2694
      %2697 = vset.pattern.permute.xlu0 89
      %2698 = vperm.xlu0 %2697, %v2692
      %v2699 = vpop.permute.xlu0 %2698
      %v2702 = vrot.slane %v2696, 5
      %2703 = vrot.lane.b32.xlu0 %v2702, 40
      %v2704 = vpop.permute.xlu0 %2703
      %v2706 = vmul.f32 %v2699, %v2704
      %2708 = vrot.lane.b32.xlu0 %v2706, 88
      %v2709 = vpop.permute.xlu0 %2708
      %v2711 = vsub.f32 %v2692, %v2709
      %v2713 = vrot.slane %v2711, 2
      %v2715 = vmul.f32 %v2673, %v2713
      %2716 = vset.pattern.permute.xlu0 90
      %2717 = vperm.xlu0 %2716, %v2711
      %v2718 = vpop.permute.xlu0 %2717
      %v2721 = vrot.slane %v2715, 6
      %2722 = vrot.lane.b32.xlu0 %v2721, 40
      %v2723 = vpop.permute.xlu0 %2722
      %v2725 = vmul.f32 %v2718, %v2723
      %2727 = vrot.lane.b32.xlu0 %v2725, 88
      %v2728 = vpop.permute.xlu0 %2727
      %v2730 = vsub.f32 %v2711, %v2728
      %v2732 = vrot.slane %v2730, 1
      %v2734 = vmul.f32 %v2673, %v2732
      %2735 = vset.pattern.permute.xlu0 91
      %2736 = vperm.xlu0 %2735, %v2730
      %v2737 = vpop.permute.xlu0 %2736
      %v2740 = vrot.slane %v2734, 7
      %2741 = vrot.lane.b32.xlu0 %v2740, 40
      %v2742 = vpop.permute.xlu0 %2741
      %v2744 = vmul.f32 %v2737, %v2742
      %2746 = vrot.lane.b32.xlu0 %v2744, 88
      %v2747 = vpop.permute.xlu0 %2746
      %v2749 = vsub.f32 %v2730, %v2747
      %v2750 = vmul.f32 %v2673, %v2749
      %2752 = vset.pattern.permute.xlu0 92
      %2753 = vperm.xlu0 %2752, %v2749
      %v2754 = vpop.permute.xlu0 %2753
      %v2756 = vmul.f32 %v2754, %v2750
      %v2757 = vsub.f32 %v2749, %v2756
      %v2759 = vrot.slane %v2757, 7
      %v2761 = vmul.f32 %v2673, %v2759
      %2762 = vset.pattern.permute.xlu0 93
      %2763 = vperm.xlu0 %2762, %v2757
      %v2764 = vpop.permute.xlu0 %2763
      %v2767 = vrot.slane %v2761, 1
      %2768 = vrot.lane.b32.xlu0 %v2767, 40
      %v2769 = vpop.permute.xlu0 %2768
      %v2771 = vmul.f32 %v2764, %v2769
      %2773 = vrot.lane.b32.xlu0 %v2771, 88
      %v2774 = vpop.permute.xlu0 %2773
      %v2776 = vsub.f32 %v2757, %v2774
      %v2778 = vrot.slane %v2776, 6
      %v2780 = vmul.f32 %v2673, %v2778
      %2781 = vset.pattern.permute.xlu0 94
      %2782 = vperm.xlu0 %2781, %v2776
      %v2783 = vpop.permute.xlu0 %2782
      %v2786 = vrot.slane %v2780, 2
      %2787 = vrot.lane.b32.xlu0 %v2786, 40
      %v2788 = vpop.permute.xlu0 %2787
      %v2790 = vmul.f32 %v2783, %v2788
      %2792 = vrot.lane.b32.xlu0 %v2790, 88
      %v2793 = vpop.permute.xlu0 %2792
      %v2795 = vsub.f32 %v2776, %v2793
      %v2797 = vrot.slane %v2795, 5
      %v2799 = vmul.f32 %v2673, %v2797
      %2800 = vset.pattern.permute.xlu0 95
      %2801 = vperm.xlu0 %2800, %v2795
      %v2802 = vpop.permute.xlu0 %2801
      %v2805 = vrot.slane %v2799, 3
      %2806 = vrot.lane.b32.xlu0 %v2805, 40
      %v2807 = vpop.permute.xlu0 %2806
      %v2809 = vmul.f32 %v2802, %v2807
      %2811 = vrot.lane.b32.xlu0 %v2809, 88
      %v2812 = vpop.permute.xlu0 %2811
      %v2814 = vsub.f32 %v2795, %v2812
      %v2816 = vrot.slane %v2814, 4
      %2817 = vrot.lane.b32.xlu0 %v2816, 40
      %v2818 = vpop.permute.xlu0 %2817
      %v2819 = vsel %vm365, %v2818, 0
      %2821 = vmatpush.msra.mxu0 0.0
      %2822 = vmatpush.msra.mxu0 0.0
      %2823 = vmatpush.msra.mxu0 0.0
      %2824 = vmatpush.msra.mxu0 0.0
      %2825 = vmatpush.msra.mxu0 0.0
      %2826 = vmatpush.msra.mxu0 0.0
      %2827 = vmatpush.msra.mxu0 0.0
      %2828 = vmatpush.msra.mxu0 0.0
      %2829 = vmatpush.msra.mxu0 0.0
      %2830 = vmatpush.msra.mxu0 0.0
      %2831 = vmatpush.msra.mxu0 0.0
      %2832 = vmatpush.msra.mxu0 0.0
      %2833 = vmatpush.msra.mxu0 0.0
      %2834 = vmatpush.msra.mxu0 0.0
      %2835 = vmatpush.msra.mxu0 0.0
      %2836 = vmatpush.msra.mxu0 %v2673
      %2837 = vmatmul.f32.gmra.mxu0 %v2819
      %v2838 = vpop.f32.mrf.mxu0
      %v2839 = vadd.f32 0.0, %v2838
      %2840 = vdwg.mxu0
      %vm2841 = vcmp.gt.f32.partialorder %v2839, 0.0
      %v2842 = vsel %vm2841, 0.0, 1.0
      %v2844 = vrot.slane %v2842, 4
      %v2846 = vmul.f32 %v2623, %v2844
      %v2847 = vld [vmem:[%s186 + $0x60] sm:$0xff]
      %2849 = vrot.lane.b32.xlu0 %v2847, 2
      %v2850 = vpop.permute.xlu0 %2849
      %v2852 = vsub.f32 %v2847, %v2850
      %2854 = vrot.lane.b32.xlu0 %v2852, 127
      %v2855 = vpop.permute.xlu0 %2854
      %v2857 = vmul.f32 %v2852, %v2855
      %2858 = vset.pattern.permute.xlu0 0
      %2859 = vperm.xlu0 %2858, %v2847
      %v2860 = vpop.permute.xlu0 %2859
      %v2862 = vmax.f32 %v2860, %v224
      %2863 = vset.pattern.permute.xlu0 1
      %2864 = vperm.xlu0 %2863, %v2847
      %v2865 = vpop.permute.xlu0 %2864
      %v2867 = vmax.f32 %v2865, %v230
      %2868 = vset.pattern.permute.xlu0 2
      %2869 = vperm.xlu0 %2868, %v2847
      %v2870 = vpop.permute.xlu0 %2869
      %v2872 = vmin.f32 %v2870, %v236
      %2873 = vset.pattern.permute.xlu0 3
      %2874 = vperm.xlu0 %2873, %v2847
      %v2875 = vpop.permute.xlu0 %2874
      %v2877 = vmin.f32 %v2875, %v242
      %v2878 = vsub.f32 %v2872, %v2862
      %v2879 = vmax.f32 %v2878, 0.0
      %v2880 = vsub.f32 %v2877, %v2867
      %v2881 = vmax.f32 %v2880, 0.0
      %v2882 = vmul.f32 %v2879, %v2881
      %2884 = vset.pattern.permute.xlu0 2
      %2885 = vperm.xlu0 %2884, %v2857
      %v2886 = vpop.permute.xlu0 %2885
      %v2888 = vadd.f32 %v2886, %v254
      %v2889 = vsub.f32 %v2888, %v2882
      %v2890 = vmul.f32 %v2889, 0.5
      %vm2891 = vcmp.gt.f32.partialorder %v2882, %v2890
      %vm2892 = vcmp.gt.f32.partialorder %v2882, 0.0
      %vm2893 = vmand %vm2891, %vm2892
      %vm2894 = vcmp.gt.s32.totalorder %v208, 96
      %vm2895 = vmand %vm2893, %vm2894
      %v2896 = vsel %vm2895, 1.0, 0.0
      %v2898 = vrot.slane %v2846, 4
      %v2900 = vmul.f32 %v2896, %v2898
      %2901 = vset.pattern.permute.xlu0 96
      %2902 = vperm.xlu0 %2901, %v2846
      %v2903 = vpop.permute.xlu0 %2902
      %v2906 = vrot.slane %v2900, 4
      %2907 = vrot.lane.b32.xlu0 %v2906, 32
      %v2908 = vpop.permute.xlu0 %2907
      %v2910 = vmul.f32 %v2903, %v2908
      %2912 = vrot.lane.b32.xlu0 %v2910, 96
      %v2913 = vpop.permute.xlu0 %2912
      %v2915 = vsub.f32 %v2846, %v2913
      %v2917 = vrot.slane %v2915, 3
      %v2919 = vmul.f32 %v2896, %v2917
      %2920 = vset.pattern.permute.xlu0 97
      %2921 = vperm.xlu0 %2920, %v2915
      %v2922 = vpop.permute.xlu0 %2921
      %v2925 = vrot.slane %v2919, 5
      %2926 = vrot.lane.b32.xlu0 %v2925, 32
      %v2927 = vpop.permute.xlu0 %2926
      %v2929 = vmul.f32 %v2922, %v2927
      %2931 = vrot.lane.b32.xlu0 %v2929, 96
      %v2932 = vpop.permute.xlu0 %2931
      %v2934 = vsub.f32 %v2915, %v2932
      %v2936 = vrot.slane %v2934, 2
      %v2938 = vmul.f32 %v2896, %v2936
      %2939 = vset.pattern.permute.xlu0 98
      %2940 = vperm.xlu0 %2939, %v2934
      %v2941 = vpop.permute.xlu0 %2940
      %v2944 = vrot.slane %v2938, 6
      %2945 = vrot.lane.b32.xlu0 %v2944, 32
      %v2946 = vpop.permute.xlu0 %2945
      %v2948 = vmul.f32 %v2941, %v2946
      %2950 = vrot.lane.b32.xlu0 %v2948, 96
      %v2951 = vpop.permute.xlu0 %2950
      %v2953 = vsub.f32 %v2934, %v2951
      %v2955 = vrot.slane %v2953, 1
      %v2957 = vmul.f32 %v2896, %v2955
      %2958 = vset.pattern.permute.xlu0 99
      %2959 = vperm.xlu0 %2958, %v2953
      %v2960 = vpop.permute.xlu0 %2959
      %v2963 = vrot.slane %v2957, 7
      %2964 = vrot.lane.b32.xlu0 %v2963, 32
      %v2965 = vpop.permute.xlu0 %2964
      %v2967 = vmul.f32 %v2960, %v2965
      %2969 = vrot.lane.b32.xlu0 %v2967, 96
      %v2970 = vpop.permute.xlu0 %2969
      %v2972 = vsub.f32 %v2953, %v2970
      %v2973 = vmul.f32 %v2896, %v2972
      %2975 = vset.pattern.permute.xlu0 100
      %2976 = vperm.xlu0 %2975, %v2972
      %v2977 = vpop.permute.xlu0 %2976
      %v2979 = vmul.f32 %v2977, %v2973
      %v2980 = vsub.f32 %v2972, %v2979
      %v2982 = vrot.slane %v2980, 7
      %v2984 = vmul.f32 %v2896, %v2982
      %2985 = vset.pattern.permute.xlu0 101
      %2986 = vperm.xlu0 %2985, %v2980
      %v2987 = vpop.permute.xlu0 %2986
      %v2990 = vrot.slane %v2984, 1
      %2991 = vrot.lane.b32.xlu0 %v2990, 32
      %v2992 = vpop.permute.xlu0 %2991
      %v2994 = vmul.f32 %v2987, %v2992
      %2996 = vrot.lane.b32.xlu0 %v2994, 96
      %v2997 = vpop.permute.xlu0 %2996
      %v2999 = vsub.f32 %v2980, %v2997
      %v3001 = vrot.slane %v2999, 6
      %v3003 = vmul.f32 %v2896, %v3001
      %3004 = vset.pattern.permute.xlu0 102
      %3005 = vperm.xlu0 %3004, %v2999
      %v3006 = vpop.permute.xlu0 %3005
      %v3009 = vrot.slane %v3003, 2
      %3010 = vrot.lane.b32.xlu0 %v3009, 32
      %v3011 = vpop.permute.xlu0 %3010
      %v3013 = vmul.f32 %v3006, %v3011
      %3015 = vrot.lane.b32.xlu0 %v3013, 96
      %v3016 = vpop.permute.xlu0 %3015
      %v3018 = vsub.f32 %v2999, %v3016
      %v3020 = vrot.slane %v3018, 5
      %v3022 = vmul.f32 %v2896, %v3020
      %3023 = vset.pattern.permute.xlu0 103
      %3024 = vperm.xlu0 %3023, %v3018
      %v3025 = vpop.permute.xlu0 %3024
      %v3028 = vrot.slane %v3022, 3
      %3029 = vrot.lane.b32.xlu0 %v3028, 32
      %v3030 = vpop.permute.xlu0 %3029
      %v3032 = vmul.f32 %v3025, %v3030
      %3034 = vrot.lane.b32.xlu0 %v3032, 96
      %v3035 = vpop.permute.xlu0 %3034
      %v3037 = vsub.f32 %v3018, %v3035
      %v3039 = vrot.slane %v3037, 4
      %3040 = vrot.lane.b32.xlu0 %v3039, 32
      %v3041 = vpop.permute.xlu0 %3040
      %v3042 = vsel %vm365, %v3041, 0
      %3044 = vmatpush.msra.mxu0 0.0
      %3045 = vmatpush.msra.mxu0 0.0
      %3046 = vmatpush.msra.mxu0 0.0
      %3047 = vmatpush.msra.mxu0 0.0
      %3048 = vmatpush.msra.mxu0 0.0
      %3049 = vmatpush.msra.mxu0 0.0
      %3050 = vmatpush.msra.mxu0 0.0
      %3051 = vmatpush.msra.mxu0 0.0
      %3052 = vmatpush.msra.mxu0 0.0
      %3053 = vmatpush.msra.mxu0 0.0
      %3054 = vmatpush.msra.mxu0 0.0
      %3055 = vmatpush.msra.mxu0 0.0
      %3056 = vmatpush.msra.mxu0 0.0
      %3057 = vmatpush.msra.mxu0 0.0
      %3058 = vmatpush.msra.mxu0 0.0
      %3059 = vmatpush.msra.mxu0 %v2896
      %3060 = vmatmul.f32.gmra.mxu0 %v3042
      %v3061 = vpop.f32.mrf.mxu0
      %v3062 = vadd.f32 0.0, %v3061
      %3063 = vdwg.mxu0
      %vm3064 = vcmp.gt.f32.partialorder %v3062, 0.0
      %v3065 = vsel %vm3064, 0.0, 1.0
      %v3067 = vrot.slane %v3065, 4
      %v3069 = vmul.f32 %v2846, %v3067
      %v3070 = vld [vmem:[%s186 + $0x68] sm:$0xff]
      %3072 = vrot.lane.b32.xlu0 %v3070, 2
      %v3073 = vpop.permute.xlu0 %3072
      %v3075 = vsub.f32 %v3070, %v3073
      %3077 = vrot.lane.b32.xlu0 %v3075, 127
      %v3078 = vpop.permute.xlu0 %3077
      %v3080 = vmul.f32 %v3075, %v3078
      %3081 = vset.pattern.permute.xlu0 0
      %3082 = vperm.xlu0 %3081, %v3070
      %v3083 = vpop.permute.xlu0 %3082
      %v3085 = vmax.f32 %v3083, %v224
      %3086 = vset.pattern.permute.xlu0 1
      %3087 = vperm.xlu0 %3086, %v3070
      %v3088 = vpop.permute.xlu0 %3087
      %v3090 = vmax.f32 %v3088, %v230
      %3091 = vset.pattern.permute.xlu0 2
      %3092 = vperm.xlu0 %3091, %v3070
      %v3093 = vpop.permute.xlu0 %3092
      %v3095 = vmin.f32 %v3093, %v236
      %3096 = vset.pattern.permute.xlu0 3
      %3097 = vperm.xlu0 %3096, %v3070
      %v3098 = vpop.permute.xlu0 %3097
      %v3100 = vmin.f32 %v3098, %v242
      %v3101 = vsub.f32 %v3095, %v3085
      %v3102 = vmax.f32 %v3101, 0.0
      %v3103 = vsub.f32 %v3100, %v3090
      %v3104 = vmax.f32 %v3103, 0.0
      %v3105 = vmul.f32 %v3102, %v3104
      %3107 = vset.pattern.permute.xlu0 2
      %3108 = vperm.xlu0 %3107, %v3080
      %v3109 = vpop.permute.xlu0 %3108
      %v3111 = vadd.f32 %v3109, %v254
      %v3112 = vsub.f32 %v3111, %v3105
      %v3113 = vmul.f32 %v3112, 0.5
      %vm3114 = vcmp.gt.f32.partialorder %v3105, %v3113
      %vm3115 = vcmp.gt.f32.partialorder %v3105, 0.0
      %vm3116 = vmand %vm3114, %vm3115
      %vm3117 = vcmp.gt.s32.totalorder %v208, 104
      %vm3118 = vmand %vm3116, %vm3117
      %v3119 = vsel %vm3118, 1.0, 0.0
      %v3121 = vrot.slane %v3069, 4
      %v3123 = vmul.f32 %v3119, %v3121
      %3124 = vset.pattern.permute.xlu0 104
      %3125 = vperm.xlu0 %3124, %v3069
      %v3126 = vpop.permute.xlu0 %3125
      %v3129 = vrot.slane %v3123, 4
      %3130 = vrot.lane.b32.xlu0 %v3129, 24
      %v3131 = vpop.permute.xlu0 %3130
      %v3133 = vmul.f32 %v3126, %v3131
      %3135 = vrot.lane.b32.xlu0 %v3133, 104
      %v3136 = vpop.permute.xlu0 %3135
      %v3138 = vsub.f32 %v3069, %v3136
      %v3140 = vrot.slane %v3138, 3
      %v3142 = vmul.f32 %v3119, %v3140
      %3143 = vset.pattern.permute.xlu0 105
      %3144 = vperm.xlu0 %3143, %v3138
      %v3145 = vpop.permute.xlu0 %3144
      %v3148 = vrot.slane %v3142, 5
      %3149 = vrot.lane.b32.xlu0 %v3148, 24
      %v3150 = vpop.permute.xlu0 %3149
      %v3152 = vmul.f32 %v3145, %v3150
      %3154 = vrot.lane.b32.xlu0 %v3152, 104
      %v3155 = vpop.permute.xlu0 %3154
      %v3157 = vsub.f32 %v3138, %v3155
      %v3159 = vrot.slane %v3157, 2
      %v3161 = vmul.f32 %v3119, %v3159
      %3162 = vset.pattern.permute.xlu0 106
      %3163 = vperm.xlu0 %3162, %v3157
      %v3164 = vpop.permute.xlu0 %3163
      %v3167 = vrot.slane %v3161, 6
      %3168 = vrot.lane.b32.xlu0 %v3167, 24
      %v3169 = vpop.permute.xlu0 %3168
      %v3171 = vmul.f32 %v3164, %v3169
      %3173 = vrot.lane.b32.xlu0 %v3171, 104
      %v3174 = vpop.permute.xlu0 %3173
      %v3176 = vsub.f32 %v3157, %v3174
      %v3178 = vrot.slane %v3176, 1
      %v3180 = vmul.f32 %v3119, %v3178
      %3181 = vset.pattern.permute.xlu0 107
      %3182 = vperm.xlu0 %3181, %v3176
      %v3183 = vpop.permute.xlu0 %3182
      %v3186 = vrot.slane %v3180, 7
      %3187 = vrot.lane.b32.xlu0 %v3186, 24
      %v3188 = vpop.permute.xlu0 %3187
      %v3190 = vmul.f32 %v3183, %v3188
      %3192 = vrot.lane.b32.xlu0 %v3190, 104
      %v3193 = vpop.permute.xlu0 %3192
      %v3195 = vsub.f32 %v3176, %v3193
      %v3196 = vmul.f32 %v3119, %v3195
      %3198 = vset.pattern.permute.xlu0 108
      %3199 = vperm.xlu0 %3198, %v3195
      %v3200 = vpop.permute.xlu0 %3199
      %v3202 = vmul.f32 %v3200, %v3196
      %v3203 = vsub.f32 %v3195, %v3202
      %v3205 = vrot.slane %v3203, 7
      %v3207 = vmul.f32 %v3119, %v3205
      %3208 = vset.pattern.permute.xlu0 109
      %3209 = vperm.xlu0 %3208, %v3203
      %v3210 = vpop.permute.xlu0 %3209
      %v3213 = vrot.slane %v3207, 1
      %3214 = vrot.lane.b32.xlu0 %v3213, 24
      %v3215 = vpop.permute.xlu0 %3214
      %v3217 = vmul.f32 %v3210, %v3215
      %3219 = vrot.lane.b32.xlu0 %v3217, 104
      %v3220 = vpop.permute.xlu0 %3219
      %v3222 = vsub.f32 %v3203, %v3220
      %v3224 = vrot.slane %v3222, 6
      %v3226 = vmul.f32 %v3119, %v3224
      %3227 = vset.pattern.permute.xlu0 110
      %3228 = vperm.xlu0 %3227, %v3222
      %v3229 = vpop.permute.xlu0 %3228
      %v3232 = vrot.slane %v3226, 2
      %3233 = vrot.lane.b32.xlu0 %v3232, 24
      %v3234 = vpop.permute.xlu0 %3233
      %v3236 = vmul.f32 %v3229, %v3234
      %3238 = vrot.lane.b32.xlu0 %v3236, 104
      %v3239 = vpop.permute.xlu0 %3238
      %v3241 = vsub.f32 %v3222, %v3239
      %v3243 = vrot.slane %v3241, 5
      %v3245 = vmul.f32 %v3119, %v3243
      %3246 = vset.pattern.permute.xlu0 111
      %3247 = vperm.xlu0 %3246, %v3241
      %v3248 = vpop.permute.xlu0 %3247
      %v3251 = vrot.slane %v3245, 3
      %3252 = vrot.lane.b32.xlu0 %v3251, 24
      %v3253 = vpop.permute.xlu0 %3252
      %v3255 = vmul.f32 %v3248, %v3253
      %3257 = vrot.lane.b32.xlu0 %v3255, 104
      %v3258 = vpop.permute.xlu0 %3257
      %v3260 = vsub.f32 %v3241, %v3258
      %v3262 = vrot.slane %v3260, 4
      %3263 = vrot.lane.b32.xlu0 %v3262, 24
      %v3264 = vpop.permute.xlu0 %3263
      %v3265 = vsel %vm365, %v3264, 0
      %3267 = vmatpush.msra.mxu0 0.0
      %3268 = vmatpush.msra.mxu0 0.0
      %3269 = vmatpush.msra.mxu0 0.0
      %3270 = vmatpush.msra.mxu0 0.0
      %3271 = vmatpush.msra.mxu0 0.0
      %3272 = vmatpush.msra.mxu0 0.0
      %3273 = vmatpush.msra.mxu0 0.0
      %3274 = vmatpush.msra.mxu0 0.0
      %3275 = vmatpush.msra.mxu0 0.0
      %3276 = vmatpush.msra.mxu0 0.0
      %3277 = vmatpush.msra.mxu0 0.0
      %3278 = vmatpush.msra.mxu0 0.0
      %3279 = vmatpush.msra.mxu0 0.0
      %3280 = vmatpush.msra.mxu0 0.0
      %3281 = vmatpush.msra.mxu0 0.0
      %3282 = vmatpush.msra.mxu0 %v3119
      %3283 = vmatmul.f32.gmra.mxu0 %v3265
      %v3284 = vpop.f32.mrf.mxu0
      %v3285 = vadd.f32 0.0, %v3284
      %3286 = vdwg.mxu0
      %vm3287 = vcmp.gt.f32.partialorder %v3285, 0.0
      %v3288 = vsel %vm3287, 0.0, 1.0
      %v3290 = vrot.slane %v3288, 4
      %v3292 = vmul.f32 %v3069, %v3290
      %v3293 = vld [vmem:[%s186 + $0x70] sm:$0xff]
      %3295 = vrot.lane.b32.xlu0 %v3293, 2
      %v3296 = vpop.permute.xlu0 %3295
      %v3298 = vsub.f32 %v3293, %v3296
      %3300 = vrot.lane.b32.xlu0 %v3298, 127
      %v3301 = vpop.permute.xlu0 %3300
      %v3303 = vmul.f32 %v3298, %v3301
      %3304 = vset.pattern.permute.xlu0 0
      %3305 = vperm.xlu0 %3304, %v3293
      %v3306 = vpop.permute.xlu0 %3305
      %v3308 = vmax.f32 %v3306, %v224
      %3309 = vset.pattern.permute.xlu0 1
      %3310 = vperm.xlu0 %3309, %v3293
      %v3311 = vpop.permute.xlu0 %3310
      %v3313 = vmax.f32 %v3311, %v230
      %3314 = vset.pattern.permute.xlu0 2
      %3315 = vperm.xlu0 %3314, %v3293
      %v3316 = vpop.permute.xlu0 %3315
      %v3318 = vmin.f32 %v3316, %v236
      %3319 = vset.pattern.permute.xlu0 3
      %3320 = vperm.xlu0 %3319, %v3293
      %v3321 = vpop.permute.xlu0 %3320
      %v3323 = vmin.f32 %v3321, %v242
      %v3324 = vsub.f32 %v3318, %v3308
      %v3325 = vmax.f32 %v3324, 0.0
      %v3326 = vsub.f32 %v3323, %v3313
      %v3327 = vmax.f32 %v3326, 0.0
      %v3328 = vmul.f32 %v3325, %v3327
      %3330 = vset.pattern.permute.xlu0 2
      %3331 = vperm.xlu0 %3330, %v3303
      %v3332 = vpop.permute.xlu0 %3331
      %v3334 = vadd.f32 %v3332, %v254
      %v3335 = vsub.f32 %v3334, %v3328
      %v3336 = vmul.f32 %v3335, 0.5
      %vm3337 = vcmp.gt.f32.partialorder %v3328, %v3336
      %vm3338 = vcmp.gt.f32.partialorder %v3328, 0.0
      %vm3339 = vmand %vm3337, %vm3338
      %vm3340 = vcmp.gt.s32.totalorder %v208, 112
      %vm3341 = vmand %vm3339, %vm3340
      %v3342 = vsel %vm3341, 1.0, 0.0
      %v3344 = vrot.slane %v3292, 4
      %v3346 = vmul.f32 %v3342, %v3344
      %3347 = vset.pattern.permute.xlu0 112
      %3348 = vperm.xlu0 %3347, %v3292
      %v3349 = vpop.permute.xlu0 %3348
      %v3352 = vrot.slane %v3346, 4
      %3353 = vrot.lane.b32.xlu0 %v3352, 16
      %v3354 = vpop.permute.xlu0 %3353
      %v3356 = vmul.f32 %v3349, %v3354
      %3358 = vrot.lane.b32.xlu0 %v3356, 112
      %v3359 = vpop.permute.xlu0 %3358
      %v3361 = vsub.f32 %v3292, %v3359
      %v3363 = vrot.slane %v3361, 3
      %v3365 = vmul.f32 %v3342, %v3363
      %3366 = vset.pattern.permute.xlu0 113
      %3367 = vperm.xlu0 %3366, %v3361
      %v3368 = vpop.permute.xlu0 %3367
      %v3371 = vrot.slane %v3365, 5
      %3372 = vrot.lane.b32.xlu0 %v3371, 16
      %v3373 = vpop.permute.xlu0 %3372
      %v3375 = vmul.f32 %v3368, %v3373
      %3377 = vrot.lane.b32.xlu0 %v3375, 112
      %v3378 = vpop.permute.xlu0 %3377
      %v3380 = vsub.f32 %v3361, %v3378
      %v3382 = vrot.slane %v3380, 2
      %v3384 = vmul.f32 %v3342, %v3382
      %3385 = vset.pattern.permute.xlu0 114
      %3386 = vperm.xlu0 %3385, %v3380
      %v3387 = vpop.permute.xlu0 %3386
      %v3390 = vrot.slane %v3384, 6
      %3391 = vrot.lane.b32.xlu0 %v3390, 16
      %v3392 = vpop.permute.xlu0 %3391
      %v3394 = vmul.f32 %v3387, %v3392
      %3396 = vrot.lane.b32.xlu0 %v3394, 112
      %v3397 = vpop.permute.xlu0 %3396
      %v3399 = vsub.f32 %v3380, %v3397
      %v3401 = vrot.slane %v3399, 1
      %v3403 = vmul.f32 %v3342, %v3401
      %3404 = vset.pattern.permute.xlu0 115
      %3405 = vperm.xlu0 %3404, %v3399
      %v3406 = vpop.permute.xlu0 %3405
      %v3409 = vrot.slane %v3403, 7
      %3410 = vrot.lane.b32.xlu0 %v3409, 16
      %v3411 = vpop.permute.xlu0 %3410
      %v3413 = vmul.f32 %v3406, %v3411
      %3415 = vrot.lane.b32.xlu0 %v3413, 112
      %v3416 = vpop.permute.xlu0 %3415
      %v3418 = vsub.f32 %v3399, %v3416
      %v3419 = vmul.f32 %v3342, %v3418
      %3421 = vset.pattern.permute.xlu0 116
      %3422 = vperm.xlu0 %3421, %v3418
      %v3423 = vpop.permute.xlu0 %3422
      %v3425 = vmul.f32 %v3423, %v3419
      %v3426 = vsub.f32 %v3418, %v3425
      %v3428 = vrot.slane %v3426, 7
      %v3430 = vmul.f32 %v3342, %v3428
      %3431 = vset.pattern.permute.xlu0 117
      %3432 = vperm.xlu0 %3431, %v3426
      %v3433 = vpop.permute.xlu0 %3432
      %v3436 = vrot.slane %v3430, 1
      %3437 = vrot.lane.b32.xlu0 %v3436, 16
      %v3438 = vpop.permute.xlu0 %3437
      %v3440 = vmul.f32 %v3433, %v3438
      %3442 = vrot.lane.b32.xlu0 %v3440, 112
      %v3443 = vpop.permute.xlu0 %3442
      %v3445 = vsub.f32 %v3426, %v3443
      %v3447 = vrot.slane %v3445, 6
      %v3449 = vmul.f32 %v3342, %v3447
      %3450 = vset.pattern.permute.xlu0 118
      %3451 = vperm.xlu0 %3450, %v3445
      %v3452 = vpop.permute.xlu0 %3451
      %v3455 = vrot.slane %v3449, 2
      %3456 = vrot.lane.b32.xlu0 %v3455, 16
      %v3457 = vpop.permute.xlu0 %3456
      %v3459 = vmul.f32 %v3452, %v3457
      %3461 = vrot.lane.b32.xlu0 %v3459, 112
      %v3462 = vpop.permute.xlu0 %3461
      %v3464 = vsub.f32 %v3445, %v3462
      %v3466 = vrot.slane %v3464, 5
      %v3468 = vmul.f32 %v3342, %v3466
      %3469 = vset.pattern.permute.xlu0 119
      %3470 = vperm.xlu0 %3469, %v3464
      %v3471 = vpop.permute.xlu0 %3470
      %v3474 = vrot.slane %v3468, 3
      %3475 = vrot.lane.b32.xlu0 %v3474, 16
      %v3476 = vpop.permute.xlu0 %3475
      %v3478 = vmul.f32 %v3471, %v3476
      %3480 = vrot.lane.b32.xlu0 %v3478, 112
      %v3481 = vpop.permute.xlu0 %3480
      %v3483 = vsub.f32 %v3464, %v3481
      %v3485 = vrot.slane %v3483, 4
      %3486 = vrot.lane.b32.xlu0 %v3485, 16
      %v3487 = vpop.permute.xlu0 %3486
      %v3488 = vsel %vm365, %v3487, 0
      %3490 = vmatpush.msra.mxu0 0.0
      %3491 = vmatpush.msra.mxu0 0.0
      %3492 = vmatpush.msra.mxu0 0.0
      %3493 = vmatpush.msra.mxu0 0.0
      %3494 = vmatpush.msra.mxu0 0.0
      %3495 = vmatpush.msra.mxu0 0.0
      %3496 = vmatpush.msra.mxu0 0.0
      %3497 = vmatpush.msra.mxu0 0.0
      %3498 = vmatpush.msra.mxu0 0.0
      %3499 = vmatpush.msra.mxu0 0.0
      %3500 = vmatpush.msra.mxu0 0.0
      %3501 = vmatpush.msra.mxu0 0.0
      %3502 = vmatpush.msra.mxu0 0.0
      %3503 = vmatpush.msra.mxu0 0.0
      %3504 = vmatpush.msra.mxu0 0.0
      %3505 = vmatpush.msra.mxu0 %v3342
      %3506 = vmatmul.f32.gmra.mxu0 %v3488
      %v3507 = vpop.f32.mrf.mxu0
      %v3508 = vadd.f32 0.0, %v3507
      %3509 = vdwg.mxu0
      %vm3510 = vcmp.gt.f32.partialorder %v3508, 0.0
      %v3511 = vsel %vm3510, 0.0, 1.0
      %v3513 = vrot.slane %v3511, 4
      %v3515 = vmul.f32 %v3292, %v3513
      %v3516 = vld [vmem:[%s186 + $0x78] sm:$0xff]
      %3518 = vrot.lane.b32.xlu0 %v3516, 2
      %v3519 = vpop.permute.xlu0 %3518
      %v3521 = vsub.f32 %v3516, %v3519
      %3523 = vrot.lane.b32.xlu0 %v3521, 127
      %v3524 = vpop.permute.xlu0 %3523
      %v3526 = vmul.f32 %v3521, %v3524
      %3527 = vset.pattern.permute.xlu0 0
      %3528 = vperm.xlu0 %3527, %v3516
      %v3529 = vpop.permute.xlu0 %3528
      %v3531 = vmax.f32 %v3529, %v224
      %3532 = vset.pattern.permute.xlu0 1
      %3533 = vperm.xlu0 %3532, %v3516
      %v3534 = vpop.permute.xlu0 %3533
      %v3536 = vmax.f32 %v3534, %v230
      %3537 = vset.pattern.permute.xlu0 2
      %3538 = vperm.xlu0 %3537, %v3516
      %v3539 = vpop.permute.xlu0 %3538
      %v3541 = vmin.f32 %v3539, %v236
      %3542 = vset.pattern.permute.xlu0 3
      %3543 = vperm.xlu0 %3542, %v3516
      %v3544 = vpop.permute.xlu0 %3543
      %v3546 = vmin.f32 %v3544, %v242
      %v3547 = vsub.f32 %v3541, %v3531
      %v3548 = vmax.f32 %v3547, 0.0
      %v3549 = vsub.f32 %v3546, %v3536
      %v3550 = vmax.f32 %v3549, 0.0
      %v3551 = vmul.f32 %v3548, %v3550
      %3553 = vset.pattern.permute.xlu0 2
      %3554 = vperm.xlu0 %3553, %v3526
      %v3555 = vpop.permute.xlu0 %3554
      %v3557 = vadd.f32 %v3555, %v254
      %v3558 = vsub.f32 %v3557, %v3551
      %v3559 = vmul.f32 %v3558, 0.5
      %vm3560 = vcmp.gt.f32.partialorder %v3551, %v3559
      %vm3561 = vcmp.gt.f32.partialorder %v3551, 0.0
      %vm3562 = vmand %vm3560, %vm3561
      %vm3563 = vcmp.gt.s32.totalorder %v208, 120
      %vm3564 = vmand %vm3562, %vm3563
      %v3565 = vsel %vm3564, 1.0, 0.0
      %v3567 = vrot.slane %v3515, 4
      %v3569 = vmul.f32 %v3565, %v3567
      %3570 = vset.pattern.permute.xlu0 120
      %3571 = vperm.xlu0 %3570, %v3515
      %v3572 = vpop.permute.xlu0 %3571
      %v3575 = vrot.slane %v3569, 4
      %3576 = vrot.lane.b32.xlu0 %v3575, 8
      %v3577 = vpop.permute.xlu0 %3576
      %v3579 = vmul.f32 %v3572, %v3577
      %3581 = vrot.lane.b32.xlu0 %v3579, 120
      %v3582 = vpop.permute.xlu0 %3581
      %v3584 = vsub.f32 %v3515, %v3582
      %v3586 = vrot.slane %v3584, 3
      %v3588 = vmul.f32 %v3565, %v3586
      %3589 = vset.pattern.permute.xlu0 121
      %3590 = vperm.xlu0 %3589, %v3584
      %v3591 = vpop.permute.xlu0 %3590
      %v3594 = vrot.slane %v3588, 5
      %3595 = vrot.lane.b32.xlu0 %v3594, 8
      %v3596 = vpop.permute.xlu0 %3595
      %v3598 = vmul.f32 %v3591, %v3596
      %3600 = vrot.lane.b32.xlu0 %v3598, 120
      %v3601 = vpop.permute.xlu0 %3600
      %v3603 = vsub.f32 %v3584, %v3601
      %v3605 = vrot.slane %v3603, 2
      %v3607 = vmul.f32 %v3565, %v3605
      %3608 = vset.pattern.permute.xlu0 122
      %3609 = vperm.xlu0 %3608, %v3603
      %v3610 = vpop.permute.xlu0 %3609
      %v3613 = vrot.slane %v3607, 6
      %3614 = vrot.lane.b32.xlu0 %v3613, 8
      %v3615 = vpop.permute.xlu0 %3614
      %v3617 = vmul.f32 %v3610, %v3615
      %3619 = vrot.lane.b32.xlu0 %v3617, 120
      %v3620 = vpop.permute.xlu0 %3619
      %v3622 = vsub.f32 %v3603, %v3620
      %v3624 = vrot.slane %v3622, 1
      %v3626 = vmul.f32 %v3565, %v3624
      %3627 = vset.pattern.permute.xlu0 123
      %3628 = vperm.xlu0 %3627, %v3622
      %v3629 = vpop.permute.xlu0 %3628
      %v3632 = vrot.slane %v3626, 7
      %3633 = vrot.lane.b32.xlu0 %v3632, 8
      %v3634 = vpop.permute.xlu0 %3633
      %v3636 = vmul.f32 %v3629, %v3634
      %3638 = vrot.lane.b32.xlu0 %v3636, 120
      %v3639 = vpop.permute.xlu0 %3638
      %v3641 = vsub.f32 %v3622, %v3639
      %v3642 = vmul.f32 %v3565, %v3641
      %3644 = vset.pattern.permute.xlu0 124
      %3645 = vperm.xlu0 %3644, %v3641
      %v3646 = vpop.permute.xlu0 %3645
      %v3648 = vmul.f32 %v3646, %v3642
      %v3649 = vsub.f32 %v3641, %v3648
      %v3651 = vrot.slane %v3649, 7
      %v3653 = vmul.f32 %v3565, %v3651
      %3654 = vset.pattern.permute.xlu0 125
      %3655 = vperm.xlu0 %3654, %v3649
      %v3656 = vpop.permute.xlu0 %3655
      %v3659 = vrot.slane %v3653, 1
      %3660 = vrot.lane.b32.xlu0 %v3659, 8
      %v3661 = vpop.permute.xlu0 %3660
      %v3663 = vmul.f32 %v3656, %v3661
      %3665 = vrot.lane.b32.xlu0 %v3663, 120
      %v3666 = vpop.permute.xlu0 %3665
      %v3668 = vsub.f32 %v3649, %v3666
      %v3670 = vrot.slane %v3668, 6
      %v3672 = vmul.f32 %v3565, %v3670
      %3673 = vset.pattern.permute.xlu0 126
      %3674 = vperm.xlu0 %3673, %v3668
      %v3675 = vpop.permute.xlu0 %3674
      %v3678 = vrot.slane %v3672, 2
      %3679 = vrot.lane.b32.xlu0 %v3678, 8
      %v3680 = vpop.permute.xlu0 %3679
      %v3682 = vmul.f32 %v3675, %v3680
      %3684 = vrot.lane.b32.xlu0 %v3682, 120
      %v3685 = vpop.permute.xlu0 %3684
      %v3687 = vsub.f32 %v3668, %v3685
      %v3689 = vrot.slane %v3687, 5
      %v3691 = vmul.f32 %v3565, %v3689
      %3692 = vset.pattern.permute.xlu0 127
      %3693 = vperm.xlu0 %3692, %v3687
      %v3694 = vpop.permute.xlu0 %3693
      %v3697 = vrot.slane %v3691, 3
      %3698 = vrot.lane.b32.xlu0 %v3697, 8
      %v3699 = vpop.permute.xlu0 %3698
      %v3701 = vmul.f32 %v3694, %v3699
      %3703 = vrot.lane.b32.xlu0 %v3701, 120
      %v3704 = vpop.permute.xlu0 %3703
      %v3706 = vsub.f32 %v3687, %v3704
      %v3708 = vrot.slane %v3706, 4
      %3709 = vrot.lane.b32.xlu0 %v3708, 8
      %v3710 = vpop.permute.xlu0 %3709
      %v3711 = vsel %vm365, %v3710, 0
      %3713 = vmatpush.msra.mxu0 0.0
      %3714 = vmatpush.msra.mxu0 0.0
      %3715 = vmatpush.msra.mxu0 0.0
      %3716 = vmatpush.msra.mxu0 0.0
      %3717 = vmatpush.msra.mxu0 0.0
      %3718 = vmatpush.msra.mxu0 0.0
      %3719 = vmatpush.msra.mxu0 0.0
      %3720 = vmatpush.msra.mxu0 0.0
      %3721 = vmatpush.msra.mxu0 0.0
      %3722 = vmatpush.msra.mxu0 0.0
      %3723 = vmatpush.msra.mxu0 0.0
      %3724 = vmatpush.msra.mxu0 0.0
      %3725 = vmatpush.msra.mxu0 0.0
      %3726 = vmatpush.msra.mxu0 0.0
      %3727 = vmatpush.msra.mxu0 0.0
      %3728 = vmatpush.msra.mxu0 %v3565
      %3729 = vmatmul.f32.gmra.mxu0 %v3711
      %v3730 = vpop.f32.mrf.mxu0
      %v3731 = vadd.f32 0.0, %v3730
      %3732 = vdwg.mxu0
      %vm3733 = vcmp.gt.f32.partialorder %v3731, 0.0
      %v3734 = vsel %vm3733, 0.0, 1.0
      %v3736 = vrot.slane %v3734, 4
      %v3738 = vmul.f32 %v3515, %v3736
      %3739 = vst [vmem:[%s189 - $0x4] sm:$0x10] %v3738
      %v3740 = vadd.s32 %v207, 8
      %v3741 = vadd.s32 %v207, 16
      %v3742 = vadd.s32 %v207, 24
      %v3743 = vadd.s32 %v207, 32
      %v3744 = vadd.s32 %v207, 40
      %v3745 = vadd.s32 %v207, 48
      %v3746 = vadd.s32 %v207, 56
      %v3747 = vadd.s32 %v207, 64
      %v3748 = vadd.s32 %v207, 72
      %v3749 = vadd.s32 %v207, 80
      %v3750 = vadd.s32 %v207, 88
      %v3751 = vadd.s32 %v207, 96
      %v3752 = vadd.s32 %v207, 104
      %v3753 = vadd.s32 %v207, 112
      %v3754 = vadd.s32 %v207, 120
      %vm3755 = vcmp.le.s32.totalorder %v207, %v205
      %vm3756 = vcmp.le.s32.totalorder %v3740, %v205
      %vm3757 = vcmp.le.s32.totalorder %v3741, %v205
      %vm3758 = vcmp.le.s32.totalorder %v3742, %v205
      %vm3759 = vcmp.le.s32.totalorder %v3743, %v205
      %vm3760 = vcmp.le.s32.totalorder %v3744, %v205
      %vm3761 = vcmp.le.s32.totalorder %v3745, %v205
      %vm3762 = vcmp.le.s32.totalorder %v3746, %v205
      %vm3763 = vcmp.le.s32.totalorder %v3747, %v205
      %vm3764 = vcmp.le.s32.totalorder %v3748, %v205
      %vm3765 = vcmp.le.s32.totalorder %v3749, %v205
      %vm3766 = vcmp.le.s32.totalorder %v3750, %v205
      %vm3767 = vcmp.le.s32.totalorder %v3751, %v205
      %vm3768 = vcmp.le.s32.totalorder %v3752, %v205
      %vm3769 = vcmp.le.s32.totalorder %v3753, %v205
      %vm3770 = vcmp.le.s32.totalorder %v3754, %v205
      %v3771 = vsel %vm3755, 1.0, 0.0
      %v3772 = vsel %vm3756, 1.0, 0.0
      %v3773 = vsel %vm3757, 1.0, 0.0
      %v3774 = vsel %vm3758, 1.0, 0.0
      %v3775 = vsel %vm3759, 1.0, 0.0
      %v3776 = vsel %vm3760, 1.0, 0.0
      %v3777 = vsel %vm3761, 1.0, 0.0
      %v3778 = vsel %vm3762, 1.0, 0.0
      %v3779 = vsel %vm3763, 1.0, 0.0
      %v3780 = vsel %vm3764, 1.0, 0.0
      %v3781 = vsel %vm3765, 1.0, 0.0
      %v3782 = vsel %vm3766, 1.0, 0.0
      %v3783 = vsel %vm3767, 1.0, 0.0
      %v3784 = vsel %vm3768, 1.0, 0.0
      %v3785 = vsel %vm3769, 1.0, 0.0
      %v3786 = vsel %vm3770, 1.0, 0.0
      %v3788 = vrot.slane %v3738, 4
      %3790 = vmatpush.msra.mxu0 %v3786
      %3791 = vmatpush.msra.mxu0 %v3785
      %3792 = vmatpush.msra.mxu0 %v3784
      %3793 = vmatpush.msra.mxu0 %v3783
      %3794 = vmatpush.msra.mxu0 %v3782
      %3795 = vmatpush.msra.mxu0 %v3781
      %3796 = vmatpush.msra.mxu0 %v3780
      %3797 = vmatpush.msra.mxu0 %v3779
      %3798 = vmatpush.msra.mxu0 %v3778
      %3799 = vmatpush.msra.mxu0 %v3777
      %3800 = vmatpush.msra.mxu0 %v3776
      %3801 = vmatpush.msra.mxu0 %v3775
      %3802 = vmatpush.msra.mxu0 %v3774
      %3803 = vmatpush.msra.mxu0 %v3773
      %3804 = vmatpush.msra.mxu0 %v3772
      %3805 = vmatpush.msra.mxu0 %v3771
      %3806 = vmatmul.f32.gmra.mxu0 %v3788
      %v3807 = vpop.f32.mrf.mxu0
      %v3808 = vadd.f32 0.0, %v3807
      %3809 = vdwg.mxu0
      %vm3810 = vcmask 1044484
      %v3811 = vsel %vm3810, %v3738, 0.0
      %3812 = vadd.xlane.f32.xlu0 %v3811
      %v3813 = vpop.xlane.xlu0 %3812
      %v3814 = vcvt.s32.f32 %v205
      %vm3815 = vcmp.gt.f32.partialorder %v3738, 0.0
      %v3816 = vsub.f32 %v3808, 1.0
      %v3817 = vadd.f32 %v3813, %v3814
      %v3819 = vrot.slane %v3808, 4
      %v3821 = vsub.f32 %v3817, %v3819
      %v3823 = vrot.slane %v3816, 4
      %v3825 = vsel %vm3815, %v3823, %v3821
      %v3826 = vcvt.f32.s32.to.zero.pseudo %v3825
      %3827 = vst [vmem:[%s192 - $0x4] sm:$0x10] %v3826
      %p3828 = scmp.lt.s32.totalorder %s15, 1
      %s3829 = scalar_select %p3828, %s15, 1
      %s3830 = scalar_lea.vmem %s2, %s3829
      %p3831 = scmp.lt.s32.totalorder %s15, 1
      %s3832 = scalar_select %p3831, %s15, 1
      %s3833 = scalar_lea.vmem %s3, %s3832
      // Predicated region
      $region29: #{jit_wrapper_forward_batch.1} parent=27 // pred_check
        %p3834 = pneg %p85
      $region30: #{jit_wrapper_forward_batch.1} parent=27 // pred_check_branch
        %3836 = sbr.rel (%p3834) target = $region32
      $region31: #{jit_wrapper_forward_batch.1} parent=27 // pred_region
        _
      $region32: #{jit_wrapper_forward_batch.1} parent=27 // pred_fallthru
        _
      // Predicated region
      $region33: #{jit_wrapper_forward_batch.1} parent=27 // pred_check
        %p3837 = pneg %p111
      $region34: #{jit_wrapper_forward_batch.1} parent=27 // pred_check_branch
        %3839 = sbr.rel (%p3837) target = $region36
      $region35: #{jit_wrapper_forward_batch.1} parent=27 // pred_region
        _
      $region36: #{jit_wrapper_forward_batch.1} parent=27 // pred_fallthru
        _
    $region28: #{jit_wrapper_forward_batch.1} parent=5 // pred_fallthru
      _
    %p3840 = scmp.le.s32.totalorder 2, %s10
    // Predicated region
    $region37: #{jit_wrapper_forward_batch.1} parent=5 // pred_check
      %p3841 = pneg %p3840
    $region38: #{jit_wrapper_forward_batch.1} parent=5 // pred_check_branch
      %3843 = sbr.rel (%p3841) target = $region40
    $region39: #{jit_wrapper_forward_batch.1} parent=5 // pred_region
      %s3844 = ssub.s32 %s10, 2
      // Predicated region
      $region41: #{jit_wrapper_forward_batch.1} parent=39 // pred_check
        %p3845 = pneg %p91
      $region42: #{jit_wrapper_forward_batch.1} parent=39 // pred_check_branch
        %3847 = sbr.rel (%p3845) target = $region44
      $region43: #{jit_wrapper_forward_batch.1} parent=39 // pred_region
        %p3848 = scmp.lt.s32.totalorder %s16, 1
        %s3849 = scalar_select %p3848, %s16, 1
        %s3850 = scalar_lea.vmem %s2, %s3849
      $region44: #{jit_wrapper_forward_batch.1} parent=39 // pred_fallthru
        _
      // Predicated region
      $region45: #{jit_wrapper_forward_batch.1} parent=39 // pred_check
        %p3851 = pneg %p117
      $region46: #{jit_wrapper_forward_batch.1} parent=39 // pred_check_branch
        %3853 = sbr.rel (%p3851) target = $region48
      $region47: #{jit_wrapper_forward_batch.1} parent=39 // pred_region
        %p3854 = scmp.lt.s32.totalorder %s16, 1
        %s3855 = scalar_select %p3854, %s16, 1
        %s3856 = scalar_lea.vmem %s3, %s3855
      $region48: #{jit_wrapper_forward_batch.1} parent=39 // pred_fallthru
        _
    $region40: #{jit_wrapper_forward_batch.1} parent=5 // pred_fallthru
      _
  $region6: #{jit_wrapper_forward_batch.1} parent=0 // loop_footer
    %s14 = sadd.s32 1, %s10
  $region7: #{jit_wrapper_forward_batch.1} parent=0 // loop_footer_branch
    %9 = sbr.rel target = $region3
  $region8: #{jit_wrapper_forward_batch.1} parent=0 // loop_exit
    _

</llo_original>
